<compile_context>
chip_gen: v7x
topology: tpu7x:2x2x1
jax: 0.10.0
libtpu: 0.0.40
codegen_flags: <defaults>
</compile_context>

<pallas_src>
import math
from functools import partial

import jax
import jax.numpy as jnp
from jax import lax
from jax.experimental import pallas as pl
from jax.experimental.pallas import tpu as pltpu


# ------------------------------ fused kernel --------------------------------

def _fused_kernel(src_ref, pw_ref, t_ref,
                  wqkv_ref, wfc_ref, w1_ref, b1_ref, w2_ref,
                  lnd_ref, pwln_ref, wpairT_ref, wdistT_ref,
                  o_ref, *, nhead, temp, eps_mha, eps_ln, eps_pw):
    L = src_ref.shape[1]
    D = src_ref.shape[2]
    dk = D // nhead
    inv_temp = 1.0 / temp

    x = src_ref[0]                                   # (L, D) f32

    # ---- pairwise LayerNorm(P) (bias projection applied per head below) ----
    pw = pw_ref[0]                                   # (L, L, P)
    pg = pwln_ref[0:1, :]                            # (1, P)
    pb = pwln_ref[1:2, :]                            # (1, P)
    mu = jnp.mean(pw, axis=-1, keepdims=True)
    var = jnp.mean(jnp.square(pw - mu), axis=-1, keepdims=True)
    pwn = (pw - mu) * lax.rsqrt(var + eps_pw) * pg + pb     # (L, L, P)

    # ---- distance matrix (shared by all heads) ----
    t = t_ref[...]                                   # (L, 3)
    diff = t[None, :, :] - t[:, None, :]             # (L, L, 3)
    d = jnp.sqrt(jnp.clip(jnp.sum(diff * diff, axis=-1), 2.0, 37.0 ** 2))

    # ---- fused Q/K/V projection (one matmul, no bias) ----
    qkv = jnp.dot(x, wqkv_ref[...],
                  preferred_element_type=jnp.float32)       # (L, 3D)
    wfc = wfc_ref[...]                               # (D, D)
    wpT = wpairT_ref[...]                            # (H, P)
    wdT = wdistT_ref[...]                            # (1, H)

    # ---- per-head attention; accumulate output projection directly ----
    proj = jnp.zeros((L, D), jnp.float32)
    for h in range(nhead):
        qh = qkv[:, h * dk:(h + 1) * dk]             # (L, dk)
        kh = qkv[:, D + h * dk:D + (h + 1) * dk]
        vh = qkv[:, 2 * D + h * dk:2 * D + (h + 1) * dk]

        # pairwise bias for head h: contract P with w_pair[:, h]
        pb_h = jnp.sum(pwn * wpT[h:h + 1, :], axis=-1)          # (L, L)
        bias_h = pb_h + d * wdT[0:1, h:h + 1]                   # (L, L)

        logits = lax.dot_general(qh, kh, (((1,), (1,)), ((), ())),
                                 preferred_element_type=jnp.float32)
        logits = logits * inv_temp + bias_h
        m = jnp.max(logits, axis=-1, keepdims=True)
        p = jnp.exp(logits - m)
        p = p / jnp.sum(p, axis=-1, keepdims=True)
        oh = jnp.dot(p, vh, preferred_element_type=jnp.float32)        # (L, dk)
        proj = proj + jnp.dot(oh, wfc[h * dk:(h + 1) * dk, :],
                              preferred_element_type=jnp.float32)

    # ---- residuals, LayerNorms, FFN ----
    def ln(z, g, b, eps):
        zmu = jnp.mean(z, axis=-1, keepdims=True)
        zvar = jnp.mean(jnp.square(z - zmu), axis=-1, keepdims=True)
        return (z - zmu) * lax.rsqrt(zvar + eps) * g + b

    lnd = lnd_ref[...]                               # (7, D)
    # residual + LayerNorm(eps=1e-6) inside the MHA
    src2 = ln(x + proj, lnd[0:1, :], lnd[1:2, :], eps_mha)
    # src = norm1(src + dropout1(src2))
    s1 = ln(x + src2, lnd[2:3, :], lnd[3:4, :], eps_ln)
    # src2 = linear2(dropout(gelu(linear1(src))))
    h1 = jnp.dot(s1, w1_ref[...], preferred_element_type=jnp.float32) + b1_ref[...]
    h1 = 0.5 * h1 * (1.0 + lax.erf(h1 * (1.0 / math.sqrt(2.0))))   # exact GELU
    ff = jnp.dot(h1, w2_ref[...], preferred_element_type=jnp.float32) + lnd[6:7, :]
    # src = norm2(src + dropout2(src2))
    out = ln(s1 + ff, lnd[4:5, :], lnd[5:6, :], eps_ln)

    o_ref[0] = out.astype(o_ref.dtype)


# ----------------------------- parameters & forward --------------------------

def init_params(key, d_model, nhead, dim_feedforward, pairwise_dimension):
    dk = d_model // nhead
    keys = jax.random.split(key, 10)

    def w(k, shape, scale=0.1):
        return (scale * jax.random.normal(k, shape)).astype(jnp.float32)

    return dict(
        w_q=w(keys[0], (d_model, nhead * dk)),
        w_k=w(keys[1], (d_model, nhead * dk)),
        w_v=w(keys[2], (d_model, nhead * dk)),
        w_fc=w(keys[3], (nhead * dk, d_model)),
        mha_g=jnp.ones((1, d_model), jnp.float32),
        mha_b=jnp.zeros((1, d_model), jnp.float32),
        n1_g=jnp.ones((1, d_model), jnp.float32),
        n1_b=jnp.zeros((1, d_model), jnp.float32),
        n2_g=jnp.ones((1, d_model), jnp.float32),
        n2_b=jnp.zeros((1, d_model), jnp.float32),
        w1=w(keys[4], (d_model, dim_feedforward)),
        b1=w(keys[5], (1, dim_feedforward), 0.05),
        w2=w(keys[6], (dim_feedforward, d_model)),
        b2=w(keys[7], (1, d_model), 0.05),
        pw_g=jnp.ones((1, pairwise_dimension), jnp.float32),
        pw_b=jnp.zeros((1, pairwise_dimension), jnp.float32),
        w_pair=w(keys[8], (pairwise_dimension, nhead)),
        w_dist=w(keys[9], (nhead, 1)),
    )


def forward(params, src, pairwise_features, pred_t, *, nhead):
    B, L, D = src.shape
    P = pairwise_features.shape[-1]
    F = params['w1'].shape[1]
    dk = D // nhead
    temp = math.sqrt(dk)

    # Pack small per-feature vectors / fuse QKV weights so the kernel sees few,
    # full-resident operands (loaded once per grid step, no zero biases).
    w_qkv = jnp.concatenate([params['w_q'], params['w_k'], params['w_v']], axis=1)
    lnd = jnp.concatenate([params['mha_g'], params['mha_b'],
                           params['n1_g'], params['n1_b'],
                           params['n2_g'], params['n2_b'],
                           params['b2']], axis=0)                      # (7, D)
    pwln = jnp.concatenate([params['pw_g'], params['pw_b']], axis=0)   # (2, P)
    w_pair_t = params['w_pair'].T                                      # (H, P)
    w_dist_t = params['w_dist'].T                                      # (1, H)

    kernel = partial(_fused_kernel, nhead=nhead, temp=temp,
                     eps_mha=1e-6, eps_ln=1e-5, eps_pw=1e-5)

    return pl.pallas_call(
        kernel,
        out_shape=jax.ShapeDtypeStruct((B, L, D), src.dtype),
        grid=(B,),
        in_specs=[
            pl.BlockSpec((1, L, D), lambda b: (b, 0, 0)),          # src
            pl.BlockSpec((1, L, L, P), lambda b: (b, 0, 0, 0)),    # pairwise
            pl.BlockSpec((L, 3), lambda b: (0, 0)),                # pred_t
            pl.BlockSpec((D, 3 * D), lambda b: (0, 0)),            # w_qkv
            pl.BlockSpec((D, D), lambda b: (0, 0)),                # w_fc
            pl.BlockSpec((D, F), lambda b: (0, 0)),                # w1
            pl.BlockSpec((1, F), lambda b: (0, 0)),                # b1
            pl.BlockSpec((F, D), lambda b: (0, 0)),                # w2
            pl.BlockSpec((7, D), lambda b: (0, 0)),                # packed LN params + b2
            pl.BlockSpec((2, P), lambda b: (0, 0)),                # pairwise LN g/b
            pl.BlockSpec((nhead, P), lambda b: (0, 0)),            # w_pair^T
            pl.BlockSpec((1, nhead), lambda b: (0, 0)),            # w_dist^T
        ],
        out_specs=pl.BlockSpec((1, L, D), lambda b: (b, 0, 0)),
        compiler_params=pltpu.CompilerParams(
            dimension_semantics=("parallel",)),
    )(src, pairwise_features, pred_t,
      w_qkv, params['w_fc'], params['w1'], params['b1'], params['w2'],
      lnd, pwln, w_pair_t, w_dist_t)


# ----------------------------- pure-JAX reference ----------------------------

def reference(params, src, pw, pred_t, *, nhead):
    def ln(x, g, b, eps):
        mu = x.mean(-1, keepdims=True)
        var = ((x - mu) ** 2).mean(-1, keepdims=True)
        return (x - mu) / jnp.sqrt(var + eps) * g + b

    B, L, D = src.shape
    dk = D // nhead
    pwn = ln(pw, params['pw_g'][0], params['pw_b'][0], 1e-5)
    pb = jnp.einsum('bijp,ph->bhij', pwn, params['w_pair'])
    diff = pred_t[None, :, :] - pred_t[:, None, :]
    d = jnp.sqrt(jnp.clip((diff ** 2).sum(-1), 2.0, 37.0 ** 2))
    db = d[None, None, :, :] * params['w_dist'][:, 0][None, :, None, None]
    bias = pb + db
    x2d = src.reshape(B * L, D)
    q = (x2d @ params['w_q']).reshape(B, L, nhead, dk).transpose(0, 2, 1, 3)
    k = (x2d @ params['w_k']).reshape(B, L, nhead, dk).transpose(0, 2, 1, 3)
    v = (x2d @ params['w_v']).reshape(B, L, nhead, dk).transpose(0, 2, 1, 3)
    logits = jnp.einsum('bhid,bhjd->bhij', q, k) / math.sqrt(dk) + bias
    p = jax.nn.softmax(logits, axis=-1)
    o = jnp.einsum('bhij,bhjd->bhid', p, v).transpose(0, 2, 1, 3).reshape(B, L, D)
    proj = o @ params['w_fc']
    src2 = ln(src + proj, params['mha_g'][0], params['mha_b'][0], 1e-6)
    s1 = ln(src + src2, params['n1_g'][0], params['n1_b'][0], 1e-5)
    h = s1 @ params['w1'] + params['b1'][0]
    h = 0.5 * h * (1.0 + lax.erf(h / math.sqrt(2.0)))
    ff = h @ params['w2'] + params['b2'][0]
    return ln(s1 + ff, params['n2_g'][0], params['n2_b'][0], 1e-5)


# ----------------------------------- main ------------------------------------

if __name__ == "__main__":
    B, L, D, H, F, P = 2, 16, 32, 4, 64, 16   # batch, seq, d_model, nhead, ffn, pairwise
    key = jax.random.PRNGKey(0)
    kp, ks, kw, kt = jax.random.split(key, 4)
    params = init_params(kp, D, H, F, P)
    src = jax.random.normal(ks, (B, L, D), jnp.float32)
    pairwise_features = jax.random.normal(kw, (B, L, L, P), jnp.float32)
    pred_t = 5.0 * jax.random.normal(kt, (L, 3), jnp.float32)

    out = jax.jit(partial(forward, nhead=H))(params, src, pairwise_features, pred_t)
    out = jax.block_until_ready(out)

    ref = reference(params, src, pairwise_features, pred_t, nhead=H)
    assert out.shape == (B, L, D)
    assert jnp.allclose(out, ref, atol=2e-4, rtol=2e-4), \
        float(jnp.max(jnp.abs(out - ref)))
    print("KERNEL_OK")
</pallas_src>

<mosaic_0001>
module attributes {stable_mosaic.version = 11 : i64} {
  func.func @_fused_kernel(%arg0: i32, %arg1: memref<1x16x32xf32, #tpu.memory_space<vmem>>, %arg2: memref<1x16x16x16xf32, #tpu.memory_space<vmem>>, %arg3: memref<16x3xf32, #tpu.memory_space<vmem>>, %arg4: memref<32x96xf32, #tpu.memory_space<vmem>>, %arg5: memref<32x32xf32, #tpu.memory_space<vmem>>, %arg6: memref<32x64xf32, #tpu.memory_space<vmem>>, %arg7: memref<1x64xf32, #tpu.memory_space<vmem>>, %arg8: memref<64x32xf32, #tpu.memory_space<vmem>>, %arg9: memref<7x32xf32, #tpu.memory_space<vmem>>, %arg10: memref<2x16xf32, #tpu.memory_space<vmem>>, %arg11: memref<4x16xf32, #tpu.memory_space<vmem>>, %arg12: memref<1x4xf32, #tpu.memory_space<vmem>>, %arg13: memref<1x16x32xf32, #tpu.memory_space<vmem>>) attributes {dimension_semantics = [#tpu.dimension_semantics<parallel>], iteration_bounds = array<i64: 2>, scalar_prefetch = 0 : i64, scratch_operands = 0 : i64, tpu.core_type = #tpu.core_type<tc>, window_params = [{transform_indices = @transform_0, window_bounds = array<i64: 1, 16, 32>}, {transform_indices = @transform_1, window_bounds = array<i64: 1, 16, 16, 16>}, {pipeline_mode = #tpu.pipeline_mode<synchronous>, transform_indices = @transform_2, window_bounds = array<i64: 16, 3>}, {pipeline_mode = #tpu.pipeline_mode<synchronous>, transform_indices = @transform_3, window_bounds = array<i64: 32, 96>}, {pipeline_mode = #tpu.pipeline_mode<synchronous>, transform_indices = @transform_4, window_bounds = array<i64: 32, 32>}, {pipeline_mode = #tpu.pipeline_mode<synchronous>, transform_indices = @transform_5, window_bounds = array<i64: 32, 64>}, {pipeline_mode = #tpu.pipeline_mode<synchronous>, transform_indices = @transform_6, window_bounds = array<i64: 1, 64>}, {pipeline_mode = #tpu.pipeline_mode<synchronous>, transform_indices = @transform_7, window_bounds = array<i64: 64, 32>}, {pipeline_mode = #tpu.pipeline_mode<synchronous>, transform_indices = @transform_8, window_bounds = array<i64: 7, 32>}, {pipeline_mode = #tpu.pipeline_mode<synchronous>, transform_indices = @transform_9, window_bounds = array<i64: 2, 16>}, {pipeline_mode = #tpu.pipeline_mode<synchronous>, transform_indices = @transform_10, window_bounds = array<i64: 4, 16>}, {pipeline_mode = #tpu.pipeline_mode<synchronous>, transform_indices = @transform_11, window_bounds = array<i64: 1, 4>}, {transform_indices = @transform_12, window_bounds = array<i64: 1, 16, 32>}]} {
    %c0 = arith.constant 0 : index
    %c0_0 = arith.constant 0 : index
    %c0_1 = arith.constant 0 : index
    %0 = vector.load %arg1[%c0, %c0_0, %c0_1] : memref<1x16x32xf32, #tpu.memory_space<vmem>>, vector<1x16x32xf32>
    %1 = vector.shape_cast %0 : vector<1x16x32xf32> to vector<16x32xf32>
    %c0_2 = arith.constant 0 : index
    %c0_3 = arith.constant 0 : index
    %c0_4 = arith.constant 0 : index
    %c0_5 = arith.constant 0 : index
    %2 = vector.load %arg2[%c0_2, %c0_3, %c0_4, %c0_5] : memref<1x16x16x16xf32, #tpu.memory_space<vmem>>, vector<1x16x16x16xf32>
    %3 = vector.shape_cast %2 : vector<1x16x16x16xf32> to vector<16x16x16xf32>
    %c0_6 = arith.constant 0 : index
    %c0_7 = arith.constant 0 : index
    %4 = vector.load %arg10[%c0_6, %c0_7] : memref<2x16xf32, #tpu.memory_space<vmem>>, vector<1x16xf32>
    %c1 = arith.constant 1 : index
    %c0_8 = arith.constant 0 : index
    %5 = vector.load %arg10[%c1, %c0_8] : memref<2x16xf32, #tpu.memory_space<vmem>>, vector<1x16xf32>
    %cst = arith.constant dense<0.000000e+00> : vector<16x16xf32>
    %6 = vector.multi_reduction <add>, %3, %cst [2] : vector<16x16x16xf32> to vector<16x16xf32>
    %7 = vector.shape_cast %6 : vector<16x16xf32> to vector<16x16x1xf32>
    %cst_9 = arith.constant 1.600000e+01 : f32
    %8 = vector.broadcast %cst_9 : f32 to vector<16x16x1xf32>
    %9 = arith.divf %7, %8 : vector<16x16x1xf32>
    %10 = vector.broadcast %9 : vector<16x16x1xf32> to vector<16x16x16xf32>
    %11 = arith.subf %3, %10 : vector<16x16x16xf32>
    %12 = arith.mulf %11, %11 : vector<16x16x16xf32>
    %cst_10 = arith.constant dense<0.000000e+00> : vector<16x16xf32>
    %13 = vector.multi_reduction <add>, %12, %cst_10 [2] : vector<16x16x16xf32> to vector<16x16xf32>
    %14 = vector.shape_cast %13 : vector<16x16xf32> to vector<16x16x1xf32>
    %cst_11 = arith.constant 1.600000e+01 : f32
    %15 = vector.broadcast %cst_11 : f32 to vector<16x16x1xf32>
    %16 = arith.divf %14, %15 : vector<16x16x1xf32>
    %17 = vector.broadcast %9 : vector<16x16x1xf32> to vector<16x16x16xf32>
    %18 = arith.subf %3, %17 : vector<16x16x16xf32>
    %cst_12 = arith.constant 9.99999974E-6 : f32
    %19 = vector.broadcast %cst_12 : f32 to vector<16x16x1xf32>
    %20 = arith.addf %16, %19 : vector<16x16x1xf32>
    %21 = math.rsqrt %20 : vector<16x16x1xf32>
    %22 = vector.broadcast %21 : vector<16x16x1xf32> to vector<16x16x16xf32>
    %23 = arith.mulf %18, %22 : vector<16x16x16xf32>
    %24 = vector.shape_cast %4 : vector<1x16xf32> to vector<1x1x16xf32>
    %25 = vector.broadcast %24 : vector<1x1x16xf32> to vector<16x16x16xf32>
    %26 = arith.mulf %23, %25 : vector<16x16x16xf32>
    %27 = vector.shape_cast %5 : vector<1x16xf32> to vector<1x1x16xf32>
    %28 = vector.broadcast %27 : vector<1x1x16xf32> to vector<16x16x16xf32>
    %29 = arith.addf %26, %28 : vector<16x16x16xf32>
    %c0_13 = arith.constant 0 : index
    %c0_14 = arith.constant 0 : index
    %30 = vector.load %arg3[%c0_13, %c0_14] : memref<16x3xf32, #tpu.memory_space<vmem>>, vector<16x3xf32>
    %31 = vector.shape_cast %30 : vector<16x3xf32> to vector<1x16x3xf32>
    %32 = vector.shape_cast %30 : vector<16x3xf32> to vector<16x1x3xf32>
    %33 = vector.broadcast %31 : vector<1x16x3xf32> to vector<16x16x3xf32>
    %34 = vector.broadcast %32 : vector<16x1x3xf32> to vector<16x16x3xf32>
    %35 = arith.subf %33, %34 : vector<16x16x3xf32>
    %36 = arith.mulf %35, %35 : vector<16x16x3xf32>
    %cst_15 = arith.constant dense<0.000000e+00> : vector<16x16xf32>
    %37 = vector.multi_reduction <add>, %36, %cst_15 [2] : vector<16x16x3xf32> to vector<16x16xf32>
    %cst_16 = arith.constant 2.000000e+00 : f32
    %cst_17 = arith.constant 1.369000e+03 : f32
    %38 = vector.broadcast %cst_16 : f32 to vector<16x16xf32>
    %39 = arith.maximumf %38, %37 : vector<16x16xf32>
    %40 = vector.broadcast %cst_17 : f32 to vector<16x16xf32>
    %41 = arith.minimumf %40, %39 : vector<16x16xf32>
    %42 = math.sqrt %41 : vector<16x16xf32>
    %c0_18 = arith.constant 0 : index
    %c0_19 = arith.constant 0 : index
    %43 = vector.load %arg4[%c0_18, %c0_19] : memref<32x96xf32, #tpu.memory_space<vmem>>, vector<32x96xf32>
    %cst_20 = arith.constant dense<0.000000e+00> : vector<16x96xf32>
    %44 = tpu.matmul %1, %43, %cst_20 {dimension_numbers = #tpu.dot_dimension_numbers<[1], [0], [0], [1], [0, 0, 1, 1], [], []>} : vector<16x32xf32>, vector<32x96xf32>, vector<16x96xf32> -> vector<16x96xf32>
    %c0_21 = arith.constant 0 : index
    %c0_22 = arith.constant 0 : index
    %45 = vector.load %arg5[%c0_21, %c0_22] : memref<32x32xf32, #tpu.memory_space<vmem>>, vector<32x32xf32>
    %c0_23 = arith.constant 0 : index
    %c0_24 = arith.constant 0 : index
    %46 = vector.load %arg11[%c0_23, %c0_24] : memref<4x16xf32, #tpu.memory_space<vmem>>, vector<4x16xf32>
    %c0_25 = arith.constant 0 : index
    %c0_26 = arith.constant 0 : index
    %47 = vector.load %arg12[%c0_25, %c0_26] : memref<1x4xf32, #tpu.memory_space<vmem>>, vector<1x4xf32>
    %cst_27 = arith.constant 0.000000e+00 : f32
    %48 = vector.broadcast %cst_27 : f32 to vector<16x32xf32>
    %49 = vector.extract_strided_slice %44 {offsets = [0, 0], sizes = [16, 8], strides = [1, 1]} : vector<16x96xf32> to vector<16x8xf32>
    %50 = vector.extract_strided_slice %44 {offsets = [0, 32], sizes = [16, 8], strides = [1, 1]} : vector<16x96xf32> to vector<16x8xf32>
    %51 = vector.extract_strided_slice %44 {offsets = [0, 64], sizes = [16, 8], strides = [1, 1]} : vector<16x96xf32> to vector<16x8xf32>
    %52 = vector.extract_strided_slice %46 {offsets = [0, 0], sizes = [1, 16], strides = [1, 1]} : vector<4x16xf32> to vector<1x16xf32>
    %53 = vector.shape_cast %52 : vector<1x16xf32> to vector<1x1x16xf32>
    %54 = vector.broadcast %53 : vector<1x1x16xf32> to vector<16x16x16xf32>
    %55 = arith.mulf %29, %54 : vector<16x16x16xf32>
    %cst_28 = arith.constant dense<0.000000e+00> : vector<16x16xf32>
    %56 = vector.multi_reduction <add>, %55, %cst_28 [2] : vector<16x16x16xf32> to vector<16x16xf32>
    %57 = vector.extract_strided_slice %47 {offsets = [0, 0], sizes = [1, 1], strides = [1, 1]} : vector<1x4xf32> to vector<1x1xf32>
    %58 = vector.broadcast %57 : vector<1x1xf32> to vector<16x16xf32>
    %59 = arith.mulf %42, %58 : vector<16x16xf32>
    %60 = arith.addf %56, %59 : vector<16x16xf32>
    %cst_29 = arith.constant dense<0.000000e+00> : vector<16x16xf32>
    %61 = tpu.matmul %49, %50, %cst_29 {dimension_numbers = #tpu.dot_dimension_numbers<[1], [1], [0], [0], [0, 0, 1, 0], [], []>} : vector<16x8xf32>, vector<16x8xf32>, vector<16x16xf32> -> vector<16x16xf32>
    %cst_30 = arith.constant 0.353553385 : f32
    %62 = vector.broadcast %cst_30 : f32 to vector<16x16xf32>
    %63 = arith.mulf %61, %62 : vector<16x16xf32>
    %64 = arith.addf %63, %60 : vector<16x16xf32>
    %cst_31 = arith.constant dense<0xFF800000> : vector<16xf32>
    %65 = vector.multi_reduction <maximumf>, %64, %cst_31 [1] : vector<16x16xf32> to vector<16xf32>
    %66 = vector.shape_cast %65 : vector<16xf32> to vector<16x1xf32>
    %67 = vector.broadcast %66 : vector<16x1xf32> to vector<16x16xf32>
    %68 = arith.subf %64, %67 : vector<16x16xf32>
    %69 = math.exp %68 : vector<16x16xf32>
    %cst_32 = arith.constant dense<0.000000e+00> : vector<16xf32>
    %70 = vector.multi_reduction <add>, %69, %cst_32 [1] : vector<16x16xf32> to vector<16xf32>
    %71 = vector.shape_cast %70 : vector<16xf32> to vector<16x1xf32>
    %72 = vector.broadcast %71 : vector<16x1xf32> to vector<16x16xf32>
    %73 = arith.divf %69, %72 : vector<16x16xf32>
    %cst_33 = arith.constant dense<0.000000e+00> : vector<16x8xf32>
    %74 = tpu.matmul %73, %51, %cst_33 {dimension_numbers = #tpu.dot_dimension_numbers<[1], [0], [0], [1], [0, 0, 1, 1], [], []>} : vector<16x16xf32>, vector<16x8xf32>, vector<16x8xf32> -> vector<16x8xf32>
    %75 = vector.extract_strided_slice %45 {offsets = [0, 0], sizes = [8, 32], strides = [1, 1]} : vector<32x32xf32> to vector<8x32xf32>
    %cst_34 = arith.constant dense<0.000000e+00> : vector<16x32xf32>
    %76 = tpu.matmul %74, %75, %cst_34 {dimension_numbers = #tpu.dot_dimension_numbers<[1], [0], [0], [1], [0, 0, 1, 1], [], []>} : vector<16x8xf32>, vector<8x32xf32>, vector<16x32xf32> -> vector<16x32xf32>
    %77 = arith.addf %48, %76 : vector<16x32xf32>
    %78 = vector.extract_strided_slice %44 {offsets = [0, 8], sizes = [16, 8], strides = [1, 1]} : vector<16x96xf32> to vector<16x8xf32>
    %79 = vector.extract_strided_slice %44 {offsets = [0, 40], sizes = [16, 8], strides = [1, 1]} : vector<16x96xf32> to vector<16x8xf32>
    %80 = vector.extract_strided_slice %44 {offsets = [0, 72], sizes = [16, 8], strides = [1, 1]} : vector<16x96xf32> to vector<16x8xf32>
    %81 = vector.extract_strided_slice %46 {offsets = [1, 0], sizes = [1, 16], strides = [1, 1]} : vector<4x16xf32> to vector<1x16xf32>
    %82 = vector.shape_cast %81 : vector<1x16xf32> to vector<1x1x16xf32>
    %83 = vector.broadcast %82 : vector<1x1x16xf32> to vector<16x16x16xf32>
    %84 = arith.mulf %29, %83 : vector<16x16x16xf32>
    %cst_35 = arith.constant dense<0.000000e+00> : vector<16x16xf32>
    %85 = vector.multi_reduction <add>, %84, %cst_35 [2] : vector<16x16x16xf32> to vector<16x16xf32>
    %86 = vector.extract_strided_slice %47 {offsets = [0, 1], sizes = [1, 1], strides = [1, 1]} : vector<1x4xf32> to vector<1x1xf32>
    %87 = vector.broadcast %86 : vector<1x1xf32> to vector<16x16xf32>
    %88 = arith.mulf %42, %87 : vector<16x16xf32>
    %89 = arith.addf %85, %88 : vector<16x16xf32>
    %cst_36 = arith.constant dense<0.000000e+00> : vector<16x16xf32>
    %90 = tpu.matmul %78, %79, %cst_36 {dimension_numbers = #tpu.dot_dimension_numbers<[1], [1], [0], [0], [0, 0, 1, 0], [], []>} : vector<16x8xf32>, vector<16x8xf32>, vector<16x16xf32> -> vector<16x16xf32>
    %cst_37 = arith.constant 0.353553385 : f32
    %91 = vector.broadcast %cst_37 : f32 to vector<16x16xf32>
    %92 = arith.mulf %90, %91 : vector<16x16xf32>
    %93 = arith.addf %92, %89 : vector<16x16xf32>
    %cst_38 = arith.constant dense<0xFF800000> : vector<16xf32>
    %94 = vector.multi_reduction <maximumf>, %93, %cst_38 [1] : vector<16x16xf32> to vector<16xf32>
    %95 = vector.shape_cast %94 : vector<16xf32> to vector<16x1xf32>
    %96 = vector.broadcast %95 : vector<16x1xf32> to vector<16x16xf32>
    %97 = arith.subf %93, %96 : vector<16x16xf32>
    %98 = math.exp %97 : vector<16x16xf32>
    %cst_39 = arith.constant dense<0.000000e+00> : vector<16xf32>
    %99 = vector.multi_reduction <add>, %98, %cst_39 [1] : vector<16x16xf32> to vector<16xf32>
    %100 = vector.shape_cast %99 : vector<16xf32> to vector<16x1xf32>
    %101 = vector.broadcast %100 : vector<16x1xf32> to vector<16x16xf32>
    %102 = arith.divf %98, %101 : vector<16x16xf32>
    %cst_40 = arith.constant dense<0.000000e+00> : vector<16x8xf32>
    %103 = tpu.matmul %102, %80, %cst_40 {dimension_numbers = #tpu.dot_dimension_numbers<[1], [0], [0], [1], [0, 0, 1, 1], [], []>} : vector<16x16xf32>, vector<16x8xf32>, vector<16x8xf32> -> vector<16x8xf32>
    %104 = vector.extract_strided_slice %45 {offsets = [8, 0], sizes = [8, 32], strides = [1, 1]} : vector<32x32xf32> to vector<8x32xf32>
    %cst_41 = arith.constant dense<0.000000e+00> : vector<16x32xf32>
    %105 = tpu.matmul %103, %104, %cst_41 {dimension_numbers = #tpu.dot_dimension_numbers<[1], [0], [0], [1], [0, 0, 1, 1], [], []>} : vector<16x8xf32>, vector<8x32xf32>, vector<16x32xf32> -> vector<16x32xf32>
    %106 = arith.addf %77, %105 : vector<16x32xf32>
    %107 = vector.extract_strided_slice %44 {offsets = [0, 16], sizes = [16, 8], strides = [1, 1]} : vector<16x96xf32> to vector<16x8xf32>
    %108 = vector.extract_strided_slice %44 {offsets = [0, 48], sizes = [16, 8], strides = [1, 1]} : vector<16x96xf32> to vector<16x8xf32>
    %109 = vector.extract_strided_slice %44 {offsets = [0, 80], sizes = [16, 8], strides = [1, 1]} : vector<16x96xf32> to vector<16x8xf32>
    %110 = vector.extract_strided_slice %46 {offsets = [2, 0], sizes = [1, 16], strides = [1, 1]} : vector<4x16xf32> to vector<1x16xf32>
    %111 = vector.shape_cast %110 : vector<1x16xf32> to vector<1x1x16xf32>
    %112 = vector.broadcast %111 : vector<1x1x16xf32> to vector<16x16x16xf32>
    %113 = arith.mulf %29, %112 : vector<16x16x16xf32>
    %cst_42 = arith.constant dense<0.000000e+00> : vector<16x16xf32>
    %114 = vector.multi_reduction <add>, %113, %cst_42 [2] : vector<16x16x16xf32> to vector<16x16xf32>
    %115 = vector.extract_strided_slice %47 {offsets = [0, 2], sizes = [1, 1], strides = [1, 1]} : vector<1x4xf32> to vector<1x1xf32>
    %116 = vector.broadcast %115 : vector<1x1xf32> to vector<16x16xf32>
    %117 = arith.mulf %42, %116 : vector<16x16xf32>
    %118 = arith.addf %114, %117 : vector<16x16xf32>
    %cst_43 = arith.constant dense<0.000000e+00> : vector<16x16xf32>
    %119 = tpu.matmul %107, %108, %cst_43 {dimension_numbers = #tpu.dot_dimension_numbers<[1], [1], [0], [0], [0, 0, 1, 0], [], []>} : vector<16x8xf32>, vector<16x8xf32>, vector<16x16xf32> -> vector<16x16xf32>
    %cst_44 = arith.constant 0.353553385 : f32
    %120 = vector.broadcast %cst_44 : f32 to vector<16x16xf32>
    %121 = arith.mulf %119, %120 : vector<16x16xf32>
    %122 = arith.addf %121, %118 : vector<16x16xf32>
    %cst_45 = arith.constant dense<0xFF800000> : vector<16xf32>
    %123 = vector.multi_reduction <maximumf>, %122, %cst_45 [1] : vector<16x16xf32> to vector<16xf32>
    %124 = vector.shape_cast %123 : vector<16xf32> to vector<16x1xf32>
    %125 = vector.broadcast %124 : vector<16x1xf32> to vector<16x16xf32>
    %126 = arith.subf %122, %125 : vector<16x16xf32>
    %127 = math.exp %126 : vector<16x16xf32>
    %cst_46 = arith.constant dense<0.000000e+00> : vector<16xf32>
    %128 = vector.multi_reduction <add>, %127, %cst_46 [1] : vector<16x16xf32> to vector<16xf32>
    %129 = vector.shape_cast %128 : vector<16xf32> to vector<16x1xf32>
    %130 = vector.broadcast %129 : vector<16x1xf32> to vector<16x16xf32>
    %131 = arith.divf %127, %130 : vector<16x16xf32>
    %cst_47 = arith.constant dense<0.000000e+00> : vector<16x8xf32>
    %132 = tpu.matmul %131, %109, %cst_47 {dimension_numbers = #tpu.dot_dimension_numbers<[1], [0], [0], [1], [0, 0, 1, 1], [], []>} : vector<16x16xf32>, vector<16x8xf32>, vector<16x8xf32> -> vector<16x8xf32>
    %133 = vector.extract_strided_slice %45 {offsets = [16, 0], sizes = [8, 32], strides = [1, 1]} : vector<32x32xf32> to vector<8x32xf32>
    %cst_48 = arith.constant dense<0.000000e+00> : vector<16x32xf32>
    %134 = tpu.matmul %132, %133, %cst_48 {dimension_numbers = #tpu.dot_dimension_numbers<[1], [0], [0], [1], [0, 0, 1, 1], [], []>} : vector<16x8xf32>, vector<8x32xf32>, vector<16x32xf32> -> vector<16x32xf32>
    %135 = arith.addf %106, %134 : vector<16x32xf32>
    %136 = vector.extract_strided_slice %44 {offsets = [0, 24], sizes = [16, 8], strides = [1, 1]} : vector<16x96xf32> to vector<16x8xf32>
    %137 = vector.extract_strided_slice %44 {offsets = [0, 56], sizes = [16, 8], strides = [1, 1]} : vector<16x96xf32> to vector<16x8xf32>
    %138 = vector.extract_strided_slice %44 {offsets = [0, 88], sizes = [16, 8], strides = [1, 1]} : vector<16x96xf32> to vector<16x8xf32>
    %139 = vector.extract_strided_slice %46 {offsets = [3, 0], sizes = [1, 16], strides = [1, 1]} : vector<4x16xf32> to vector<1x16xf32>
    %140 = vector.shape_cast %139 : vector<1x16xf32> to vector<1x1x16xf32>
    %141 = vector.broadcast %140 : vector<1x1x16xf32> to vector<16x16x16xf32>
    %142 = arith.mulf %29, %141 : vector<16x16x16xf32>
    %cst_49 = arith.constant dense<0.000000e+00> : vector<16x16xf32>
    %143 = vector.multi_reduction <add>, %142, %cst_49 [2] : vector<16x16x16xf32> to vector<16x16xf32>
    %144 = vector.extract_strided_slice %47 {offsets = [0, 3], sizes = [1, 1], strides = [1, 1]} : vector<1x4xf32> to vector<1x1xf32>
    %145 = vector.broadcast %144 : vector<1x1xf32> to vector<16x16xf32>
    %146 = arith.mulf %42, %145 : vector<16x16xf32>
    %147 = arith.addf %143, %146 : vector<16x16xf32>
    %cst_50 = arith.constant dense<0.000000e+00> : vector<16x16xf32>
    %148 = tpu.matmul %136, %137, %cst_50 {dimension_numbers = #tpu.dot_dimension_numbers<[1], [1], [0], [0], [0, 0, 1, 0], [], []>} : vector<16x8xf32>, vector<16x8xf32>, vector<16x16xf32> -> vector<16x16xf32>
    %cst_51 = arith.constant 0.353553385 : f32
    %149 = vector.broadcast %cst_51 : f32 to vector<16x16xf32>
    %150 = arith.mulf %148, %149 : vector<16x16xf32>
    %151 = arith.addf %150, %147 : vector<16x16xf32>
    %cst_52 = arith.constant dense<0xFF800000> : vector<16xf32>
    %152 = vector.multi_reduction <maximumf>, %151, %cst_52 [1] : vector<16x16xf32> to vector<16xf32>
    %153 = vector.shape_cast %152 : vector<16xf32> to vector<16x1xf32>
    %154 = vector.broadcast %153 : vector<16x1xf32> to vector<16x16xf32>
    %155 = arith.subf %151, %154 : vector<16x16xf32>
    %156 = math.exp %155 : vector<16x16xf32>
    %cst_53 = arith.constant dense<0.000000e+00> : vector<16xf32>
    %157 = vector.multi_reduction <add>, %156, %cst_53 [1] : vector<16x16xf32> to vector<16xf32>
    %158 = vector.shape_cast %157 : vector<16xf32> to vector<16x1xf32>
    %159 = vector.broadcast %158 : vector<16x1xf32> to vector<16x16xf32>
    %160 = arith.divf %156, %159 : vector<16x16xf32>
    %cst_54 = arith.constant dense<0.000000e+00> : vector<16x8xf32>
    %161 = tpu.matmul %160, %138, %cst_54 {dimension_numbers = #tpu.dot_dimension_numbers<[1], [0], [0], [1], [0, 0, 1, 1], [], []>} : vector<16x16xf32>, vector<16x8xf32>, vector<16x8xf32> -> vector<16x8xf32>
    %162 = vector.extract_strided_slice %45 {offsets = [24, 0], sizes = [8, 32], strides = [1, 1]} : vector<32x32xf32> to vector<8x32xf32>
    %cst_55 = arith.constant dense<0.000000e+00> : vector<16x32xf32>
    %163 = tpu.matmul %161, %162, %cst_55 {dimension_numbers = #tpu.dot_dimension_numbers<[1], [0], [0], [1], [0, 0, 1, 1], [], []>} : vector<16x8xf32>, vector<8x32xf32>, vector<16x32xf32> -> vector<16x32xf32>
    %164 = arith.addf %135, %163 : vector<16x32xf32>
    %c0_56 = arith.constant 0 : index
    %c0_57 = arith.constant 0 : index
    %165 = vector.load %arg9[%c0_56, %c0_57] : memref<7x32xf32, #tpu.memory_space<vmem>>, vector<7x32xf32>
    %166 = arith.addf %1, %164 : vector<16x32xf32>
    %167 = vector.extract_strided_slice %165 {offsets = [0, 0], sizes = [1, 32], strides = [1, 1]} : vector<7x32xf32> to vector<1x32xf32>
    %168 = vector.extract_strided_slice %165 {offsets = [1, 0], sizes = [1, 32], strides = [1, 1]} : vector<7x32xf32> to vector<1x32xf32>
    %cst_58 = arith.constant dense<0.000000e+00> : vector<16xf32>
    %169 = vector.multi_reduction <add>, %166, %cst_58 [1] : vector<16x32xf32> to vector<16xf32>
    %170 = vector.shape_cast %169 : vector<16xf32> to vector<16x1xf32>
    %cst_59 = arith.constant 3.200000e+01 : f32
    %171 = vector.broadcast %cst_59 : f32 to vector<16x1xf32>
    %172 = arith.divf %170, %171 : vector<16x1xf32>
    %173 = vector.broadcast %172 : vector<16x1xf32> to vector<16x32xf32>
    %174 = arith.subf %166, %173 : vector<16x32xf32>
    %175 = arith.mulf %174, %174 : vector<16x32xf32>
    %cst_60 = arith.constant dense<0.000000e+00> : vector<16xf32>
    %176 = vector.multi_reduction <add>, %175, %cst_60 [1] : vector<16x32xf32> to vector<16xf32>
    %177 = vector.shape_cast %176 : vector<16xf32> to vector<16x1xf32>
    %cst_61 = arith.constant 3.200000e+01 : f32
    %178 = vector.broadcast %cst_61 : f32 to vector<16x1xf32>
    %179 = arith.divf %177, %178 : vector<16x1xf32>
    %180 = vector.broadcast %172 : vector<16x1xf32> to vector<16x32xf32>
    %181 = arith.subf %166, %180 : vector<16x32xf32>
    %cst_62 = arith.constant 9.99999997E-7 : f32
    %182 = vector.broadcast %cst_62 : f32 to vector<16x1xf32>
    %183 = arith.addf %179, %182 : vector<16x1xf32>
    %184 = math.rsqrt %183 : vector<16x1xf32>
    %185 = vector.broadcast %184 : vector<16x1xf32> to vector<16x32xf32>
    %186 = arith.mulf %181, %185 : vector<16x32xf32>
    %187 = vector.broadcast %167 : vector<1x32xf32> to vector<16x32xf32>
    %188 = arith.mulf %186, %187 : vector<16x32xf32>
    %189 = vector.broadcast %168 : vector<1x32xf32> to vector<16x32xf32>
    %190 = arith.addf %188, %189 : vector<16x32xf32>
    %191 = arith.addf %1, %190 : vector<16x32xf32>
    %192 = vector.extract_strided_slice %165 {offsets = [2, 0], sizes = [1, 32], strides = [1, 1]} : vector<7x32xf32> to vector<1x32xf32>
    %193 = vector.extract_strided_slice %165 {offsets = [3, 0], sizes = [1, 32], strides = [1, 1]} : vector<7x32xf32> to vector<1x32xf32>
    %cst_63 = arith.constant dense<0.000000e+00> : vector<16xf32>
    %194 = vector.multi_reduction <add>, %191, %cst_63 [1] : vector<16x32xf32> to vector<16xf32>
    %195 = vector.shape_cast %194 : vector<16xf32> to vector<16x1xf32>
    %cst_64 = arith.constant 3.200000e+01 : f32
    %196 = vector.broadcast %cst_64 : f32 to vector<16x1xf32>
    %197 = arith.divf %195, %196 : vector<16x1xf32>
    %198 = vector.broadcast %197 : vector<16x1xf32> to vector<16x32xf32>
    %199 = arith.subf %191, %198 : vector<16x32xf32>
    %200 = arith.mulf %199, %199 : vector<16x32xf32>
    %cst_65 = arith.constant dense<0.000000e+00> : vector<16xf32>
    %201 = vector.multi_reduction <add>, %200, %cst_65 [1] : vector<16x32xf32> to vector<16xf32>
    %202 = vector.shape_cast %201 : vector<16xf32> to vector<16x1xf32>
    %cst_66 = arith.constant 3.200000e+01 : f32
    %203 = vector.broadcast %cst_66 : f32 to vector<16x1xf32>
    %204 = arith.divf %202, %203 : vector<16x1xf32>
    %205 = vector.broadcast %197 : vector<16x1xf32> to vector<16x32xf32>
    %206 = arith.subf %191, %205 : vector<16x32xf32>
    %cst_67 = arith.constant 9.99999974E-6 : f32
    %207 = vector.broadcast %cst_67 : f32 to vector<16x1xf32>
    %208 = arith.addf %204, %207 : vector<16x1xf32>
    %209 = math.rsqrt %208 : vector<16x1xf32>
    %210 = vector.broadcast %209 : vector<16x1xf32> to vector<16x32xf32>
    %211 = arith.mulf %206, %210 : vector<16x32xf32>
    %212 = vector.broadcast %192 : vector<1x32xf32> to vector<16x32xf32>
    %213 = arith.mulf %211, %212 : vector<16x32xf32>
    %214 = vector.broadcast %193 : vector<1x32xf32> to vector<16x32xf32>
    %215 = arith.addf %213, %214 : vector<16x32xf32>
    %c0_68 = arith.constant 0 : index
    %c0_69 = arith.constant 0 : index
    %216 = vector.load %arg6[%c0_68, %c0_69] : memref<32x64xf32, #tpu.memory_space<vmem>>, vector<32x64xf32>
    %cst_70 = arith.constant dense<0.000000e+00> : vector<16x64xf32>
    %217 = tpu.matmul %215, %216, %cst_70 {dimension_numbers = #tpu.dot_dimension_numbers<[1], [0], [0], [1], [0, 0, 1, 1], [], []>} : vector<16x32xf32>, vector<32x64xf32>, vector<16x64xf32> -> vector<16x64xf32>
    %c0_71 = arith.constant 0 : index
    %c0_72 = arith.constant 0 : index
    %218 = vector.load %arg7[%c0_71, %c0_72] : memref<1x64xf32, #tpu.memory_space<vmem>>, vector<1x64xf32>
    %219 = vector.broadcast %218 : vector<1x64xf32> to vector<16x64xf32>
    %220 = arith.addf %217, %219 : vector<16x64xf32>
    %cst_73 = arith.constant 5.000000e-01 : f32
    %221 = vector.broadcast %cst_73 : f32 to vector<16x64xf32>
    %222 = arith.mulf %221, %220 : vector<16x64xf32>
    %cst_74 = arith.constant 0.707106769 : f32
    %223 = vector.broadcast %cst_74 : f32 to vector<16x64xf32>
    %224 = arith.mulf %220, %223 : vector<16x64xf32>
    %225 = math.erf %224 : vector<16x64xf32>
    %cst_75 = arith.constant 1.000000e+00 : f32
    %226 = vector.broadcast %cst_75 : f32 to vector<16x64xf32>
    %227 = arith.addf %226, %225 : vector<16x64xf32>
    %228 = arith.mulf %222, %227 : vector<16x64xf32>
    %c0_76 = arith.constant 0 : index
    %c0_77 = arith.constant 0 : index
    %229 = vector.load %arg8[%c0_76, %c0_77] : memref<64x32xf32, #tpu.memory_space<vmem>>, vector<64x32xf32>
    %cst_78 = arith.constant dense<0.000000e+00> : vector<16x32xf32>
    %230 = tpu.matmul %228, %229, %cst_78 {dimension_numbers = #tpu.dot_dimension_numbers<[1], [0], [0], [1], [0, 0, 1, 1], [], []>} : vector<16x64xf32>, vector<64x32xf32>, vector<16x32xf32> -> vector<16x32xf32>
    %231 = vector.extract_strided_slice %165 {offsets = [6, 0], sizes = [1, 32], strides = [1, 1]} : vector<7x32xf32> to vector<1x32xf32>
    %232 = vector.broadcast %231 : vector<1x32xf32> to vector<16x32xf32>
    %233 = arith.addf %230, %232 : vector<16x32xf32>
    %234 = arith.addf %215, %233 : vector<16x32xf32>
    %235 = vector.extract_strided_slice %165 {offsets = [4, 0], sizes = [1, 32], strides = [1, 1]} : vector<7x32xf32> to vector<1x32xf32>
    %236 = vector.extract_strided_slice %165 {offsets = [5, 0], sizes = [1, 32], strides = [1, 1]} : vector<7x32xf32> to vector<1x32xf32>
    %cst_79 = arith.constant dense<0.000000e+00> : vector<16xf32>
    %237 = vector.multi_reduction <add>, %234, %cst_79 [1] : vector<16x32xf32> to vector<16xf32>
    %238 = vector.shape_cast %237 : vector<16xf32> to vector<16x1xf32>
    %cst_80 = arith.constant 3.200000e+01 : f32
    %239 = vector.broadcast %cst_80 : f32 to vector<16x1xf32>
    %240 = arith.divf %238, %239 : vector<16x1xf32>
    %241 = vector.broadcast %240 : vector<16x1xf32> to vector<16x32xf32>
    %242 = arith.subf %234, %241 : vector<16x32xf32>
    %243 = arith.mulf %242, %242 : vector<16x32xf32>
    %cst_81 = arith.constant dense<0.000000e+00> : vector<16xf32>
    %244 = vector.multi_reduction <add>, %243, %cst_81 [1] : vector<16x32xf32> to vector<16xf32>
    %245 = vector.shape_cast %244 : vector<16xf32> to vector<16x1xf32>
    %cst_82 = arith.constant 3.200000e+01 : f32
    %246 = vector.broadcast %cst_82 : f32 to vector<16x1xf32>
    %247 = arith.divf %245, %246 : vector<16x1xf32>
    %248 = vector.broadcast %240 : vector<16x1xf32> to vector<16x32xf32>
    %249 = arith.subf %234, %248 : vector<16x32xf32>
    %cst_83 = arith.constant 9.99999974E-6 : f32
    %250 = vector.broadcast %cst_83 : f32 to vector<16x1xf32>
    %251 = arith.addf %247, %250 : vector<16x1xf32>
    %252 = math.rsqrt %251 : vector<16x1xf32>
    %253 = vector.broadcast %252 : vector<16x1xf32> to vector<16x32xf32>
    %254 = arith.mulf %249, %253 : vector<16x32xf32>
    %255 = vector.broadcast %235 : vector<1x32xf32> to vector<16x32xf32>
    %256 = arith.mulf %254, %255 : vector<16x32xf32>
    %257 = vector.broadcast %236 : vector<1x32xf32> to vector<16x32xf32>
    %258 = arith.addf %256, %257 : vector<16x32xf32>
    %c0_84 = arith.constant 0 : index
    %c0_85 = arith.constant 0 : index
    %c0_86 = arith.constant 0 : index
    %259 = vector.load %arg13[%c0_84, %c0_85, %c0_86] : memref<1x16x32xf32, #tpu.memory_space<vmem>>, vector<1x16x32xf32>
    %260 = vector.shape_cast %259 : vector<1x16x32xf32> to vector<16x32xf32>
    %261 = vector.shape_cast %258 : vector<16x32xf32> to vector<1x16x32xf32>
    tpu.vector_store %arg13[%c0_84, %c0_85, %c0_86], %261 {strides = array<i32>} : memref<1x16x32xf32, #tpu.memory_space<vmem>>, vector<1x16x32xf32>,
    return
  }
  func.func @transform_0(%arg0: i32) -> (i32, i32, i32) {
    %c0_i32 = arith.constant 0 : i32
    %c0_i32_0 = arith.constant 0 : i32
    %c0_i32_1 = arith.constant 0 : i32
    return %arg0, %c0_i32, %c0_i32_0 : i32, i32, i32
  }
  func.func @transform_1(%arg0: i32) -> (i32, i32, i32, i32) {
    %c0_i32 = arith.constant 0 : i32
    %c0_i32_0 = arith.constant 0 : i32
    %c0_i32_1 = arith.constant 0 : i32
    %c0_i32_2 = arith.constant 0 : i32
    return %arg0, %c0_i32, %c0_i32_0, %c0_i32_1 : i32, i32, i32, i32
  }
  func.func @transform_2(%arg0: i32) -> (i32, i32) {
    %c0_i32 = arith.constant 0 : i32
    %c0_i32_0 = arith.constant 0 : i32
    %c0_i32_1 = arith.constant 0 : i32
    return %c0_i32, %c0_i32_0 : i32, i32
  }
  func.func @transform_3(%arg0: i32) -> (i32, i32) {
    %c0_i32 = arith.constant 0 : i32
    %c0_i32_0 = arith.constant 0 : i32
    %c0_i32_1 = arith.constant 0 : i32
    return %c0_i32, %c0_i32_0 : i32, i32
  }
  func.func @transform_4(%arg0: i32) -> (i32, i32) {
    %c0_i32 = arith.constant 0 : i32
    %c0_i32_0 = arith.constant 0 : i32
    %c0_i32_1 = arith.constant 0 : i32
    return %c0_i32, %c0_i32_0 : i32, i32
  }
  func.func @transform_5(%arg0: i32) -> (i32, i32) {
    %c0_i32 = arith.constant 0 : i32
    %c0_i32_0 = arith.constant 0 : i32
    %c0_i32_1 = arith.constant 0 : i32
    return %c0_i32, %c0_i32_0 : i32, i32
  }
  func.func @transform_6(%arg0: i32) -> (i32, i32) {
    %c0_i32 = arith.constant 0 : i32
    %c0_i32_0 = arith.constant 0 : i32
    %c0_i32_1 = arith.constant 0 : i32
    return %c0_i32, %c0_i32_0 : i32, i32
  }
  func.func @transform_7(%arg0: i32) -> (i32, i32) {
    %c0_i32 = arith.constant 0 : i32
    %c0_i32_0 = arith.constant 0 : i32
    %c0_i32_1 = arith.constant 0 : i32
    return %c0_i32, %c0_i32_0 : i32, i32
  }
  func.func @transform_8(%arg0: i32) -> (i32, i32) {
    %c0_i32 = arith.constant 0 : i32
    %c0_i32_0 = arith.constant 0 : i32
    %c0_i32_1 = arith.constant 0 : i32
    return %c0_i32, %c0_i32_0 : i32, i32
  }
  func.func @transform_9(%arg0: i32) -> (i32, i32) {
    %c0_i32 = arith.constant 0 : i32
    %c0_i32_0 = arith.constant 0 : i32
    %c0_i32_1 = arith.constant 0 : i32
    return %c0_i32, %c0_i32_0 : i32, i32
  }
  func.func @transform_10(%arg0: i32) -> (i32, i32) {
    %c0_i32 = arith.constant 0 : i32
    %c0_i32_0 = arith.constant 0 : i32
    %c0_i32_1 = arith.constant 0 : i32
    return %c0_i32, %c0_i32_0 : i32, i32
  }
  func.func @transform_11(%arg0: i32) -> (i32, i32) {
    %c0_i32 = arith.constant 0 : i32
    %c0_i32_0 = arith.constant 0 : i32
    %c0_i32_1 = arith.constant 0 : i32
    return %c0_i32, %c0_i32_0 : i32, i32
  }
  func.func @transform_12(%arg0: i32) -> (i32, i32, i32) {
    %c0_i32 = arith.constant 0 : i32
    %c0_i32_0 = arith.constant 0 : i32
    %c0_i32_1 = arith.constant 0 : i32
    return %arg0, %c0_i32, %c0_i32_0 : i32, i32, i32
  }
}

</mosaic_0001>

<llo_original>
// kernel: forward.1
$region0: #{forward.1}
  #allocation0 [shape = 'u32[]', space=smem, size = 0x4, offset = 0x4, fixed_abs, tag = 'smem constant byte address 0x4 - core index']
  #allocation1 [shape = 'u32[144,128]{1,0:T(1,128)}', space=vmem, size = 0x12000, scoped, tag = 'internal scratch']
  %s0 = inlined_call_operand.vmem [shape: f32[2,16,32], index: 0, kind: input, shape index: {}]
  %s1 = inlined_call_operand.hbm [shape: f32[2,16,16,16], index: 1, kind: input, shape index: {}]
  %s2 = inlined_call_operand.vmem [shape: f32[16,3], index: 2, kind: input, shape index: {}]
  %s3 = inlined_call_operand.vmem [shape: f32[32,96], index: 3, kind: input, shape index: {}]
  %s4 = inlined_call_operand.vmem [shape: f32[32,32], index: 4, kind: input, shape index: {}]
  %s5 = inlined_call_operand.vmem [shape: f32[32,64], index: 5, kind: input, shape index: {}]
  %s6 = inlined_call_operand.vmem [shape: f32[1,64], index: 6, kind: input, shape index: {}]
  %s7 = inlined_call_operand.vmem [shape: f32[64,32], index: 7, kind: input, shape index: {}]
  %s8 = inlined_call_operand.vmem [shape: f32[7,32], index: 8, kind: input, shape index: {}]
  %s9 = inlined_call_operand.vmem [shape: f32[2,16], index: 9, kind: input, shape index: {}]
  %s10 = inlined_call_operand.vmem [shape: f32[4,16], index: 10, kind: input, shape index: {}]
  %s11 = inlined_call_operand.vmem [shape: f32[1,4], index: 11, kind: input, shape index: {}]
  %s12 = inlined_call_operand.hbm [shape: f32[2,16,32], index: 12, kind: output, shape index: {}]
  %s13 = sld [smem:[#allocation0]]
  $region85: #{forward.1} parent=0
    _
  %s15 = ssub.s32 1, %s13
  %s16 = scalar_select 0, %s15, %s13
  $region1: #{forward.1} parent=0
    #allocation2 [shape = 'u8[262144]{0}', space=vmem, size = 0x40000, scoped, tag = 'input window, operand 1']
    #allocation3 [shape = 's32[2]{0}', space=sflag, size = 0x8, scoped, tag = 'scoped memory for forward.1']
    #allocation4 [shape = 's32[2]{0}', space=sflag, size = 0x8, scoped, tag = 'scoped memory for forward.1']
    #allocation5 [shape = 'u8[16384]{0}', space=vmem, size = 0x4000, scoped, tag = 'output window, operand 0']
    %17 = vsyncpa [#allocation3], 0
    %s18 = scalar_lea.sflag [#allocation3], 1
    %19 = vsyncpa %s18, 0
    %20 = vsyncpa [#allocation4], 0
    %s21 = scalar_lea.sflag [#allocation4], 1
    %22 = vsyncpa %s21, 0
    loop: start=0, step=1, limit=4
    $region2: #{forward.1} parent=1 // loop_pre_header
      _
    $region3: #{forward.1} parent=1 // loop_header
      %s24 = sphi 0, %s28
      %p25 = scmp.ge.s32.totalorder %s24, 4
      %s34 = sphi 0, %s36
      %s37 = sphi 0, %s34
      %s38 = sphi 0, %s37
      %s54 = sphi 0, %s38
      %s60 = sphi 0, %s62
      %s63 = sphi 0, %s60
      %s64 = sphi 0, %s63
      %s80 = sphi 0, %s64
      %s84 = sphi 0, %s84
      %s86 = sphi 0, %s84
      %s87 = sphi 0, %s86
      %s101 = sphi 0, %s87
      %s105 = sphi 0, %s105
      %s107 = sphi 0, %s105
      %s108 = sphi 0, %s107
      %s122 = sphi 0, %s108
      %s126 = sphi 0, %s126
      %s128 = sphi 0, %s126
      %s129 = sphi 0, %s128
      %s143 = sphi 0, %s129
      %s147 = sphi 0, %s147
      %s149 = sphi 0, %s147
      %s150 = sphi 0, %s149
      %s164 = sphi 0, %s150
      %s168 = sphi 0, %s168
      %s170 = sphi 0, %s168
      %s171 = sphi 0, %s170
      %s185 = sphi 0, %s171
      %s189 = sphi 0, %s189
      %s191 = sphi 0, %s189
      %s192 = sphi 0, %s191
      %s206 = sphi 0, %s192
      %s210 = sphi 0, %s210
      %s212 = sphi 0, %s210
      %s213 = sphi 0, %s212
      %s227 = sphi 0, %s213
      %s231 = sphi 0, %s231
      %s233 = sphi 0, %s231
      %s234 = sphi 0, %s233
      %s248 = sphi 0, %s234
      %s252 = sphi 0, %s252
      %s254 = sphi 0, %s252
      %s255 = sphi 0, %s254
      %s269 = sphi 0, %s255
      %s273 = sphi 0, %s273
      %s275 = sphi 0, %s273
      %s276 = sphi 0, %s275
      %s290 = sphi 0, %s276
      %s296 = sphi 0, %s298
      %s299 = sphi 0, %s296
      %s300 = sphi 0, %s299
      %s316 = sphi 0, %s300
    $region4: #{forward.1} parent=1 // loop_header_branch
      %27 = sbr.rel (%p25) target = $region8
    $region5: #{forward.1} parent=1 // loop_body
      %s29 = ssub.s32 %s24, 1
      %s30 = ssub.s32 %s24, 2
      %s31 = sadd.s32 %s24, 1
      %s32 = ssub.s32 %s24, %s31
      %p33 = scmp.eq.s32.totalorder %s32, 0
      %s35 = sadd.s32 %s34, 1
      %s36 = scalar_select %p33, %s34, %s35
      %p39 = pneg %p33
      %p40 = scmp.eq.s32.totalorder %s24, 1
      %p41 = por %p39, %p40
      %p42 = scmp.ne.s32.totalorder %s34, %s37
      %p43 = scmp.eq.s32.totalorder %s24, 0
      %p44 = por %p42, %p43
      %p45 = scmp.ne.s32.totalorder %s34, %s37
      %p46 = scmp.eq.s32.totalorder %s29, 1
      %p47 = por %p45, %p46
      %p48 = scmp.ne.s32.totalorder %s37, %s38
      %p49 = scmp.eq.s32.totalorder %s29, 0
      %p50 = por %p48, %p49
      %p51 = scmp.ne.s32.totalorder %s37, %s38
      %p52 = scmp.eq.s32.totalorder %s30, 1
      %p53 = por %p51, %p52
      %p55 = scmp.ne.s32.totalorder %s38, %s54
      %p56 = scmp.eq.s32.totalorder %s30, 0
      %p57 = por %p55, %p56
      %s58 = ssub.s32 %s24, %s31
      %p59 = scmp.eq.s32.totalorder %s58, 0
      %s61 = sadd.s32 %s60, 1
      %s62 = scalar_select %p59, %s60, %s61
      %p65 = pneg %p59
      %p66 = scmp.eq.s32.totalorder %s24, 1
      %p67 = por %p65, %p66
      %p68 = scmp.ne.s32.totalorder %s60, %s63
      %p69 = scmp.eq.s32.totalorder %s24, 0
      %p70 = por %p68, %p69
      %p71 = scmp.ne.s32.totalorder %s60, %s63
      %p72 = scmp.eq.s32.totalorder %s29, 1
      %p73 = por %p71, %p72
      %p74 = scmp.ne.s32.totalorder %s63, %s64
      %p75 = scmp.eq.s32.totalorder %s29, 0
      %p76 = por %p74, %p75
      %p77 = scmp.ne.s32.totalorder %s63, %s64
      %p78 = scmp.eq.s32.totalorder %s30, 1
      %p79 = por %p77, %p78
      %p81 = scmp.ne.s32.totalorder %s64, %s80
      %p82 = scmp.eq.s32.totalorder %s30, 0
      %p83 = por %p81, %p82
      %s85 = sadd.s32 %s84, 1
      %p88 = scmp.eq.s32.totalorder %s24, 1
      %p89 = scmp.ne.s32.totalorder %s84, %s86
      %p90 = scmp.eq.s32.totalorder %s24, 0
      %p91 = por %p89, %p90
      %p92 = scmp.ne.s32.totalorder %s84, %s86
      %p93 = scmp.eq.s32.totalorder %s29, 1
      %p94 = por %p92, %p93
      %p95 = scmp.ne.s32.totalorder %s86, %s87
      %p96 = scmp.eq.s32.totalorder %s29, 0
      %p97 = por %p95, %p96
      %p98 = scmp.ne.s32.totalorder %s86, %s87
      %p99 = scmp.eq.s32.totalorder %s30, 1
      %p100 = por %p98, %p99
      %p102 = scmp.ne.s32.totalorder %s87, %s101
      %p103 = scmp.eq.s32.totalorder %s30, 0
      %p104 = por %p102, %p103
      %s106 = sadd.s32 %s105, 1
      %p109 = scmp.eq.s32.totalorder %s24, 1
      %p110 = scmp.ne.s32.totalorder %s105, %s107
      %p111 = scmp.eq.s32.totalorder %s24, 0
      %p112 = por %p110, %p111
      %p113 = scmp.ne.s32.totalorder %s105, %s107
      %p114 = scmp.eq.s32.totalorder %s29, 1
      %p115 = por %p113, %p114
      %p116 = scmp.ne.s32.totalorder %s107, %s108
      %p117 = scmp.eq.s32.totalorder %s29, 0
      %p118 = por %p116, %p117
      %p119 = scmp.ne.s32.totalorder %s107, %s108
      %p120 = scmp.eq.s32.totalorder %s30, 1
      %p121 = por %p119, %p120
      %p123 = scmp.ne.s32.totalorder %s108, %s122
      %p124 = scmp.eq.s32.totalorder %s30, 0
      %p125 = por %p123, %p124
      %s127 = sadd.s32 %s126, 1
      %p130 = scmp.eq.s32.totalorder %s24, 1
      %p131 = scmp.ne.s32.totalorder %s126, %s128
      %p132 = scmp.eq.s32.totalorder %s24, 0
      %p133 = por %p131, %p132
      %p134 = scmp.ne.s32.totalorder %s126, %s128
      %p135 = scmp.eq.s32.totalorder %s29, 1
      %p136 = por %p134, %p135
      %p137 = scmp.ne.s32.totalorder %s128, %s129
      %p138 = scmp.eq.s32.totalorder %s29, 0
      %p139 = por %p137, %p138
      %p140 = scmp.ne.s32.totalorder %s128, %s129
      %p141 = scmp.eq.s32.totalorder %s30, 1
      %p142 = por %p140, %p141
      %p144 = scmp.ne.s32.totalorder %s129, %s143
      %p145 = scmp.eq.s32.totalorder %s30, 0
      %p146 = por %p144, %p145
      %s148 = sadd.s32 %s147, 1
      %p151 = scmp.eq.s32.totalorder %s24, 1
      %p152 = scmp.ne.s32.totalorder %s147, %s149
      %p153 = scmp.eq.s32.totalorder %s24, 0
      %p154 = por %p152, %p153
      %p155 = scmp.ne.s32.totalorder %s147, %s149
      %p156 = scmp.eq.s32.totalorder %s29, 1
      %p157 = por %p155, %p156
      %p158 = scmp.ne.s32.totalorder %s149, %s150
      %p159 = scmp.eq.s32.totalorder %s29, 0
      %p160 = por %p158, %p159
      %p161 = scmp.ne.s32.totalorder %s149, %s150
      %p162 = scmp.eq.s32.totalorder %s30, 1
      %p163 = por %p161, %p162
      %p165 = scmp.ne.s32.totalorder %s150, %s164
      %p166 = scmp.eq.s32.totalorder %s30, 0
      %p167 = por %p165, %p166
      %s169 = sadd.s32 %s168, 1
      %p172 = scmp.eq.s32.totalorder %s24, 1
      %p173 = scmp.ne.s32.totalorder %s168, %s170
      %p174 = scmp.eq.s32.totalorder %s24, 0
      %p175 = por %p173, %p174
      %p176 = scmp.ne.s32.totalorder %s168, %s170
      %p177 = scmp.eq.s32.totalorder %s29, 1
      %p178 = por %p176, %p177
      %p179 = scmp.ne.s32.totalorder %s170, %s171
      %p180 = scmp.eq.s32.totalorder %s29, 0
      %p181 = por %p179, %p180
      %p182 = scmp.ne.s32.totalorder %s170, %s171
      %p183 = scmp.eq.s32.totalorder %s30, 1
      %p184 = por %p182, %p183
      %p186 = scmp.ne.s32.totalorder %s171, %s185
      %p187 = scmp.eq.s32.totalorder %s30, 0
      %p188 = por %p186, %p187
      %s190 = sadd.s32 %s189, 1
      %p193 = scmp.eq.s32.totalorder %s24, 1
      %p194 = scmp.ne.s32.totalorder %s189, %s191
      %p195 = scmp.eq.s32.totalorder %s24, 0
      %p196 = por %p194, %p195
      %p197 = scmp.ne.s32.totalorder %s189, %s191
      %p198 = scmp.eq.s32.totalorder %s29, 1
      %p199 = por %p197, %p198
      %p200 = scmp.ne.s32.totalorder %s191, %s192
      %p201 = scmp.eq.s32.totalorder %s29, 0
      %p202 = por %p200, %p201
      %p203 = scmp.ne.s32.totalorder %s191, %s192
      %p204 = scmp.eq.s32.totalorder %s30, 1
      %p205 = por %p203, %p204
      %p207 = scmp.ne.s32.totalorder %s192, %s206
      %p208 = scmp.eq.s32.totalorder %s30, 0
      %p209 = por %p207, %p208
      %s211 = sadd.s32 %s210, 1
      %p214 = scmp.eq.s32.totalorder %s24, 1
      %p215 = scmp.ne.s32.totalorder %s210, %s212
      %p216 = scmp.eq.s32.totalorder %s24, 0
      %p217 = por %p215, %p216
      %p218 = scmp.ne.s32.totalorder %s210, %s212
      %p219 = scmp.eq.s32.totalorder %s29, 1
      %p220 = por %p218, %p219
      %p221 = scmp.ne.s32.totalorder %s212, %s213
      %p222 = scmp.eq.s32.totalorder %s29, 0
      %p223 = por %p221, %p222
      %p224 = scmp.ne.s32.totalorder %s212, %s213
      %p225 = scmp.eq.s32.totalorder %s30, 1
      %p226 = por %p224, %p225
      %p228 = scmp.ne.s32.totalorder %s213, %s227
      %p229 = scmp.eq.s32.totalorder %s30, 0
      %p230 = por %p228, %p229
      %s232 = sadd.s32 %s231, 1
      %p235 = scmp.eq.s32.totalorder %s24, 1
      %p236 = scmp.ne.s32.totalorder %s231, %s233
      %p237 = scmp.eq.s32.totalorder %s24, 0
      %p238 = por %p236, %p237
      %p239 = scmp.ne.s32.totalorder %s231, %s233
      %p240 = scmp.eq.s32.totalorder %s29, 1
      %p241 = por %p239, %p240
      %p242 = scmp.ne.s32.totalorder %s233, %s234
      %p243 = scmp.eq.s32.totalorder %s29, 0
      %p244 = por %p242, %p243
      %p245 = scmp.ne.s32.totalorder %s233, %s234
      %p246 = scmp.eq.s32.totalorder %s30, 1
      %p247 = por %p245, %p246
      %p249 = scmp.ne.s32.totalorder %s234, %s248
      %p250 = scmp.eq.s32.totalorder %s30, 0
      %p251 = por %p249, %p250
      %s253 = sadd.s32 %s252, 1
      %p256 = scmp.eq.s32.totalorder %s24, 1
      %p257 = scmp.ne.s32.totalorder %s252, %s254
      %p258 = scmp.eq.s32.totalorder %s24, 0
      %p259 = por %p257, %p258
      %p260 = scmp.ne.s32.totalorder %s252, %s254
      %p261 = scmp.eq.s32.totalorder %s29, 1
      %p262 = por %p260, %p261
      %p263 = scmp.ne.s32.totalorder %s254, %s255
      %p264 = scmp.eq.s32.totalorder %s29, 0
      %p265 = por %p263, %p264
      %p266 = scmp.ne.s32.totalorder %s254, %s255
      %p267 = scmp.eq.s32.totalorder %s30, 1
      %p268 = por %p266, %p267
      %p270 = scmp.ne.s32.totalorder %s255, %s269
      %p271 = scmp.eq.s32.totalorder %s30, 0
      %p272 = por %p270, %p271
      %s274 = sadd.s32 %s273, 1
      %p277 = scmp.eq.s32.totalorder %s24, 1
      %p278 = scmp.ne.s32.totalorder %s273, %s275
      %p279 = scmp.eq.s32.totalorder %s24, 0
      %p280 = por %p278, %p279
      %p281 = scmp.ne.s32.totalorder %s273, %s275
      %p282 = scmp.eq.s32.totalorder %s29, 1
      %p283 = por %p281, %p282
      %p284 = scmp.ne.s32.totalorder %s275, %s276
      %p285 = scmp.eq.s32.totalorder %s29, 0
      %p286 = por %p284, %p285
      %p287 = scmp.ne.s32.totalorder %s275, %s276
      %p288 = scmp.eq.s32.totalorder %s30, 1
      %p289 = por %p287, %p288
      %p291 = scmp.ne.s32.totalorder %s276, %s290
      %p292 = scmp.eq.s32.totalorder %s30, 0
      %p293 = por %p291, %p292
      %s294 = ssub.s32 %s24, %s31
      %p295 = scmp.eq.s32.totalorder %s294, 0
      %s297 = sadd.s32 %s296, 1
      %s298 = scalar_select %p295, %s296, %s297
      %p301 = pneg %p295
      %p302 = scmp.eq.s32.totalorder %s24, 1
      %p303 = por %p301, %p302
      %p304 = scmp.ne.s32.totalorder %s296, %s299
      %p305 = scmp.eq.s32.totalorder %s24, 0
      %p306 = por %p304, %p305
      %p307 = scmp.ne.s32.totalorder %s296, %s299
      %p308 = scmp.eq.s32.totalorder %s29, 1
      %p309 = por %p307, %p308
      %p310 = scmp.ne.s32.totalorder %s299, %s300
      %p311 = scmp.eq.s32.totalorder %s29, 0
      %p312 = por %p310, %p311
      %p313 = scmp.ne.s32.totalorder %s299, %s300
      %p314 = scmp.eq.s32.totalorder %s30, 1
      %p315 = por %p313, %p314
      %p317 = scmp.ne.s32.totalorder %s300, %s316
      %p318 = scmp.eq.s32.totalorder %s30, 0
      %p319 = por %p317, %p318
      %p320 = scmp.le.s32.totalorder 1, %s24
      %p321 = scmp.lt.s32.totalorder %s24, 3
      %p322 = pnand %p320, %p321
      %p323 = pneg %p322
      // Predicated region
      $region9: #{forward.1} parent=5 // pred_check
        _
      $region10: #{forward.1} parent=5 // pred_check_branch
        %325 = sbr.rel (%p322) target = $region12
      $region11: #{forward.1} parent=5 // pred_region
        %s326 = ssub.s32 %s24, 1
        // Predicated region
        $region13: #{forward.1} parent=11 // pred_check
          %p327 = pneg %p97
        $region14: #{forward.1} parent=11 // pred_check_branch
          %329 = sbr.rel (%p327) target = $region16
        $region15: #{forward.1} parent=11 // pred_region
          _
        $region16: #{forward.1} parent=11 // pred_fallthru
          _
        // Predicated region
        $region17: #{forward.1} parent=11 // pred_check
          %p330 = pneg %p118
        $region18: #{forward.1} parent=11 // pred_check_branch
          %332 = sbr.rel (%p330) target = $region20
        $region19: #{forward.1} parent=11 // pred_region
          _
        $region20: #{forward.1} parent=11 // pred_fallthru
          _
        // Predicated region
        $region21: #{forward.1} parent=11 // pred_check
          %p333 = pneg %p139
        $region22: #{forward.1} parent=11 // pred_check_branch
          %335 = sbr.rel (%p333) target = $region24
        $region23: #{forward.1} parent=11 // pred_region
          _
        $region24: #{forward.1} parent=11 // pred_fallthru
          _
        // Predicated region
        $region25: #{forward.1} parent=11 // pred_check
          %p336 = pneg %p160
        $region26: #{forward.1} parent=11 // pred_check_branch
          %338 = sbr.rel (%p336) target = $region28
        $region27: #{forward.1} parent=11 // pred_region
          _
        $region28: #{forward.1} parent=11 // pred_fallthru
          _
        // Predicated region
        $region29: #{forward.1} parent=11 // pred_check
          %p339 = pneg %p181
        $region30: #{forward.1} parent=11 // pred_check_branch
          %341 = sbr.rel (%p339) target = $region32
        $region31: #{forward.1} parent=11 // pred_region
          _
        $region32: #{forward.1} parent=11 // pred_fallthru
          _
        // Predicated region
        $region33: #{forward.1} parent=11 // pred_check
          %p342 = pneg %p202
        $region34: #{forward.1} parent=11 // pred_check_branch
          %344 = sbr.rel (%p342) target = $region36
        $region35: #{forward.1} parent=11 // pred_region
          _
        $region36: #{forward.1} parent=11 // pred_fallthru
          _
        // Predicated region
        $region37: #{forward.1} parent=11 // pred_check
          %p345 = pneg %p223
        $region38: #{forward.1} parent=11 // pred_check_branch
          %347 = sbr.rel (%p345) target = $region40
        $region39: #{forward.1} parent=11 // pred_region
          _
        $region40: #{forward.1} parent=11 // pred_fallthru
          _
        // Predicated region
        $region41: #{forward.1} parent=11 // pred_check
          %p348 = pneg %p244
        $region42: #{forward.1} parent=11 // pred_check_branch
          %350 = sbr.rel (%p348) target = $region44
        $region43: #{forward.1} parent=11 // pred_region
          _
        $region44: #{forward.1} parent=11 // pred_fallthru
          _
        // Predicated region
        $region45: #{forward.1} parent=11 // pred_check
          %p351 = pneg %p265
        $region46: #{forward.1} parent=11 // pred_check_branch
          %353 = sbr.rel (%p351) target = $region48
        $region47: #{forward.1} parent=11 // pred_region
          _
        $region48: #{forward.1} parent=11 // pred_fallthru
          _
        // Predicated region
        $region49: #{forward.1} parent=11 // pred_check
          %p354 = pneg %p286
        $region50: #{forward.1} parent=11 // pred_check_branch
          %356 = sbr.rel (%p354) target = $region52
        $region51: #{forward.1} parent=11 // pred_region
          _
        $region52: #{forward.1} parent=11 // pred_fallthru
          _
      $region12: #{forward.1} parent=5 // pred_fallthru
        _
      %p357 = scmp.lt.s32.totalorder %s24, 2
      // Predicated region
      $region53: #{forward.1} parent=5 // pred_check
        %p358 = pneg %p357
      $region54: #{forward.1} parent=5 // pred_check_branch
        %360 = sbr.rel (%p358) target = $region56
      $region55: #{forward.1} parent=5 // pred_region
        // Predicated region
        $region57: #{forward.1} parent=55 // pred_check
          %p361 = pneg %p44
        $region58: #{forward.1} parent=55 // pred_check_branch
          %363 = sbr.rel (%p361) target = $region60
        $region59: #{forward.1} parent=55 // pred_region
          %p364 = scmp.lt.s32.totalorder %s24, 1
          %s365 = scalar_select %p364, %s24, 1
          %s366 = smul.addr %s365, 2
          %s367 = smul.addr %s366, 8
          %s368 = scalar_lea.vmem %s0, %s367
        $region60: #{forward.1} parent=55 // pred_fallthru
          _
        // Predicated region
        $region61: #{forward.1} parent=55 // pred_check
          %p369 = pneg %p70
        $region62: #{forward.1} parent=55 // pred_check_branch
          %371 = sbr.rel (%p369) target = $region64
        $region63: #{forward.1} parent=55 // pred_region
          %s372 = sand.u32 %s60, 1
          %s373 = scalar_lea.sflag [#allocation3], %s372
          %s374 = sand.u32 %s60, 1
          %s375 = smul.addr %s374, 256
          %s376 = scalar_lea.vmem [#allocation2], %s375
          %s378 = ssub.s32 4096, 4096
          %379 = vsyncadd %s373, %s378
          %s380 = smul.addr %s24, 32
          %s381 = smul.addr %s380, 128
          %s382 = scalar_lea.hbm %s1, %s381
          %s383 = sshll.u32 %s376, 4
          %s384 = int_to_ptr.vmem [resolvable:$true] %s383
          %389 = dma.hbm_to_vmem [thread:$0]  %s382, 4096, %s384, %s373, 128, 128, 8
        $region64: #{forward.1} parent=55 // pred_fallthru
          _
      $region56: #{forward.1} parent=5 // pred_fallthru
        _
      %p390 = scmp.le.s32.totalorder 1, %s24
      %p391 = scmp.lt.s32.totalorder %s24, 3
      %p392 = pnand %p390, %p391
      %p393 = pneg %p392
      // Predicated region
      $region65: #{forward.1} parent=5 // pred_check
        _
      $region66: #{forward.1} parent=5 // pred_check_branch
        %395 = sbr.rel (%p392) target = $region68
      $region67: #{forward.1} parent=5 // pred_region
        %s396 = ssub.s32 %s24, 1
        %s397 = sand.u32 %s63, 1
        %s398 = scalar_lea.sflag [#allocation3], %s397
        %s399 = sand.u32 %s63, 1
        %s400 = smul.addr %s399, 256
        %s401 = scalar_lea.vmem [#allocation2], %s400
        // Predicated region
        $region69: #{forward.1} parent=67 // pred_check
          %p402 = pneg %p76
        $region70: #{forward.1} parent=67 // pred_check_branch
          %404 = sbr.rel (%p402) target = $region72
        $region71: #{forward.1} parent=67 // pred_region
          %405 = dma.done %s398, 4096
        $region72: #{forward.1} parent=67 // pred_fallthru
          _
        %p406 = scmp.lt.s32.totalorder %s29, 1
        %s407 = scalar_select %p406, %s29, 1
        %s408 = smul.addr %s407, 2
        %s409 = smul.addr %s408, 8
        %s410 = scalar_lea.vmem %s0, %s409
        %p411 = pneg %p50
        %p412 = pneg %p47
        %s413 = sand.u32 %s63, 1
        %s414 = scalar_lea.sflag [#allocation3], %s413
        %s415 = sand.u32 %s63, 1
        %s416 = smul.addr %s415, 256
        %s417 = scalar_lea.vmem [#allocation2], %s416
        %p418 = pneg %p76
        %p419 = pneg %p73
        %p420 = pneg %p97
        %p421 = pneg %p94
        %p422 = pneg %p118
        %p423 = pneg %p115
        %p424 = pneg %p139
        %p425 = pneg %p136
        %p426 = pneg %p160
        %p427 = pneg %p157
        %p428 = pneg %p181
        %p429 = pneg %p178
        %p430 = pneg %p202
        %p431 = pneg %p199
        %p432 = pneg %p223
        %p433 = pneg %p220
        %p434 = pneg %p244
        %p435 = pneg %p241
        %p436 = pneg %p265
        %p437 = pneg %p262
        %p438 = pneg %p286
        %p439 = pneg %p283
        %p440 = pneg %p312
        %p441 = pneg %p309
        %s442 = sand.u32 %s299, 1
        %s443 = scalar_lea.sflag [#allocation4], %s442
        %s444 = sand.u32 %s299, 1
        %s445 = smul.addr %s444, 16
        %s446 = scalar_lea.vmem [#allocation5], %s445
        %p447 = scmp.lt.s32.totalorder %s29, 1
        %s448 = scalar_select %p447, %s29, 1
        %s449 = smul.addr %s448, 2
        %s450 = smul.addr %s449, 8
        %s451 = scalar_lea.vmem %s0, %s450
        %v452 = vld [vmem:[%s451] sm:$0xff]
        %v453 = vld [vmem:[%s451 + $0x8] sm:$0xff]
        %v454 = vld [vmem:[%s401] sm:$0xff]
        %v455 = vld [vmem:[%s401 + $0x8] sm:$0xff]
        %v456 = vld [vmem:[%s401 + $0x10] sm:$0xff]
        %v457 = vld [vmem:[%s401 + $0x18] sm:$0xff]
        %v458 = vld [vmem:[%s401 + $0x20] sm:$0xff]
        %v459 = vld [vmem:[%s401 + $0x28] sm:$0xff]
        %v460 = vld [vmem:[%s401 + $0x30] sm:$0xff]
        %v461 = vld [vmem:[%s401 + $0x38] sm:$0xff]
        %v462 = vld [vmem:[%s401 + $0x40] sm:$0xff]
        %v463 = vld [vmem:[%s401 + $0x48] sm:$0xff]
        %v464 = vld [vmem:[%s401 + $0x50] sm:$0xff]
        %v465 = vld [vmem:[%s401 + $0x58] sm:$0xff]
        %v466 = vld [vmem:[%s401 + $0x60] sm:$0xff]
        %v467 = vld [vmem:[%s401 + $0x68] sm:$0xff]
        %v468 = vld [vmem:[%s401 + $0x70] sm:$0xff]
        %v469 = vld [vmem:[%s401 + $0x78] sm:$0xff]
        %v470 = vld [vmem:[%s401 + $0x80] sm:$0xff]
        %v471 = vld [vmem:[%s401 + $0x88] sm:$0xff]
        %v472 = vld [vmem:[%s401 + $0x90] sm:$0xff]
        %v473 = vld [vmem:[%s401 + $0x98] sm:$0xff]
        %v474 = vld [vmem:[%s401 + $0xa0] sm:$0xff]
        %v475 = vld [vmem:[%s401 + $0xa8] sm:$0xff]
        %v476 = vld [vmem:[%s401 + $0xb0] sm:$0xff]
        %v477 = vld [vmem:[%s401 + $0xb8] sm:$0xff]
        %v478 = vld [vmem:[%s401 + $0xc0] sm:$0xff]
        %v479 = vld [vmem:[%s401 + $0xc8] sm:$0xff]
        %v480 = vld [vmem:[%s401 + $0xd0] sm:$0xff]
        %v481 = vld [vmem:[%s401 + $0xd8] sm:$0xff]
        %v482 = vld [vmem:[%s401 + $0xe0] sm:$0xff]
        %v483 = vld [vmem:[%s401 + $0xe8] sm:$0xff]
        %v484 = vld [vmem:[%s401 + $0xf0] sm:$0xff]
        %v485 = vld [vmem:[%s401 + $0xf8] sm:$0xff]
        %v486 = vld [vmem:[%s9] sm:$0x1]
        %v487 = vld [vmem:[%s9 + $0x1] sm:$0x1]
        %vm488 = vcmask 130048
        %v489 = vsel %vm488, %v454, 0.0
        %490 = vadd.xlane.f32.xlu0 %v489
        %v491 = vpop.xlane.xlu0 %490
        %v492 = vsel %vm488, %v455, 0.0
        %493 = vadd.xlane.f32.xlu0 %v492
        %v494 = vpop.xlane.xlu0 %493
        %v495 = vsel %vm488, %v456, 0.0
        %496 = vadd.xlane.f32.xlu0 %v495
        %v497 = vpop.xlane.xlu0 %496
        %v498 = vsel %vm488, %v457, 0.0
        %499 = vadd.xlane.f32.xlu0 %v498
        %v500 = vpop.xlane.xlu0 %499
        %v501 = vsel %vm488, %v458, 0.0
        %502 = vadd.xlane.f32.xlu0 %v501
        %v503 = vpop.xlane.xlu0 %502
        %v504 = vsel %vm488, %v459, 0.0
        %505 = vadd.xlane.f32.xlu0 %v504
        %v506 = vpop.xlane.xlu0 %505
        %v507 = vsel %vm488, %v460, 0.0
        %508 = vadd.xlane.f32.xlu0 %v507
        %v509 = vpop.xlane.xlu0 %508
        %v510 = vsel %vm488, %v461, 0.0
        %511 = vadd.xlane.f32.xlu0 %v510
        %v512 = vpop.xlane.xlu0 %511
        %v513 = vsel %vm488, %v462, 0.0
        %514 = vadd.xlane.f32.xlu0 %v513
        %v515 = vpop.xlane.xlu0 %514
        %v516 = vsel %vm488, %v463, 0.0
        %517 = vadd.xlane.f32.xlu0 %v516
        %v518 = vpop.xlane.xlu0 %517
        %v519 = vsel %vm488, %v464, 0.0
        %520 = vadd.xlane.f32.xlu0 %v519
        %v521 = vpop.xlane.xlu0 %520
        %v522 = vsel %vm488, %v465, 0.0
        %523 = vadd.xlane.f32.xlu0 %v522
        %v524 = vpop.xlane.xlu0 %523
        %v525 = vsel %vm488, %v466, 0.0
        %526 = vadd.xlane.f32.xlu0 %v525
        %v527 = vpop.xlane.xlu0 %526
        %v528 = vsel %vm488, %v467, 0.0
        %529 = vadd.xlane.f32.xlu0 %v528
        %v530 = vpop.xlane.xlu0 %529
        %v531 = vsel %vm488, %v468, 0.0
        %532 = vadd.xlane.f32.xlu0 %v531
        %v533 = vpop.xlane.xlu0 %532
        %v534 = vsel %vm488, %v469, 0.0
        %535 = vadd.xlane.f32.xlu0 %v534
        %v536 = vpop.xlane.xlu0 %535
        %v537 = vsel %vm488, %v470, 0.0
        %538 = vadd.xlane.f32.xlu0 %v537
        %v539 = vpop.xlane.xlu0 %538
        %v540 = vsel %vm488, %v471, 0.0
        %541 = vadd.xlane.f32.xlu0 %v540
        %v542 = vpop.xlane.xlu0 %541
        %v543 = vsel %vm488, %v472, 0.0
        %544 = vadd.xlane.f32.xlu0 %v543
        %v545 = vpop.xlane.xlu0 %544
        %v546 = vsel %vm488, %v473, 0.0
        %547 = vadd.xlane.f32.xlu0 %v546
        %v548 = vpop.xlane.xlu0 %547
        %v549 = vsel %vm488, %v474, 0.0
        %550 = vadd.xlane.f32.xlu0 %v549
        %v551 = vpop.xlane.xlu0 %550
        %v552 = vsel %vm488, %v475, 0.0
        %553 = vadd.xlane.f32.xlu0 %v552
        %v554 = vpop.xlane.xlu0 %553
        %v555 = vsel %vm488, %v476, 0.0
        %556 = vadd.xlane.f32.xlu0 %v555
        %v557 = vpop.xlane.xlu0 %556
        %v558 = vsel %vm488, %v477, 0.0
        %559 = vadd.xlane.f32.xlu0 %v558
        %v560 = vpop.xlane.xlu0 %559
        %v561 = vsel %vm488, %v478, 0.0
        %562 = vadd.xlane.f32.xlu0 %v561
        %v563 = vpop.xlane.xlu0 %562
        %v564 = vsel %vm488, %v479, 0.0
        %565 = vadd.xlane.f32.xlu0 %v564
        %v566 = vpop.xlane.xlu0 %565
        %v567 = vsel %vm488, %v480, 0.0
        %568 = vadd.xlane.f32.xlu0 %v567
        %v569 = vpop.xlane.xlu0 %568
        %v570 = vsel %vm488, %v481, 0.0
        %571 = vadd.xlane.f32.xlu0 %v570
        %v572 = vpop.xlane.xlu0 %571
        %v573 = vsel %vm488, %v482, 0.0
        %574 = vadd.xlane.f32.xlu0 %v573
        %v575 = vpop.xlane.xlu0 %574
        %v576 = vsel %vm488, %v483, 0.0
        %577 = vadd.xlane.f32.xlu0 %v576
        %v578 = vpop.xlane.xlu0 %577
        %v579 = vsel %vm488, %v484, 0.0
        %580 = vadd.xlane.f32.xlu0 %v579
        %v581 = vpop.xlane.xlu0 %580
        %v582 = vsel %vm488, %v485, 0.0
        %583 = vadd.xlane.f32.xlu0 %v582
        %v584 = vpop.xlane.xlu0 %583
        %v585 = vrcp.pop 16.0
        %v586 = vmul.f32 %v491, %v585
        %v587 = vmul.f32 %v494, %v585
        %v588 = vmul.f32 %v497, %v585
        %v589 = vmul.f32 %v500, %v585
        %v590 = vmul.f32 %v503, %v585
        %v591 = vmul.f32 %v506, %v585
        %v592 = vmul.f32 %v509, %v585
        %v593 = vmul.f32 %v512, %v585
        %v594 = vmul.f32 %v515, %v585
        %v595 = vmul.f32 %v518, %v585
        %v596 = vmul.f32 %v521, %v585
        %v597 = vmul.f32 %v524, %v585
        %v598 = vmul.f32 %v527, %v585
        %v599 = vmul.f32 %v530, %v585
        %v600 = vmul.f32 %v533, %v585
        %v601 = vmul.f32 %v536, %v585
        %v602 = vmul.f32 %v539, %v585
        %v603 = vmul.f32 %v542, %v585
        %v604 = vmul.f32 %v545, %v585
        %v605 = vmul.f32 %v548, %v585
        %v606 = vmul.f32 %v551, %v585
        %v607 = vmul.f32 %v554, %v585
        %v608 = vmul.f32 %v557, %v585
        %v609 = vmul.f32 %v560, %v585
        %v610 = vmul.f32 %v563, %v585
        %v611 = vmul.f32 %v566, %v585
        %v612 = vmul.f32 %v569, %v585
        %v613 = vmul.f32 %v572, %v585
        %v614 = vmul.f32 %v575, %v585
        %v615 = vmul.f32 %v578, %v585
        %v616 = vmul.f32 %v581, %v585
        %v617 = vmul.f32 %v584, %v585
        %v618 = vsub.f32 %v454, %v586
        %v619 = vsub.f32 %v455, %v587
        %v620 = vsub.f32 %v456, %v588
        %v621 = vsub.f32 %v457, %v589
        %v622 = vsub.f32 %v458, %v590
        %v623 = vsub.f32 %v459, %v591
        %v624 = vsub.f32 %v460, %v592
        %v625 = vsub.f32 %v461, %v593
        %v626 = vsub.f32 %v462, %v594
        %v627 = vsub.f32 %v463, %v595
        %v628 = vsub.f32 %v464, %v596
        %v629 = vsub.f32 %v465, %v597
        %v630 = vsub.f32 %v466, %v598
        %v631 = vsub.f32 %v467, %v599
        %v632 = vsub.f32 %v468, %v600
        %v633 = vsub.f32 %v469, %v601
        %v634 = vsub.f32 %v470, %v602
        %v635 = vsub.f32 %v471, %v603
        %v636 = vsub.f32 %v472, %v604
        %v637 = vsub.f32 %v473, %v605
        %v638 = vsub.f32 %v474, %v606
        %v639 = vsub.f32 %v475, %v607
        %v640 = vsub.f32 %v476, %v608
        %v641 = vsub.f32 %v477, %v609
        %v642 = vsub.f32 %v478, %v610
        %v643 = vsub.f32 %v479, %v611
        %v644 = vsub.f32 %v480, %v612
        %v645 = vsub.f32 %v481, %v613
        %v646 = vsub.f32 %v482, %v614
        %v647 = vsub.f32 %v483, %v615
        %v648 = vsub.f32 %v484, %v616
        %v649 = vsub.f32 %v485, %v617
        %v650 = vmul.f32 %v618, %v618
        %v651 = vmul.f32 %v619, %v619
        %v652 = vmul.f32 %v620, %v620
        %v653 = vmul.f32 %v621, %v621
        %v654 = vmul.f32 %v622, %v622
        %v655 = vmul.f32 %v623, %v623
        %v656 = vmul.f32 %v624, %v624
        %v657 = vmul.f32 %v625, %v625
        %v658 = vmul.f32 %v626, %v626
        %v659 = vmul.f32 %v627, %v627
        %v660 = vmul.f32 %v628, %v628
        %v661 = vmul.f32 %v629, %v629
        %v662 = vmul.f32 %v630, %v630
        %v663 = vmul.f32 %v631, %v631
        %v664 = vmul.f32 %v632, %v632
        %v665 = vmul.f32 %v633, %v633
        %v666 = vmul.f32 %v634, %v634
        %v667 = vmul.f32 %v635, %v635
        %v668 = vmul.f32 %v636, %v636
        %v669 = vmul.f32 %v637, %v637
        %v670 = vmul.f32 %v638, %v638
        %v671 = vmul.f32 %v639, %v639
        %v672 = vmul.f32 %v640, %v640
        %v673 = vmul.f32 %v641, %v641
        %v674 = vmul.f32 %v642, %v642
        %v675 = vmul.f32 %v643, %v643
        %v676 = vmul.f32 %v644, %v644
        %v677 = vmul.f32 %v645, %v645
        %v678 = vmul.f32 %v646, %v646
        %v679 = vmul.f32 %v647, %v647
        %v680 = vmul.f32 %v648, %v648
        %v681 = vmul.f32 %v649, %v649
        %v682 = vsel %vm488, %v650, 0.0
        %683 = vadd.xlane.f32.xlu0 %v682
        %v684 = vpop.xlane.xlu0 %683
        %v685 = vsel %vm488, %v651, 0.0
        %686 = vadd.xlane.f32.xlu0 %v685
        %v687 = vpop.xlane.xlu0 %686
        %v688 = vsel %vm488, %v652, 0.0
        %689 = vadd.xlane.f32.xlu0 %v688
        %v690 = vpop.xlane.xlu0 %689
        %v691 = vsel %vm488, %v653, 0.0
        %692 = vadd.xlane.f32.xlu0 %v691
        %v693 = vpop.xlane.xlu0 %692
        %v694 = vsel %vm488, %v654, 0.0
        %695 = vadd.xlane.f32.xlu0 %v694
        %v696 = vpop.xlane.xlu0 %695
        %v697 = vsel %vm488, %v655, 0.0
        %698 = vadd.xlane.f32.xlu0 %v697
        %v699 = vpop.xlane.xlu0 %698
        %v700 = vsel %vm488, %v656, 0.0
        %701 = vadd.xlane.f32.xlu0 %v700
        %v702 = vpop.xlane.xlu0 %701
        %v703 = vsel %vm488, %v657, 0.0
        %704 = vadd.xlane.f32.xlu0 %v703
        %v705 = vpop.xlane.xlu0 %704
        %v706 = vsel %vm488, %v658, 0.0
        %707 = vadd.xlane.f32.xlu0 %v706
        %v708 = vpop.xlane.xlu0 %707
        %v709 = vsel %vm488, %v659, 0.0
        %710 = vadd.xlane.f32.xlu0 %v709
        %v711 = vpop.xlane.xlu0 %710
        %v712 = vsel %vm488, %v660, 0.0
        %713 = vadd.xlane.f32.xlu0 %v712
        %v714 = vpop.xlane.xlu0 %713
        %v715 = vsel %vm488, %v661, 0.0
        %716 = vadd.xlane.f32.xlu0 %v715
        %v717 = vpop.xlane.xlu0 %716
        %v718 = vsel %vm488, %v662, 0.0
        %719 = vadd.xlane.f32.xlu0 %v718
        %v720 = vpop.xlane.xlu0 %719
        %v721 = vsel %vm488, %v663, 0.0
        %722 = vadd.xlane.f32.xlu0 %v721
        %v723 = vpop.xlane.xlu0 %722
        %v724 = vsel %vm488, %v664, 0.0
        %725 = vadd.xlane.f32.xlu0 %v724
        %v726 = vpop.xlane.xlu0 %725
        %v727 = vsel %vm488, %v665, 0.0
        %728 = vadd.xlane.f32.xlu0 %v727
        %v729 = vpop.xlane.xlu0 %728
        %v730 = vsel %vm488, %v666, 0.0
        %731 = vadd.xlane.f32.xlu0 %v730
        %v732 = vpop.xlane.xlu0 %731
        %v733 = vsel %vm488, %v667, 0.0
        %734 = vadd.xlane.f32.xlu0 %v733
        %v735 = vpop.xlane.xlu0 %734
        %v736 = vsel %vm488, %v668, 0.0
        %737 = vadd.xlane.f32.xlu0 %v736
        %v738 = vpop.xlane.xlu0 %737
        %v739 = vsel %vm488, %v669, 0.0
        %740 = vadd.xlane.f32.xlu0 %v739
        %v741 = vpop.xlane.xlu0 %740
        %v742 = vsel %vm488, %v670, 0.0
        %743 = vadd.xlane.f32.xlu0 %v742
        %v744 = vpop.xlane.xlu0 %743
        %v745 = vsel %vm488, %v671, 0.0
        %746 = vadd.xlane.f32.xlu0 %v745
        %v747 = vpop.xlane.xlu0 %746
        %v748 = vsel %vm488, %v672, 0.0
        %749 = vadd.xlane.f32.xlu0 %v748
        %v750 = vpop.xlane.xlu0 %749
        %v751 = vsel %vm488, %v673, 0.0
        %752 = vadd.xlane.f32.xlu0 %v751
        %v753 = vpop.xlane.xlu0 %752
        %v754 = vsel %vm488, %v674, 0.0
        %755 = vadd.xlane.f32.xlu0 %v754
        %v756 = vpop.xlane.xlu0 %755
        %v757 = vsel %vm488, %v675, 0.0
        %758 = vadd.xlane.f32.xlu0 %v757
        %v759 = vpop.xlane.xlu0 %758
        %v760 = vsel %vm488, %v676, 0.0
        %761 = vadd.xlane.f32.xlu0 %v760
        %v762 = vpop.xlane.xlu0 %761
        %v763 = vsel %vm488, %v677, 0.0
        %764 = vadd.xlane.f32.xlu0 %v763
        %v765 = vpop.xlane.xlu0 %764
        %v766 = vsel %vm488, %v678, 0.0
        %767 = vadd.xlane.f32.xlu0 %v766
        %v768 = vpop.xlane.xlu0 %767
        %v769 = vsel %vm488, %v679, 0.0
        %770 = vadd.xlane.f32.xlu0 %v769
        %v771 = vpop.xlane.xlu0 %770
        %v772 = vsel %vm488, %v680, 0.0
        %773 = vadd.xlane.f32.xlu0 %v772
        %v774 = vpop.xlane.xlu0 %773
        %v775 = vsel %vm488, %v681, 0.0
        %776 = vadd.xlane.f32.xlu0 %v775
        %v777 = vpop.xlane.xlu0 %776
        %v778 = vmul.f32 %v684, %v585
        %v779 = vmul.f32 %v687, %v585
        %v780 = vmul.f32 %v690, %v585
        %v781 = vmul.f32 %v693, %v585
        %v782 = vmul.f32 %v696, %v585
        %v783 = vmul.f32 %v699, %v585
        %v784 = vmul.f32 %v702, %v585
        %v785 = vmul.f32 %v705, %v585
        %v786 = vmul.f32 %v708, %v585
        %v787 = vmul.f32 %v711, %v585
        %v788 = vmul.f32 %v714, %v585
        %v789 = vmul.f32 %v717, %v585
        %v790 = vmul.f32 %v720, %v585
        %v791 = vmul.f32 %v723, %v585
        %v792 = vmul.f32 %v726, %v585
        %v793 = vmul.f32 %v729, %v585
        %v794 = vmul.f32 %v732, %v585
        %v795 = vmul.f32 %v735, %v585
        %v796 = vmul.f32 %v738, %v585
        %v797 = vmul.f32 %v741, %v585
        %v798 = vmul.f32 %v744, %v585
        %v799 = vmul.f32 %v747, %v585
        %v800 = vmul.f32 %v750, %v585
        %v801 = vmul.f32 %v753, %v585
        %v802 = vmul.f32 %v756, %v585
        %v803 = vmul.f32 %v759, %v585
        %v804 = vmul.f32 %v762, %v585
        %v805 = vmul.f32 %v765, %v585
        %v806 = vmul.f32 %v768, %v585
        %v807 = vmul.f32 %v771, %v585
        %v808 = vmul.f32 %v774, %v585
        %v809 = vmul.f32 %v777, %v585
        %v810 = vadd.f32 %v778, 1e-05
        %v811 = vadd.f32 %v779, 1e-05
        %v812 = vadd.f32 %v780, 1e-05
        %v813 = vadd.f32 %v781, 1e-05
        %v814 = vadd.f32 %v782, 1e-05
        %v815 = vadd.f32 %v783, 1e-05
        %v816 = vadd.f32 %v784, 1e-05
        %v817 = vadd.f32 %v785, 1e-05
        %v818 = vadd.f32 %v786, 1e-05
        %v819 = vadd.f32 %v787, 1e-05
        %v820 = vadd.f32 %v788, 1e-05
        %v821 = vadd.f32 %v789, 1e-05
        %v822 = vadd.f32 %v790, 1e-05
        %v823 = vadd.f32 %v791, 1e-05
        %v824 = vadd.f32 %v792, 1e-05
        %v825 = vadd.f32 %v793, 1e-05
        %v826 = vadd.f32 %v794, 1e-05
        %v827 = vadd.f32 %v795, 1e-05
        %v828 = vadd.f32 %v796, 1e-05
        %v829 = vadd.f32 %v797, 1e-05
        %v830 = vadd.f32 %v798, 1e-05
        %v831 = vadd.f32 %v799, 1e-05
        %v832 = vadd.f32 %v800, 1e-05
        %v833 = vadd.f32 %v801, 1e-05
        %v834 = vadd.f32 %v802, 1e-05
        %v835 = vadd.f32 %v803, 1e-05
        %v836 = vadd.f32 %v804, 1e-05
        %v837 = vadd.f32 %v805, 1e-05
        %v838 = vadd.f32 %v806, 1e-05
        %v839 = vadd.f32 %v807, 1e-05
        %v840 = vadd.f32 %v808, 1e-05
        %v841 = vadd.f32 %v809, 1e-05
        %v842 = vrsqrt.pop %v810
        %v843 = vrsqrt.pop %v811
        %v844 = vrsqrt.pop %v812
        %v845 = vrsqrt.pop %v813
        %v846 = vrsqrt.pop %v814
        %v847 = vrsqrt.pop %v815
        %v848 = vrsqrt.pop %v816
        %v849 = vrsqrt.pop %v817
        %v850 = vrsqrt.pop %v818
        %v851 = vrsqrt.pop %v819
        %v852 = vrsqrt.pop %v820
        %v853 = vrsqrt.pop %v821
        %v854 = vrsqrt.pop %v822
        %v855 = vrsqrt.pop %v823
        %v856 = vrsqrt.pop %v824
        %v857 = vrsqrt.pop %v825
        %v858 = vrsqrt.pop %v826
        %v859 = vrsqrt.pop %v827
        %v860 = vrsqrt.pop %v828
        %v861 = vrsqrt.pop %v829
        %v862 = vrsqrt.pop %v830
        %v863 = vrsqrt.pop %v831
        %v864 = vrsqrt.pop %v832
        %v865 = vrsqrt.pop %v833
        %v866 = vrsqrt.pop %v834
        %v867 = vrsqrt.pop %v835
        %v868 = vrsqrt.pop %v836
        %v869 = vrsqrt.pop %v837
        %v870 = vrsqrt.pop %v838
        %v871 = vrsqrt.pop %v839
        %v872 = vrsqrt.pop %v840
        %v873 = vrsqrt.pop %v841
        %v874 = vmul.f32 %v618, %v842
        %v875 = vmul.f32 %v619, %v843
        %v876 = vmul.f32 %v620, %v844
        %v877 = vmul.f32 %v621, %v845
        %v878 = vmul.f32 %v622, %v846
        %v879 = vmul.f32 %v623, %v847
        %v880 = vmul.f32 %v624, %v848
        %v881 = vmul.f32 %v625, %v849
        %v882 = vmul.f32 %v626, %v850
        %v883 = vmul.f32 %v627, %v851
        %v884 = vmul.f32 %v628, %v852
        %v885 = vmul.f32 %v629, %v853
        %v886 = vmul.f32 %v630, %v854
        %v887 = vmul.f32 %v631, %v855
        %v888 = vmul.f32 %v632, %v856
        %v889 = vmul.f32 %v633, %v857
        %v890 = vmul.f32 %v634, %v858
        %v891 = vmul.f32 %v635, %v859
        %v892 = vmul.f32 %v636, %v860
        %v893 = vmul.f32 %v637, %v861
        %v894 = vmul.f32 %v638, %v862
        %v895 = vmul.f32 %v639, %v863
        %v896 = vmul.f32 %v640, %v864
        %v897 = vmul.f32 %v641, %v865
        %v898 = vmul.f32 %v642, %v866
        %v899 = vmul.f32 %v643, %v867
        %v900 = vmul.f32 %v644, %v868
        %v901 = vmul.f32 %v645, %v869
        %v902 = vmul.f32 %v646, %v870
        %v903 = vmul.f32 %v647, %v871
        %v904 = vmul.f32 %v648, %v872
        %v905 = vmul.f32 %v649, %v873
        %v906 = vlaneseq
        %v907 = vshrl.u32 %v906, 7
        %v908 = vsub.s32 0, %v907
        %v909 = vrot.slane %v486, %v908
        %v910 = vmul.f32 %v874, %v909
        %v911 = vmul.f32 %v875, %v909
        %v912 = vmul.f32 %v876, %v909
        %v913 = vmul.f32 %v877, %v909
        %v914 = vmul.f32 %v878, %v909
        %v915 = vmul.f32 %v879, %v909
        %v916 = vmul.f32 %v880, %v909
        %v917 = vmul.f32 %v881, %v909
        %v918 = vmul.f32 %v882, %v909
        %v919 = vmul.f32 %v883, %v909
        %v920 = vmul.f32 %v884, %v909
        %v921 = vmul.f32 %v885, %v909
        %v922 = vmul.f32 %v886, %v909
        %v923 = vmul.f32 %v887, %v909
        %v924 = vmul.f32 %v888, %v909
        %v925 = vmul.f32 %v889, %v909
        %v926 = vmul.f32 %v890, %v909
        %v927 = vmul.f32 %v891, %v909
        %v928 = vmul.f32 %v892, %v909
        %v929 = vmul.f32 %v893, %v909
        %v930 = vmul.f32 %v894, %v909
        %v931 = vmul.f32 %v895, %v909
        %v932 = vmul.f32 %v896, %v909
        %v933 = vmul.f32 %v897, %v909
        %v934 = vmul.f32 %v898, %v909
        %v935 = vmul.f32 %v899, %v909
        %v936 = vmul.f32 %v900, %v909
        %v937 = vmul.f32 %v901, %v909
        %v938 = vmul.f32 %v902, %v909
        %v939 = vmul.f32 %v903, %v909
        %v940 = vmul.f32 %v904, %v909
        %v941 = vmul.f32 %v905, %v909
        %v942 = vlaneseq
        %v943 = vshrl.u32 %v942, 7
        %v944 = vsub.s32 0, %v943
        %v945 = vrot.slane %v487, %v944
        %v946 = vadd.f32 %v910, %v945
        %v947 = vadd.f32 %v911, %v945
        %v948 = vadd.f32 %v912, %v945
        %v949 = vadd.f32 %v913, %v945
        %v950 = vadd.f32 %v914, %v945
        %v951 = vadd.f32 %v915, %v945
        %v952 = vadd.f32 %v916, %v945
        %v953 = vadd.f32 %v917, %v945
        %v954 = vadd.f32 %v918, %v945
        %v955 = vadd.f32 %v919, %v945
        %v956 = vadd.f32 %v920, %v945
        %v957 = vadd.f32 %v921, %v945
        %v958 = vadd.f32 %v922, %v945
        %v959 = vadd.f32 %v923, %v945
        %v960 = vadd.f32 %v924, %v945
        %v961 = vadd.f32 %v925, %v945
        %v962 = vadd.f32 %v926, %v945
        %v963 = vadd.f32 %v927, %v945
        %v964 = vadd.f32 %v928, %v945
        %v965 = vadd.f32 %v929, %v945
        %v966 = vadd.f32 %v930, %v945
        %v967 = vadd.f32 %v931, %v945
        %v968 = vadd.f32 %v932, %v945
        %v969 = vadd.f32 %v933, %v945
        %v970 = vadd.f32 %v934, %v945
        %v971 = vadd.f32 %v935, %v945
        %v972 = vadd.f32 %v936, %v945
        %v973 = vadd.f32 %v937, %v945
        %v974 = vadd.f32 %v938, %v945
        %v975 = vadd.f32 %v939, %v945
        %v976 = vadd.f32 %v940, %v945
        %v977 = vadd.f32 %v941, %v945
        %v978 = vld [vmem:[%s2] sm:$0xff]
        %v979 = vld [vmem:[%s2 + $0x8] sm:$0xff]
        %v982 = vcombine.high %v978, %v978
        %v984 = vunpack.c.l.s4 1966171168
        %v985 = vunpack.c.0.s8 %v984
        %v986 = vlaneseq
        %v987 = vshrl.u32 %v986, 7
        %v988 = vsub.s32 %v985, %v987
        %v989 = vrot.slane %v978, %v988
        %v991 = vunpack.c.l.s4 1966171168
        %v992 = vunpack.c.0.s8 %v991
        %v993 = vlaneseq
        %v994 = vshrl.u32 %v993, 7
        %v995 = vsub.s32 %v992, %v994
        %v996 = vrot.slane %v982, %v995
        %v997 = vcombine.high %v989, %v989
        %v998 = vcombine.high %v996, %v996
        %v1000 = vunpack.c.l.s4 1966171168
        %v1001 = vunpack.c.0.s8 %v1000
        %v1002 = vlaneseq
        %v1003 = vshrl.u32 %v1002, 7
        %v1004 = vsub.s32 %v1001, %v1003
        %v1005 = vrot.slane %v989, %v1004
        %v1007 = vunpack.c.l.s4 1966171168
        %v1008 = vunpack.c.0.s8 %v1007
        %v1009 = vlaneseq
        %v1010 = vshrl.u32 %v1009, 7
        %v1011 = vsub.s32 %v1008, %v1010
        %v1012 = vrot.slane %v996, %v1011
        %v1014 = vunpack.c.l.s4 1966171168
        %v1015 = vunpack.c.0.s8 %v1014
        %v1016 = vlaneseq
        %v1017 = vshrl.u32 %v1016, 7
        %v1018 = vsub.s32 %v1015, %v1017
        %v1019 = vrot.slane %v997, %v1018
        %v1021 = vunpack.c.l.s4 1966171168
        %v1022 = vunpack.c.0.s8 %v1021
        %v1023 = vlaneseq
        %v1024 = vshrl.u32 %v1023, 7
        %v1025 = vsub.s32 %v1022, %v1024
        %v1026 = vrot.slane %v998, %v1025
        %v1027 = vcombine.high %v1005, %v1005
        %v1028 = vcombine.high %v1012, %v1012
        %v1029 = vcombine.high %v1019, %v1019
        %v1030 = vcombine.high %v1026, %v1026
        %v1031 = vcombine.high %v979, %v979
        %v1033 = vunpack.c.l.s4 1966171168
        %v1034 = vunpack.c.0.s8 %v1033
        %v1035 = vlaneseq
        %v1036 = vshrl.u32 %v1035, 7
        %v1037 = vsub.s32 %v1034, %v1036
        %v1038 = vrot.slane %v979, %v1037
        %v1040 = vunpack.c.l.s4 1966171168
        %v1041 = vunpack.c.0.s8 %v1040
        %v1042 = vlaneseq
        %v1043 = vshrl.u32 %v1042, 7
        %v1044 = vsub.s32 %v1041, %v1043
        %v1045 = vrot.slane %v1031, %v1044
        %v1046 = vcombine.high %v1038, %v1038
        %v1047 = vcombine.high %v1045, %v1045
        %v1049 = vunpack.c.l.s4 1966171168
        %v1050 = vunpack.c.0.s8 %v1049
        %v1051 = vlaneseq
        %v1052 = vshrl.u32 %v1051, 7
        %v1053 = vsub.s32 %v1050, %v1052
        %v1054 = vrot.slane %v1038, %v1053
        %v1056 = vunpack.c.l.s4 1966171168
        %v1057 = vunpack.c.0.s8 %v1056
        %v1058 = vlaneseq
        %v1059 = vshrl.u32 %v1058, 7
        %v1060 = vsub.s32 %v1057, %v1059
        %v1061 = vrot.slane %v1045, %v1060
        %v1063 = vunpack.c.l.s4 1966171168
        %v1064 = vunpack.c.0.s8 %v1063
        %v1065 = vlaneseq
        %v1066 = vshrl.u32 %v1065, 7
        %v1067 = vsub.s32 %v1064, %v1066
        %v1068 = vrot.slane %v1046, %v1067
        %v1070 = vunpack.c.l.s4 1966171168
        %v1071 = vunpack.c.0.s8 %v1070
        %v1072 = vlaneseq
        %v1073 = vshrl.u32 %v1072, 7
        %v1074 = vsub.s32 %v1071, %v1073
        %v1075 = vrot.slane %v1047, %v1074
        %v1076 = vcombine.high %v1054, %v1054
        %v1077 = vcombine.high %v1061, %v1061
        %v1078 = vcombine.high %v1068, %v1068
        %v1079 = vcombine.high %v1075, %v1075
        %v1080 = vlaneseq
        %v1081 = vshrl.u32 %v1080, 7
        %v1082 = vsub.s32 0, %v1081
        %v1083 = vrot.slane %v1005, %v1082
        %v1084 = vlaneseq
        %v1085 = vshrl.u32 %v1084, 7
        %v1086 = vsub.s32 0, %v1085
        %v1087 = vrot.slane %v1019, %v1086
        %v1088 = vlaneseq
        %v1089 = vshrl.u32 %v1088, 7
        %v1090 = vsub.s32 0, %v1089
        %v1091 = vrot.slane %v1027, %v1090
        %v1092 = vlaneseq
        %v1093 = vshrl.u32 %v1092, 7
        %v1094 = vsub.s32 0, %v1093
        %v1095 = vrot.slane %v1029, %v1094
        %v1096 = vlaneseq
        %v1097 = vshrl.u32 %v1096, 7
        %v1098 = vsub.s32 0, %v1097
        %v1099 = vrot.slane %v1012, %v1098
        %v1100 = vlaneseq
        %v1101 = vshrl.u32 %v1100, 7
        %v1102 = vsub.s32 0, %v1101
        %v1103 = vrot.slane %v1026, %v1102
        %v1104 = vlaneseq
        %v1105 = vshrl.u32 %v1104, 7
        %v1106 = vsub.s32 0, %v1105
        %v1107 = vrot.slane %v1028, %v1106
        %v1108 = vlaneseq
        %v1109 = vshrl.u32 %v1108, 7
        %v1110 = vsub.s32 0, %v1109
        %v1111 = vrot.slane %v1030, %v1110
        %v1112 = vlaneseq
        %v1113 = vshrl.u32 %v1112, 7
        %v1114 = vsub.s32 0, %v1113
        %v1115 = vrot.slane %v1054, %v1114
        %v1116 = vlaneseq
        %v1117 = vshrl.u32 %v1116, 7
        %v1118 = vsub.s32 0, %v1117
        %v1119 = vrot.slane %v1068, %v1118
        %v1120 = vlaneseq
        %v1121 = vshrl.u32 %v1120, 7
        %v1122 = vsub.s32 0, %v1121
        %v1123 = vrot.slane %v1076, %v1122
        %v1124 = vlaneseq
        %v1125 = vshrl.u32 %v1124, 7
        %v1126 = vsub.s32 0, %v1125
        %v1127 = vrot.slane %v1078, %v1126
        %v1128 = vlaneseq
        %v1129 = vshrl.u32 %v1128, 7
        %v1130 = vsub.s32 0, %v1129
        %v1131 = vrot.slane %v1061, %v1130
        %v1132 = vlaneseq
        %v1133 = vshrl.u32 %v1132, 7
        %v1134 = vsub.s32 0, %v1133
        %v1135 = vrot.slane %v1075, %v1134
        %v1136 = vlaneseq
        %v1137 = vshrl.u32 %v1136, 7
        %v1138 = vsub.s32 0, %v1137
        %v1139 = vrot.slane %v1077, %v1138
        %v1140 = vlaneseq
        %v1141 = vshrl.u32 %v1140, 7
        %v1142 = vsub.s32 0, %v1141
        %v1143 = vrot.slane %v1079, %v1142
        %v1160 = vsub.f32 %v978, %v1083
        %v1161 = vsub.f32 %v979, %v1083
        %v1162 = vsub.f32 %v978, %v1087
        %v1163 = vsub.f32 %v979, %v1087
        %v1164 = vsub.f32 %v978, %v1091
        %v1165 = vsub.f32 %v979, %v1091
        %v1166 = vsub.f32 %v978, %v1095
        %v1167 = vsub.f32 %v979, %v1095
        %v1168 = vsub.f32 %v978, %v1099
        %v1169 = vsub.f32 %v979, %v1099
        %v1170 = vsub.f32 %v978, %v1103
        %v1171 = vsub.f32 %v979, %v1103
        %v1172 = vsub.f32 %v978, %v1107
        %v1173 = vsub.f32 %v979, %v1107
        %v1174 = vsub.f32 %v978, %v1111
        %v1175 = vsub.f32 %v979, %v1111
        %v1176 = vsub.f32 %v978, %v1115
        %v1177 = vsub.f32 %v979, %v1115
        %v1178 = vsub.f32 %v978, %v1119
        %v1179 = vsub.f32 %v979, %v1119
        %v1180 = vsub.f32 %v978, %v1123
        %v1181 = vsub.f32 %v979, %v1123
        %v1182 = vsub.f32 %v978, %v1127
        %v1183 = vsub.f32 %v979, %v1127
        %v1184 = vsub.f32 %v978, %v1131
        %v1185 = vsub.f32 %v979, %v1131
        %v1186 = vsub.f32 %v978, %v1135
        %v1187 = vsub.f32 %v979, %v1135
        %v1188 = vsub.f32 %v978, %v1139
        %v1189 = vsub.f32 %v979, %v1139
        %v1190 = vsub.f32 %v978, %v1143
        %v1191 = vsub.f32 %v979, %v1143
        %v1192 = vmul.f32 %v1160, %v1160
        %v1193 = vmul.f32 %v1161, %v1161
        %v1194 = vmul.f32 %v1162, %v1162
        %v1195 = vmul.f32 %v1163, %v1163
        %v1196 = vmul.f32 %v1164, %v1164
        %v1197 = vmul.f32 %v1165, %v1165
        %v1198 = vmul.f32 %v1166, %v1166
        %v1199 = vmul.f32 %v1167, %v1167
        %v1200 = vmul.f32 %v1168, %v1168
        %v1201 = vmul.f32 %v1169, %v1169
        %v1202 = vmul.f32 %v1170, %v1170
        %v1203 = vmul.f32 %v1171, %v1171
        %v1204 = vmul.f32 %v1172, %v1172
        %v1205 = vmul.f32 %v1173, %v1173
        %v1206 = vmul.f32 %v1174, %v1174
        %v1207 = vmul.f32 %v1175, %v1175
        %v1208 = vmul.f32 %v1176, %v1176
        %v1209 = vmul.f32 %v1177, %v1177
        %v1210 = vmul.f32 %v1178, %v1178
        %v1211 = vmul.f32 %v1179, %v1179
        %v1212 = vmul.f32 %v1180, %v1180
        %v1213 = vmul.f32 %v1181, %v1181
        %v1214 = vmul.f32 %v1182, %v1182
        %v1215 = vmul.f32 %v1183, %v1183
        %v1216 = vmul.f32 %v1184, %v1184
        %v1217 = vmul.f32 %v1185, %v1185
        %v1218 = vmul.f32 %v1186, %v1186
        %v1219 = vmul.f32 %v1187, %v1187
        %v1220 = vmul.f32 %v1188, %v1188
        %v1221 = vmul.f32 %v1189, %v1189
        %v1222 = vmul.f32 %v1190, %v1190
        %v1223 = vmul.f32 %v1191, %v1191
        %vm1224 = vcmask 23552
        %v1225 = vsel %vm1224, %v1192, 0.0
        %1226 = vadd.xlane.f32.xlu0 %v1225
        %v1227 = vpop.xlane.xlu0 %1226
        %v1228 = vsel %vm1224, %v1193, 0.0
        %1229 = vadd.xlane.f32.xlu0 %v1228
        %v1230 = vpop.xlane.xlu0 %1229
        %v1231 = vsel %vm1224, %v1194, 0.0
        %1232 = vadd.xlane.f32.xlu0 %v1231
        %v1233 = vpop.xlane.xlu0 %1232
        %v1234 = vsel %vm1224, %v1195, 0.0
        %1235 = vadd.xlane.f32.xlu0 %v1234
        %v1236 = vpop.xlane.xlu0 %1235
        %v1237 = vsel %vm1224, %v1196, 0.0
        %1238 = vadd.xlane.f32.xlu0 %v1237
        %v1239 = vpop.xlane.xlu0 %1238
        %v1240 = vsel %vm1224, %v1197, 0.0
        %1241 = vadd.xlane.f32.xlu0 %v1240
        %v1242 = vpop.xlane.xlu0 %1241
        %v1243 = vsel %vm1224, %v1198, 0.0
        %1244 = vadd.xlane.f32.xlu0 %v1243
        %v1245 = vpop.xlane.xlu0 %1244
        %v1246 = vsel %vm1224, %v1199, 0.0
        %1247 = vadd.xlane.f32.xlu0 %v1246
        %v1248 = vpop.xlane.xlu0 %1247
        %v1249 = vsel %vm1224, %v1200, 0.0
        %1250 = vadd.xlane.f32.xlu0 %v1249
        %v1251 = vpop.xlane.xlu0 %1250
        %v1252 = vsel %vm1224, %v1201, 0.0
        %1253 = vadd.xlane.f32.xlu0 %v1252
        %v1254 = vpop.xlane.xlu0 %1253
        %v1255 = vsel %vm1224, %v1202, 0.0
        %1256 = vadd.xlane.f32.xlu0 %v1255
        %v1257 = vpop.xlane.xlu0 %1256
        %v1258 = vsel %vm1224, %v1203, 0.0
        %1259 = vadd.xlane.f32.xlu0 %v1258
        %v1260 = vpop.xlane.xlu0 %1259
        %v1261 = vsel %vm1224, %v1204, 0.0
        %1262 = vadd.xlane.f32.xlu0 %v1261
        %v1263 = vpop.xlane.xlu0 %1262
        %v1264 = vsel %vm1224, %v1205, 0.0
        %1265 = vadd.xlane.f32.xlu0 %v1264
        %v1266 = vpop.xlane.xlu0 %1265
        %v1267 = vsel %vm1224, %v1206, 0.0
        %1268 = vadd.xlane.f32.xlu0 %v1267
        %v1269 = vpop.xlane.xlu0 %1268
        %v1270 = vsel %vm1224, %v1207, 0.0
        %1271 = vadd.xlane.f32.xlu0 %v1270
        %v1272 = vpop.xlane.xlu0 %1271
        %v1273 = vsel %vm1224, %v1208, 0.0
        %1274 = vadd.xlane.f32.xlu0 %v1273
        %v1275 = vpop.xlane.xlu0 %1274
        %v1276 = vsel %vm1224, %v1209, 0.0
        %1277 = vadd.xlane.f32.xlu0 %v1276
        %v1278 = vpop.xlane.xlu0 %1277
        %v1279 = vsel %vm1224, %v1210, 0.0
        %1280 = vadd.xlane.f32.xlu0 %v1279
        %v1281 = vpop.xlane.xlu0 %1280
        %v1282 = vsel %vm1224, %v1211, 0.0
        %1283 = vadd.xlane.f32.xlu0 %v1282
        %v1284 = vpop.xlane.xlu0 %1283
        %v1285 = vsel %vm1224, %v1212, 0.0
        %1286 = vadd.xlane.f32.xlu0 %v1285
        %v1287 = vpop.xlane.xlu0 %1286
        %v1288 = vsel %vm1224, %v1213, 0.0
        %1289 = vadd.xlane.f32.xlu0 %v1288
        %v1290 = vpop.xlane.xlu0 %1289
        %v1291 = vsel %vm1224, %v1214, 0.0
        %1292 = vadd.xlane.f32.xlu0 %v1291
        %v1293 = vpop.xlane.xlu0 %1292
        %v1294 = vsel %vm1224, %v1215, 0.0
        %1295 = vadd.xlane.f32.xlu0 %v1294
        %v1296 = vpop.xlane.xlu0 %1295
        %v1297 = vsel %vm1224, %v1216, 0.0
        %1298 = vadd.xlane.f32.xlu0 %v1297
        %v1299 = vpop.xlane.xlu0 %1298
        %v1300 = vsel %vm1224, %v1217, 0.0
        %1301 = vadd.xlane.f32.xlu0 %v1300
        %v1302 = vpop.xlane.xlu0 %1301
        %v1303 = vsel %vm1224, %v1218, 0.0
        %1304 = vadd.xlane.f32.xlu0 %v1303
        %v1305 = vpop.xlane.xlu0 %1304
        %v1306 = vsel %vm1224, %v1219, 0.0
        %1307 = vadd.xlane.f32.xlu0 %v1306
        %v1308 = vpop.xlane.xlu0 %1307
        %v1309 = vsel %vm1224, %v1220, 0.0
        %1310 = vadd.xlane.f32.xlu0 %v1309
        %v1311 = vpop.xlane.xlu0 %1310
        %v1312 = vsel %vm1224, %v1221, 0.0
        %1313 = vadd.xlane.f32.xlu0 %v1312
        %v1314 = vpop.xlane.xlu0 %1313
        %v1315 = vsel %vm1224, %v1222, 0.0
        %1316 = vadd.xlane.f32.xlu0 %v1315
        %v1317 = vpop.xlane.xlu0 %1316
        %v1318 = vsel %vm1224, %v1223, 0.0
        %1319 = vadd.xlane.f32.xlu0 %v1318
        %v1320 = vpop.xlane.xlu0 %1319
        %v1321 = vmax.f32 %v1227, 2.0
        %v1322 = vmax.f32 %v1230, 2.0
        %v1323 = vmax.f32 %v1233, 2.0
        %v1324 = vmax.f32 %v1236, 2.0
        %v1325 = vmax.f32 %v1239, 2.0
        %v1326 = vmax.f32 %v1242, 2.0
        %v1327 = vmax.f32 %v1245, 2.0
        %v1328 = vmax.f32 %v1248, 2.0
        %v1329 = vmax.f32 %v1251, 2.0
        %v1330 = vmax.f32 %v1254, 2.0
        %v1331 = vmax.f32 %v1257, 2.0
        %v1332 = vmax.f32 %v1260, 2.0
        %v1333 = vmax.f32 %v1263, 2.0
        %v1334 = vmax.f32 %v1266, 2.0
        %v1335 = vmax.f32 %v1269, 2.0
        %v1336 = vmax.f32 %v1272, 2.0
        %v1337 = vmax.f32 %v1275, 2.0
        %v1338 = vmax.f32 %v1278, 2.0
        %v1339 = vmax.f32 %v1281, 2.0
        %v1340 = vmax.f32 %v1284, 2.0
        %v1341 = vmax.f32 %v1287, 2.0
        %v1342 = vmax.f32 %v1290, 2.0
        %v1343 = vmax.f32 %v1293, 2.0
        %v1344 = vmax.f32 %v1296, 2.0
        %v1345 = vmax.f32 %v1299, 2.0
        %v1346 = vmax.f32 %v1302, 2.0
        %v1347 = vmax.f32 %v1305, 2.0
        %v1348 = vmax.f32 %v1308, 2.0
        %v1349 = vmax.f32 %v1311, 2.0
        %v1350 = vmax.f32 %v1314, 2.0
        %v1351 = vmax.f32 %v1317, 2.0
        %v1352 = vmax.f32 %v1320, 2.0
        %v1353 = vmin.f32 %v1321, 1369.0
        %v1354 = vmin.f32 %v1322, 1369.0
        %v1355 = vmin.f32 %v1323, 1369.0
        %v1356 = vmin.f32 %v1324, 1369.0
        %v1357 = vmin.f32 %v1325, 1369.0
        %v1358 = vmin.f32 %v1326, 1369.0
        %v1359 = vmin.f32 %v1327, 1369.0
        %v1360 = vmin.f32 %v1328, 1369.0
        %v1361 = vmin.f32 %v1329, 1369.0
        %v1362 = vmin.f32 %v1330, 1369.0
        %v1363 = vmin.f32 %v1331, 1369.0
        %v1364 = vmin.f32 %v1332, 1369.0
        %v1365 = vmin.f32 %v1333, 1369.0
        %v1366 = vmin.f32 %v1334, 1369.0
        %v1367 = vmin.f32 %v1335, 1369.0
        %v1368 = vmin.f32 %v1336, 1369.0
        %v1369 = vmin.f32 %v1337, 1369.0
        %v1370 = vmin.f32 %v1338, 1369.0
        %v1371 = vmin.f32 %v1339, 1369.0
        %v1372 = vmin.f32 %v1340, 1369.0
        %v1373 = vmin.f32 %v1341, 1369.0
        %v1374 = vmin.f32 %v1342, 1369.0
        %v1375 = vmin.f32 %v1343, 1369.0
        %v1376 = vmin.f32 %v1344, 1369.0
        %v1377 = vmin.f32 %v1345, 1369.0
        %v1378 = vmin.f32 %v1346, 1369.0
        %v1379 = vmin.f32 %v1347, 1369.0
        %v1380 = vmin.f32 %v1348, 1369.0
        %v1381 = vmin.f32 %v1349, 1369.0
        %v1382 = vmin.f32 %v1350, 1369.0
        %v1383 = vmin.f32 %v1351, 1369.0
        %v1384 = vmin.f32 %v1352, 1369.0
        %v1385 = vrsqrt.pop %v1353
        %v1386 = vmul.f32 %v1353, %v1385
        %vm1387 = vcmp.eq.f32.partialorder %v1353, inf
        %v1388 = vsel %vm1387, %v1353, %v1386
        %vm1389 = vcmp.eq.f32.partialorder %v1353, 0.0
        %v1390 = vand.u32 %v1353, 2147483648
        %v1391 = vsel %vm1389, %v1390, %v1388
        %v1392 = vrsqrt.pop %v1354
        %v1393 = vmul.f32 %v1354, %v1392
        %vm1394 = vcmp.eq.f32.partialorder %v1354, inf
        %v1395 = vsel %vm1394, %v1354, %v1393
        %vm1396 = vcmp.eq.f32.partialorder %v1354, 0.0
        %v1397 = vand.u32 %v1354, 2147483648
        %v1398 = vsel %vm1396, %v1397, %v1395
        %v1399 = vrsqrt.pop %v1355
        %v1400 = vmul.f32 %v1355, %v1399
        %vm1401 = vcmp.eq.f32.partialorder %v1355, inf
        %v1402 = vsel %vm1401, %v1355, %v1400
        %vm1403 = vcmp.eq.f32.partialorder %v1355, 0.0
        %v1404 = vand.u32 %v1355, 2147483648
        %v1405 = vsel %vm1403, %v1404, %v1402
        %v1406 = vrsqrt.pop %v1356
        %v1407 = vmul.f32 %v1356, %v1406
        %vm1408 = vcmp.eq.f32.partialorder %v1356, inf
        %v1409 = vsel %vm1408, %v1356, %v1407
        %vm1410 = vcmp.eq.f32.partialorder %v1356, 0.0
        %v1411 = vand.u32 %v1356, 2147483648
        %v1412 = vsel %vm1410, %v1411, %v1409
        %v1413 = vrsqrt.pop %v1357
        %v1414 = vmul.f32 %v1357, %v1413
        %vm1415 = vcmp.eq.f32.partialorder %v1357, inf
        %v1416 = vsel %vm1415, %v1357, %v1414
        %vm1417 = vcmp.eq.f32.partialorder %v1357, 0.0
        %v1418 = vand.u32 %v1357, 2147483648
        %v1419 = vsel %vm1417, %v1418, %v1416
        %v1420 = vrsqrt.pop %v1358
        %v1421 = vmul.f32 %v1358, %v1420
        %vm1422 = vcmp.eq.f32.partialorder %v1358, inf
        %v1423 = vsel %vm1422, %v1358, %v1421
        %vm1424 = vcmp.eq.f32.partialorder %v1358, 0.0
        %v1425 = vand.u32 %v1358, 2147483648
        %v1426 = vsel %vm1424, %v1425, %v1423
        %v1427 = vrsqrt.pop %v1359
        %v1428 = vmul.f32 %v1359, %v1427
        %vm1429 = vcmp.eq.f32.partialorder %v1359, inf
        %v1430 = vsel %vm1429, %v1359, %v1428
        %vm1431 = vcmp.eq.f32.partialorder %v1359, 0.0
        %v1432 = vand.u32 %v1359, 2147483648
        %v1433 = vsel %vm1431, %v1432, %v1430
        %v1434 = vrsqrt.pop %v1360
        %v1435 = vmul.f32 %v1360, %v1434
        %vm1436 = vcmp.eq.f32.partialorder %v1360, inf
        %v1437 = vsel %vm1436, %v1360, %v1435
        %vm1438 = vcmp.eq.f32.partialorder %v1360, 0.0
        %v1439 = vand.u32 %v1360, 2147483648
        %v1440 = vsel %vm1438, %v1439, %v1437
        %v1441 = vrsqrt.pop %v1361
        %v1442 = vmul.f32 %v1361, %v1441
        %vm1443 = vcmp.eq.f32.partialorder %v1361, inf
        %v1444 = vsel %vm1443, %v1361, %v1442
        %vm1445 = vcmp.eq.f32.partialorder %v1361, 0.0
        %v1446 = vand.u32 %v1361, 2147483648
        %v1447 = vsel %vm1445, %v1446, %v1444
        %v1448 = vrsqrt.pop %v1362
        %v1449 = vmul.f32 %v1362, %v1448
        %vm1450 = vcmp.eq.f32.partialorder %v1362, inf
        %v1451 = vsel %vm1450, %v1362, %v1449
        %vm1452 = vcmp.eq.f32.partialorder %v1362, 0.0
        %v1453 = vand.u32 %v1362, 2147483648
        %v1454 = vsel %vm1452, %v1453, %v1451
        %v1455 = vrsqrt.pop %v1363
        %v1456 = vmul.f32 %v1363, %v1455
        %vm1457 = vcmp.eq.f32.partialorder %v1363, inf
        %v1458 = vsel %vm1457, %v1363, %v1456
        %vm1459 = vcmp.eq.f32.partialorder %v1363, 0.0
        %v1460 = vand.u32 %v1363, 2147483648
        %v1461 = vsel %vm1459, %v1460, %v1458
        %v1462 = vrsqrt.pop %v1364
        %v1463 = vmul.f32 %v1364, %v1462
        %vm1464 = vcmp.eq.f32.partialorder %v1364, inf
        %v1465 = vsel %vm1464, %v1364, %v1463
        %vm1466 = vcmp.eq.f32.partialorder %v1364, 0.0
        %v1467 = vand.u32 %v1364, 2147483648
        %v1468 = vsel %vm1466, %v1467, %v1465
        %v1469 = vrsqrt.pop %v1365
        %v1470 = vmul.f32 %v1365, %v1469
        %vm1471 = vcmp.eq.f32.partialorder %v1365, inf
        %v1472 = vsel %vm1471, %v1365, %v1470
        %vm1473 = vcmp.eq.f32.partialorder %v1365, 0.0
        %v1474 = vand.u32 %v1365, 2147483648
        %v1475 = vsel %vm1473, %v1474, %v1472
        %v1476 = vrsqrt.pop %v1366
        %v1477 = vmul.f32 %v1366, %v1476
        %vm1478 = vcmp.eq.f32.partialorder %v1366, inf
        %v1479 = vsel %vm1478, %v1366, %v1477
        %vm1480 = vcmp.eq.f32.partialorder %v1366, 0.0
        %v1481 = vand.u32 %v1366, 2147483648
        %v1482 = vsel %vm1480, %v1481, %v1479
        %v1483 = vrsqrt.pop %v1367
        %v1484 = vmul.f32 %v1367, %v1483
        %vm1485 = vcmp.eq.f32.partialorder %v1367, inf
        %v1486 = vsel %vm1485, %v1367, %v1484
        %vm1487 = vcmp.eq.f32.partialorder %v1367, 0.0
        %v1488 = vand.u32 %v1367, 2147483648
        %v1489 = vsel %vm1487, %v1488, %v1486
        %v1490 = vrsqrt.pop %v1368
        %v1491 = vmul.f32 %v1368, %v1490
        %vm1492 = vcmp.eq.f32.partialorder %v1368, inf
        %v1493 = vsel %vm1492, %v1368, %v1491
        %vm1494 = vcmp.eq.f32.partialorder %v1368, 0.0
        %v1495 = vand.u32 %v1368, 2147483648
        %v1496 = vsel %vm1494, %v1495, %v1493
        %v1497 = vrsqrt.pop %v1369
        %v1498 = vmul.f32 %v1369, %v1497
        %vm1499 = vcmp.eq.f32.partialorder %v1369, inf
        %v1500 = vsel %vm1499, %v1369, %v1498
        %vm1501 = vcmp.eq.f32.partialorder %v1369, 0.0
        %v1502 = vand.u32 %v1369, 2147483648
        %v1503 = vsel %vm1501, %v1502, %v1500
        %v1504 = vrsqrt.pop %v1370
        %v1505 = vmul.f32 %v1370, %v1504
        %vm1506 = vcmp.eq.f32.partialorder %v1370, inf
        %v1507 = vsel %vm1506, %v1370, %v1505
        %vm1508 = vcmp.eq.f32.partialorder %v1370, 0.0
        %v1509 = vand.u32 %v1370, 2147483648
        %v1510 = vsel %vm1508, %v1509, %v1507
        %v1511 = vrsqrt.pop %v1371
        %v1512 = vmul.f32 %v1371, %v1511
        %vm1513 = vcmp.eq.f32.partialorder %v1371, inf
        %v1514 = vsel %vm1513, %v1371, %v1512
        %vm1515 = vcmp.eq.f32.partialorder %v1371, 0.0
        %v1516 = vand.u32 %v1371, 2147483648
        %v1517 = vsel %vm1515, %v1516, %v1514
        %v1518 = vrsqrt.pop %v1372
        %v1519 = vmul.f32 %v1372, %v1518
        %vm1520 = vcmp.eq.f32.partialorder %v1372, inf
        %v1521 = vsel %vm1520, %v1372, %v1519
        %vm1522 = vcmp.eq.f32.partialorder %v1372, 0.0
        %v1523 = vand.u32 %v1372, 2147483648
        %v1524 = vsel %vm1522, %v1523, %v1521
        %v1525 = vrsqrt.pop %v1373
        %v1526 = vmul.f32 %v1373, %v1525
        %vm1527 = vcmp.eq.f32.partialorder %v1373, inf
        %v1528 = vsel %vm1527, %v1373, %v1526
        %vm1529 = vcmp.eq.f32.partialorder %v1373, 0.0
        %v1530 = vand.u32 %v1373, 2147483648
        %v1531 = vsel %vm1529, %v1530, %v1528
        %v1532 = vrsqrt.pop %v1374
        %v1533 = vmul.f32 %v1374, %v1532
        %vm1534 = vcmp.eq.f32.partialorder %v1374, inf
        %v1535 = vsel %vm1534, %v1374, %v1533
        %vm1536 = vcmp.eq.f32.partialorder %v1374, 0.0
        %v1537 = vand.u32 %v1374, 2147483648
        %v1538 = vsel %vm1536, %v1537, %v1535
        %v1539 = vrsqrt.pop %v1375
        %v1540 = vmul.f32 %v1375, %v1539
        %vm1541 = vcmp.eq.f32.partialorder %v1375, inf
        %v1542 = vsel %vm1541, %v1375, %v1540
        %vm1543 = vcmp.eq.f32.partialorder %v1375, 0.0
        %v1544 = vand.u32 %v1375, 2147483648
        %v1545 = vsel %vm1543, %v1544, %v1542
        %v1546 = vrsqrt.pop %v1376
        %v1547 = vmul.f32 %v1376, %v1546
        %vm1548 = vcmp.eq.f32.partialorder %v1376, inf
        %v1549 = vsel %vm1548, %v1376, %v1547
        %vm1550 = vcmp.eq.f32.partialorder %v1376, 0.0
        %v1551 = vand.u32 %v1376, 2147483648
        %v1552 = vsel %vm1550, %v1551, %v1549
        %v1553 = vrsqrt.pop %v1377
        %v1554 = vmul.f32 %v1377, %v1553
        %vm1555 = vcmp.eq.f32.partialorder %v1377, inf
        %v1556 = vsel %vm1555, %v1377, %v1554
        %vm1557 = vcmp.eq.f32.partialorder %v1377, 0.0
        %v1558 = vand.u32 %v1377, 2147483648
        %v1559 = vsel %vm1557, %v1558, %v1556
        %v1560 = vrsqrt.pop %v1378
        %v1561 = vmul.f32 %v1378, %v1560
        %vm1562 = vcmp.eq.f32.partialorder %v1378, inf
        %v1563 = vsel %vm1562, %v1378, %v1561
        %vm1564 = vcmp.eq.f32.partialorder %v1378, 0.0
        %v1565 = vand.u32 %v1378, 2147483648
        %v1566 = vsel %vm1564, %v1565, %v1563
        %v1567 = vrsqrt.pop %v1379
        %v1568 = vmul.f32 %v1379, %v1567
        %vm1569 = vcmp.eq.f32.partialorder %v1379, inf
        %v1570 = vsel %vm1569, %v1379, %v1568
        %vm1571 = vcmp.eq.f32.partialorder %v1379, 0.0
        %v1572 = vand.u32 %v1379, 2147483648
        %v1573 = vsel %vm1571, %v1572, %v1570
        %v1574 = vrsqrt.pop %v1380
        %v1575 = vmul.f32 %v1380, %v1574
        %vm1576 = vcmp.eq.f32.partialorder %v1380, inf
        %v1577 = vsel %vm1576, %v1380, %v1575
        %vm1578 = vcmp.eq.f32.partialorder %v1380, 0.0
        %v1579 = vand.u32 %v1380, 2147483648
        %v1580 = vsel %vm1578, %v1579, %v1577
        %v1581 = vrsqrt.pop %v1381
        %v1582 = vmul.f32 %v1381, %v1581
        %vm1583 = vcmp.eq.f32.partialorder %v1381, inf
        %v1584 = vsel %vm1583, %v1381, %v1582
        %vm1585 = vcmp.eq.f32.partialorder %v1381, 0.0
        %v1586 = vand.u32 %v1381, 2147483648
        %v1587 = vsel %vm1585, %v1586, %v1584
        %v1588 = vrsqrt.pop %v1382
        %v1589 = vmul.f32 %v1382, %v1588
        %vm1590 = vcmp.eq.f32.partialorder %v1382, inf
        %v1591 = vsel %vm1590, %v1382, %v1589
        %vm1592 = vcmp.eq.f32.partialorder %v1382, 0.0
        %v1593 = vand.u32 %v1382, 2147483648
        %v1594 = vsel %vm1592, %v1593, %v1591
        %v1595 = vrsqrt.pop %v1383
        %v1596 = vmul.f32 %v1383, %v1595
        %vm1597 = vcmp.eq.f32.partialorder %v1383, inf
        %v1598 = vsel %vm1597, %v1383, %v1596
        %vm1599 = vcmp.eq.f32.partialorder %v1383, 0.0
        %v1600 = vand.u32 %v1383, 2147483648
        %v1601 = vsel %vm1599, %v1600, %v1598
        %v1602 = vrsqrt.pop %v1384
        %v1603 = vmul.f32 %v1384, %v1602
        %vm1604 = vcmp.eq.f32.partialorder %v1384, inf
        %v1605 = vsel %vm1604, %v1384, %v1603
        %vm1606 = vcmp.eq.f32.partialorder %v1384, 0.0
        %v1607 = vand.u32 %v1384, 2147483648
        %v1608 = vsel %vm1606, %v1607, %v1605
        %v1609 = vld [vmem:[%s3] sm:$0xff]
        %v1610 = vld [vmem:[%s3 + $0x8] sm:$0xff]
        %v1611 = vld [vmem:[%s3 + $0x10] sm:$0xff]
        %v1612 = vld [vmem:[%s3 + $0x18] sm:$0xff]
        %vm1613 = vcmask 261120
        %v1615 = vsel %vm1613, %v452, 0
        %v1618 = vsel %vm1613, %v453, 0
        %1620 = vmatprep.subr.mxu0 0.0
        %1621 = vmatpush1.msra.mxu0 %v1609
        %1622 = vmatprep.subr.mxu0 0.0
        %1623 = vmatpush1.msra.mxu0 %v1610
        %1624 = vmatprep.subr.mxu0 0.0
        %1625 = vmatpush1.msra.mxu0 %v1611
        %1626 = vmatprep.subr.mxu0 0.0
        %1627 = vmatpush1.msra.mxu0 %v1612
        %1628 = vmatprep.subr.mxu0 0.0
        %1629 = vmatpush1.msra.mxu0 0.0
        %1630 = vmatprep.subr.mxu0 0.0
        %1631 = vmatpush1.msra.mxu0 0.0
        %1632 = vmatprep.subr.mxu0 0.0
        %1633 = vmatpush1.msra.mxu0 0.0
        %1634 = vmatprep.subr.mxu0 0.0
        %1635 = vmatpush1.msra.mxu0 0.0
        %1636 = vmatprep.subr.mxu0 0.0
        %1637 = vmatpush1.msra.mxu0 0.0
        %1638 = vmatprep.subr.mxu0 0.0
        %1639 = vmatpush1.msra.mxu0 0.0
        %1640 = vmatprep.subr.mxu0 0.0
        %1641 = vmatpush1.msra.mxu0 0.0
        %1642 = vmatprep.subr.mxu0 0.0
        %1643 = vmatpush1.msra.mxu0 0.0
        %1644 = vmatprep.subr.mxu0 0.0
        %1645 = vmatpush1.msra.mxu0 0.0
        %1646 = vmatprep.subr.mxu0 0.0
        %1647 = vmatpush1.msra.mxu0 0.0
        %1648 = vmatprep.subr.mxu0 0.0
        %1649 = vmatpush1.msra.mxu0 0.0
        %1650 = vmatprep.subr.mxu0 0.0
        %1651 = vmatpush1.msra.mxu0 0.0
        %1652 = vmatprep.subr.mxu0 0.0
        %1653 = vmatpush1.msra.mxu0 0.0
        %1654 = vmatprep.subr.mxu0 0.0
        %1655 = vmatpush1.msra.mxu0 0.0
        %1656 = vmatprep.subr.mxu0 0.0
        %1657 = vmatpush1.msra.mxu0 0.0
        %1658 = vmatprep.subr.mxu0 0.0
        %1659 = vmatpush1.msra.mxu0 0.0
        %1660 = vmatprep.subr.mxu0 0.0
        %1661 = vmatpush1.msra.mxu0 0.0
        %1662 = vmatprep.subr.mxu0 0.0
        %1663 = vmatpush1.msra.mxu0 0.0
        %1664 = vmatprep.subr.mxu0 0.0
        %1665 = vmatpush1.msra.mxu0 0.0
        %1666 = vmatprep.subr.mxu0 0.0
        %1667 = vmatpush1.msra.mxu0 0.0
        %1668 = vmatprep.subr.mxu0 0.0
        %1669 = vmatpush1.msra.mxu0 0.0
        %1670 = vmatprep.subr.mxu0 0.0
        %1671 = vmatpush1.msra.mxu0 0.0
        %1672 = vmatprep.subr.mxu0 0.0
        %1673 = vmatpush1.msra.mxu0 0.0
        %1674 = vmatprep.subr.mxu0 0.0
        %1675 = vmatpush1.msra.mxu0 0.0
        %1676 = vmatprep.subr.mxu0 0.0
        %1677 = vmatpush1.msra.mxu0 0.0
        %1678 = vmatprep.subr.mxu0 0.0
        %1679 = vmatpush1.msra.mxu0 0.0
        %1680 = vmatprep.subr.mxu0 0.0
        %1681 = vmatpush1.msra.mxu0 0.0
        %1682 = vmatprep.subr.mxu0 0.0
        %1683 = vmatpush1.msra.mxu0 0.0
        %1684 = vmatprep.mubr.f32.mxu0 0.0
        %1685 = vmatmul.mubr.f32.gmra.mrb[0].mxu0 %v1615
        %v1686 = vpop.f32.mrb[0].mxu0
        %v1687 = vadd.f32 0.0, %v1686
        %v1688 = vpop.f32.mrb[0].mxu0
        %1689 = vmatprep.mubr.f32.mxu0 0.0
        %1690 = vmatmul.mubr.f32.gmra.mrb[0].mxu0 %v1618
        %v1691 = vpop.f32.mrb[0].mxu0
        %v1692 = vadd.f32 0.0, %v1691
        %v1693 = vpop.f32.mrb[0].mxu0
        %1694 = vdwg.mxu0
        %v1695 = vld [vmem:[%s4] sm:$0xff]
        %v1696 = vld [vmem:[%s4 + $0x8] sm:$0xff]
        %v1697 = vld [vmem:[%s4 + $0x10] sm:$0xff]
        %v1698 = vld [vmem:[%s4 + $0x18] sm:$0xff]
        %v1699 = vld [vmem:[%s10] sm:$0xf]
        %v1700 = vld [vmem:[%s11] sm:$0x1]
        %v1701 = vlaneseq
        %v1702 = vshrl.u32 %v1701, 7
        %v1703 = vsub.s32 0, %v1702
        %v1704 = vrot.slane %v1699, %v1703
        %v1705 = vmul.f32 %v946, %v1704
        %v1706 = vmul.f32 %v947, %v1704
        %v1707 = vmul.f32 %v948, %v1704
        %v1708 = vmul.f32 %v949, %v1704
        %v1709 = vmul.f32 %v950, %v1704
        %v1710 = vmul.f32 %v951, %v1704
        %v1711 = vmul.f32 %v952, %v1704
        %v1712 = vmul.f32 %v953, %v1704
        %v1713 = vmul.f32 %v954, %v1704
        %v1714 = vmul.f32 %v955, %v1704
        %v1715 = vmul.f32 %v956, %v1704
        %v1716 = vmul.f32 %v957, %v1704
        %v1717 = vmul.f32 %v958, %v1704
        %v1718 = vmul.f32 %v959, %v1704
        %v1719 = vmul.f32 %v960, %v1704
        %v1720 = vmul.f32 %v961, %v1704
        %v1721 = vmul.f32 %v962, %v1704
        %v1722 = vmul.f32 %v963, %v1704
        %v1723 = vmul.f32 %v964, %v1704
        %v1724 = vmul.f32 %v965, %v1704
        %v1725 = vmul.f32 %v966, %v1704
        %v1726 = vmul.f32 %v967, %v1704
        %v1727 = vmul.f32 %v968, %v1704
        %v1728 = vmul.f32 %v969, %v1704
        %v1729 = vmul.f32 %v970, %v1704
        %v1730 = vmul.f32 %v971, %v1704
        %v1731 = vmul.f32 %v972, %v1704
        %v1732 = vmul.f32 %v973, %v1704
        %v1733 = vmul.f32 %v974, %v1704
        %v1734 = vmul.f32 %v975, %v1704
        %v1735 = vmul.f32 %v976, %v1704
        %v1736 = vmul.f32 %v977, %v1704
        %v1737 = vsel %vm488, %v1705, 0.0
        %1738 = vadd.xlane.f32.xlu0 %v1737
        %v1739 = vpop.xlane.xlu0 %1738
        %v1740 = vsel %vm488, %v1706, 0.0
        %1741 = vadd.xlane.f32.xlu0 %v1740
        %v1742 = vpop.xlane.xlu0 %1741
        %v1743 = vsel %vm488, %v1707, 0.0
        %1744 = vadd.xlane.f32.xlu0 %v1743
        %v1745 = vpop.xlane.xlu0 %1744
        %v1746 = vsel %vm488, %v1708, 0.0
        %1747 = vadd.xlane.f32.xlu0 %v1746
        %v1748 = vpop.xlane.xlu0 %1747
        %v1749 = vsel %vm488, %v1709, 0.0
        %1750 = vadd.xlane.f32.xlu0 %v1749
        %v1751 = vpop.xlane.xlu0 %1750
        %v1752 = vsel %vm488, %v1710, 0.0
        %1753 = vadd.xlane.f32.xlu0 %v1752
        %v1754 = vpop.xlane.xlu0 %1753
        %v1755 = vsel %vm488, %v1711, 0.0
        %1756 = vadd.xlane.f32.xlu0 %v1755
        %v1757 = vpop.xlane.xlu0 %1756
        %v1758 = vsel %vm488, %v1712, 0.0
        %1759 = vadd.xlane.f32.xlu0 %v1758
        %v1760 = vpop.xlane.xlu0 %1759
        %v1761 = vsel %vm488, %v1713, 0.0
        %1762 = vadd.xlane.f32.xlu0 %v1761
        %v1763 = vpop.xlane.xlu0 %1762
        %v1764 = vsel %vm488, %v1714, 0.0
        %1765 = vadd.xlane.f32.xlu0 %v1764
        %v1766 = vpop.xlane.xlu0 %1765
        %v1767 = vsel %vm488, %v1715, 0.0
        %1768 = vadd.xlane.f32.xlu0 %v1767
        %v1769 = vpop.xlane.xlu0 %1768
        %v1770 = vsel %vm488, %v1716, 0.0
        %1771 = vadd.xlane.f32.xlu0 %v1770
        %v1772 = vpop.xlane.xlu0 %1771
        %v1773 = vsel %vm488, %v1717, 0.0
        %1774 = vadd.xlane.f32.xlu0 %v1773
        %v1775 = vpop.xlane.xlu0 %1774
        %v1776 = vsel %vm488, %v1718, 0.0
        %1777 = vadd.xlane.f32.xlu0 %v1776
        %v1778 = vpop.xlane.xlu0 %1777
        %v1779 = vsel %vm488, %v1719, 0.0
        %1780 = vadd.xlane.f32.xlu0 %v1779
        %v1781 = vpop.xlane.xlu0 %1780
        %v1782 = vsel %vm488, %v1720, 0.0
        %1783 = vadd.xlane.f32.xlu0 %v1782
        %v1784 = vpop.xlane.xlu0 %1783
        %v1785 = vsel %vm488, %v1721, 0.0
        %1786 = vadd.xlane.f32.xlu0 %v1785
        %v1787 = vpop.xlane.xlu0 %1786
        %v1788 = vsel %vm488, %v1722, 0.0
        %1789 = vadd.xlane.f32.xlu0 %v1788
        %v1790 = vpop.xlane.xlu0 %1789
        %v1791 = vsel %vm488, %v1723, 0.0
        %1792 = vadd.xlane.f32.xlu0 %v1791
        %v1793 = vpop.xlane.xlu0 %1792
        %v1794 = vsel %vm488, %v1724, 0.0
        %1795 = vadd.xlane.f32.xlu0 %v1794
        %v1796 = vpop.xlane.xlu0 %1795
        %v1797 = vsel %vm488, %v1725, 0.0
        %1798 = vadd.xlane.f32.xlu0 %v1797
        %v1799 = vpop.xlane.xlu0 %1798
        %v1800 = vsel %vm488, %v1726, 0.0
        %1801 = vadd.xlane.f32.xlu0 %v1800
        %v1802 = vpop.xlane.xlu0 %1801
        %v1803 = vsel %vm488, %v1727, 0.0
        %1804 = vadd.xlane.f32.xlu0 %v1803
        %v1805 = vpop.xlane.xlu0 %1804
        %v1806 = vsel %vm488, %v1728, 0.0
        %1807 = vadd.xlane.f32.xlu0 %v1806
        %v1808 = vpop.xlane.xlu0 %1807
        %v1809 = vsel %vm488, %v1729, 0.0
        %1810 = vadd.xlane.f32.xlu0 %v1809
        %v1811 = vpop.xlane.xlu0 %1810
        %v1812 = vsel %vm488, %v1730, 0.0
        %1813 = vadd.xlane.f32.xlu0 %v1812
        %v1814 = vpop.xlane.xlu0 %1813
        %v1815 = vsel %vm488, %v1731, 0.0
        %1816 = vadd.xlane.f32.xlu0 %v1815
        %v1817 = vpop.xlane.xlu0 %1816
        %v1818 = vsel %vm488, %v1732, 0.0
        %1819 = vadd.xlane.f32.xlu0 %v1818
        %v1820 = vpop.xlane.xlu0 %1819
        %v1821 = vsel %vm488, %v1733, 0.0
        %1822 = vadd.xlane.f32.xlu0 %v1821
        %v1823 = vpop.xlane.xlu0 %1822
        %v1824 = vsel %vm488, %v1734, 0.0
        %1825 = vadd.xlane.f32.xlu0 %v1824
        %v1826 = vpop.xlane.xlu0 %1825
        %v1827 = vsel %vm488, %v1735, 0.0
        %1828 = vadd.xlane.f32.xlu0 %v1827
        %v1829 = vpop.xlane.xlu0 %1828
        %v1830 = vsel %vm488, %v1736, 0.0
        %1831 = vadd.xlane.f32.xlu0 %v1830
        %v1832 = vpop.xlane.xlu0 %1831
        %v1834 = vlaneseq
        %v1835 = vshrl.u32 %v1834, 7
        %v1836 = vsub.s32 0, %v1835
        %v1837 = vrot.slane %v1700, %v1836
        %1838 = vset.pattern.permute.xlu0 0
        %1839 = vperm.xlu0 %1838, %v1837
        %v1840 = vpop.permute.xlu0 %1839
        %v1842 = vmul.f32 %v1391, %v1840
        %v1843 = vmul.f32 %v1398, %v1840
        %v1844 = vmul.f32 %v1405, %v1840
        %v1845 = vmul.f32 %v1412, %v1840
        %v1846 = vmul.f32 %v1419, %v1840
        %v1847 = vmul.f32 %v1426, %v1840
        %v1848 = vmul.f32 %v1433, %v1840
        %v1849 = vmul.f32 %v1440, %v1840
        %v1850 = vmul.f32 %v1447, %v1840
        %v1851 = vmul.f32 %v1454, %v1840
        %v1852 = vmul.f32 %v1461, %v1840
        %v1853 = vmul.f32 %v1468, %v1840
        %v1854 = vmul.f32 %v1475, %v1840
        %v1855 = vmul.f32 %v1482, %v1840
        %v1856 = vmul.f32 %v1489, %v1840
        %v1857 = vmul.f32 %v1496, %v1840
        %v1858 = vmul.f32 %v1503, %v1840
        %v1859 = vmul.f32 %v1510, %v1840
        %v1860 = vmul.f32 %v1517, %v1840
        %v1861 = vmul.f32 %v1524, %v1840
        %v1862 = vmul.f32 %v1531, %v1840
        %v1863 = vmul.f32 %v1538, %v1840
        %v1864 = vmul.f32 %v1545, %v1840
        %v1865 = vmul.f32 %v1552, %v1840
        %v1866 = vmul.f32 %v1559, %v1840
        %v1867 = vmul.f32 %v1566, %v1840
        %v1868 = vmul.f32 %v1573, %v1840
        %v1869 = vmul.f32 %v1580, %v1840
        %v1870 = vmul.f32 %v1587, %v1840
        %v1871 = vmul.f32 %v1594, %v1840
        %v1872 = vmul.f32 %v1601, %v1840
        %v1873 = vmul.f32 %v1608, %v1840
        %v1874 = vadd.f32 %v1739, %v1842
        %v1875 = vadd.f32 %v1742, %v1843
        %v1876 = vadd.f32 %v1745, %v1844
        %v1877 = vadd.f32 %v1748, %v1845
        %v1878 = vadd.f32 %v1751, %v1846
        %v1879 = vadd.f32 %v1754, %v1847
        %v1880 = vadd.f32 %v1757, %v1848
        %v1881 = vadd.f32 %v1760, %v1849
        %v1882 = vadd.f32 %v1763, %v1850
        %v1883 = vadd.f32 %v1766, %v1851
        %v1884 = vadd.f32 %v1769, %v1852
        %v1885 = vadd.f32 %v1772, %v1853
        %v1886 = vadd.f32 %v1775, %v1854
        %v1887 = vadd.f32 %v1778, %v1855
        %v1888 = vadd.f32 %v1781, %v1856
        %v1889 = vadd.f32 %v1784, %v1857
        %v1890 = vadd.f32 %v1787, %v1858
        %v1891 = vadd.f32 %v1790, %v1859
        %v1892 = vadd.f32 %v1793, %v1860
        %v1893 = vadd.f32 %v1796, %v1861
        %v1894 = vadd.f32 %v1799, %v1862
        %v1895 = vadd.f32 %v1802, %v1863
        %v1896 = vadd.f32 %v1805, %v1864
        %v1897 = vadd.f32 %v1808, %v1865
        %v1898 = vadd.f32 %v1811, %v1866
        %v1899 = vadd.f32 %v1814, %v1867
        %v1900 = vadd.f32 %v1817, %v1868
        %v1901 = vadd.f32 %v1820, %v1869
        %v1902 = vadd.f32 %v1823, %v1870
        %v1903 = vadd.f32 %v1826, %v1871
        %v1904 = vadd.f32 %v1829, %v1872
        %v1905 = vadd.f32 %v1832, %v1873
        %1908 = vrot.lane.b32.xlu0 %v1687, 96
        %v1909 = vpop.permute.xlu0 %1908
        %1910 = vrot.lane.b32.xlu0 %v1692, 96
        %v1911 = vpop.permute.xlu0 %1910
        %vm1912 = vcmask 64512
        %v1913 = vsel %vm1912, %v1687, 0
        %v1915 = vsel %vm1912, %v1692, 0
        %v1917 = vsel %vm1912, %v1909, 0
        %v1919 = vsel %vm1912, %v1911, 0
        %1921 = vmatprep.subr.mxu0 0.0
        %1922 = vmatpush1.xpose.msra.mxu0 %v1917
        %1923 = vmatprep.subr.mxu0 0.0
        %1924 = vmatpush1.xpose.msra.mxu0 %v1919
        %1925 = vmatprep.subr.mxu0 0.0
        %1926 = vmatpush1.xpose.msra.mxu0 0.0
        %1927 = vmatprep.subr.mxu0 0.0
        %1928 = vmatpush1.xpose.msra.mxu0 0.0
        %1929 = vmatprep.subr.mxu0 0.0
        %1930 = vmatpush1.xpose.msra.mxu0 0.0
        %1931 = vmatprep.subr.mxu0 0.0
        %1932 = vmatpush1.xpose.msra.mxu0 0.0
        %1933 = vmatprep.subr.mxu0 0.0
        %1934 = vmatpush1.xpose.msra.mxu0 0.0
        %1935 = vmatprep.subr.mxu0 0.0
        %1936 = vmatpush1.xpose.msra.mxu0 0.0
        %1937 = vmatprep.subr.mxu0 0.0
        %1938 = vmatpush1.xpose.msra.mxu0 0.0
        %1939 = vmatprep.subr.mxu0 0.0
        %1940 = vmatpush1.xpose.msra.mxu0 0.0
        %1941 = vmatprep.subr.mxu0 0.0
        %1942 = vmatpush1.xpose.msra.mxu0 0.0
        %1943 = vmatprep.subr.mxu0 0.0
        %1944 = vmatpush1.xpose.msra.mxu0 0.0
        %1945 = vmatprep.subr.mxu0 0.0
        %1946 = vmatpush1.xpose.msra.mxu0 0.0
        %1947 = vmatprep.subr.mxu0 0.0
        %1948 = vmatpush1.xpose.msra.mxu0 0.0
        %1949 = vmatprep.subr.mxu0 0.0
        %1950 = vmatpush1.xpose.msra.mxu0 0.0
        %1951 = vmatprep.subr.mxu0 0.0
        %1952 = vmatpush1.xpose.msra.mxu0 0.0
        %1953 = vmatprep.subr.mxu0 0.0
        %1954 = vmatpush1.xpose.msra.mxu0 0.0
        %1955 = vmatprep.subr.mxu0 0.0
        %1956 = vmatpush1.xpose.msra.mxu0 0.0
        %1957 = vmatprep.subr.mxu0 0.0
        %1958 = vmatpush1.xpose.msra.mxu0 0.0
        %1959 = vmatprep.subr.mxu0 0.0
        %1960 = vmatpush1.xpose.msra.mxu0 0.0
        %1961 = vmatprep.subr.mxu0 0.0
        %1962 = vmatpush1.xpose.msra.mxu0 0.0
        %1963 = vmatprep.subr.mxu0 0.0
        %1964 = vmatpush1.xpose.msra.mxu0 0.0
        %1965 = vmatprep.subr.mxu0 0.0
        %1966 = vmatpush1.xpose.msra.mxu0 0.0
        %1967 = vmatprep.subr.mxu0 0.0
        %1968 = vmatpush1.xpose.msra.mxu0 0.0
        %1969 = vmatprep.subr.mxu0 0.0
        %1970 = vmatpush1.xpose.msra.mxu0 0.0
        %1971 = vmatprep.subr.mxu0 0.0
        %1972 = vmatpush1.xpose.msra.mxu0 0.0
        %1973 = vmatprep.subr.mxu0 0.0
        %1974 = vmatpush1.xpose.msra.mxu0 0.0
        %1975 = vmatprep.subr.mxu0 0.0
        %1976 = vmatpush1.xpose.msra.mxu0 0.0
        %1977 = vmatprep.subr.mxu0 0.0
        %1978 = vmatpush1.xpose.msra.mxu0 0.0
        %1979 = vmatprep.subr.mxu0 0.0
        %1980 = vmatpush1.xpose.msra.mxu0 0.0
        %1981 = vmatprep.subr.mxu0 0.0
        %1982 = vmatpush1.xpose.msra.mxu0 0.0
        %1983 = vmatprep.subr.mxu0 0.0
        %1984 = vmatpush1.xpose.msra.mxu0 0.0
        %1985 = vmatprep.mubr.f32.mxu0 0.0
        %1986 = vmatmul.mubr.f32.gmra.mrb[0].mxu0 %v1913
        %v1987 = vpop.f32.mrb[0].mxu0
        %v1988 = vadd.f32 0.0, %v1987
        %v1989 = vpop.f32.mrb[0].mxu0
        %1990 = vmatprep.mubr.f32.mxu0 0.0
        %1991 = vmatmul.mubr.f32.gmra.mrb[0].mxu0 %v1915
        %v1992 = vpop.f32.mrb[0].mxu0
        %v1993 = vadd.f32 0.0, %v1992
        %v1994 = vpop.f32.mrb[0].mxu0
        %1995 = vdwg.mxu0
        %v1996 = vmul.f32 %v1988, 0.35355338
        %v1997 = vmul.f32 %v1993, 0.35355338
        %v2030 = vlaneseq
        %v2031 = vand.u32 %v2030, 127
        %v2032 = vlaneseq
        %v2033 = vshrl.u32 %v2032, 7
        %v2034 = vsub.s32 %v2031, %v2033
        %v2035 = vrot.slane %v1874, %v2034
        %v2036 = vadd.s32 %v2031, 4294967288
        %v2037 = vlaneseq
        %v2038 = vshrl.u32 %v2037, 7
        %v2039 = vsub.s32 %v2036, %v2038
        %v2040 = vrot.slane %v1875, %v2039
        %vm2041 = vcmask 130112
        %v2042 = vsel %vm2041, %v2040, %v2035
        %v2043 = vlaneseq
        %v2044 = vshrl.u32 %v2043, 7
        %v2045 = vsub.s32 %v2031, %v2044
        %v2046 = vrot.slane %v1876, %v2045
        %v2047 = vlaneseq
        %v2048 = vshrl.u32 %v2047, 7
        %v2049 = vsub.s32 %v2036, %v2048
        %v2050 = vrot.slane %v1877, %v2049
        %v2051 = vsel %vm2041, %v2050, %v2046
        %v2052 = vlaneseq
        %v2053 = vshrl.u32 %v2052, 7
        %v2054 = vsub.s32 %v2031, %v2053
        %v2055 = vrot.slane %v1878, %v2054
        %v2056 = vlaneseq
        %v2057 = vshrl.u32 %v2056, 7
        %v2058 = vsub.s32 %v2036, %v2057
        %v2059 = vrot.slane %v1879, %v2058
        %v2060 = vsel %vm2041, %v2059, %v2055
        %v2061 = vlaneseq
        %v2062 = vshrl.u32 %v2061, 7
        %v2063 = vsub.s32 %v2031, %v2062
        %v2064 = vrot.slane %v1880, %v2063
        %v2065 = vlaneseq
        %v2066 = vshrl.u32 %v2065, 7
        %v2067 = vsub.s32 %v2036, %v2066
        %v2068 = vrot.slane %v1881, %v2067
        %v2069 = vsel %vm2041, %v2068, %v2064
        %v2070 = vlaneseq
        %v2071 = vshrl.u32 %v2070, 7
        %v2072 = vsub.s32 %v2031, %v2071
        %v2073 = vrot.slane %v1882, %v2072
        %v2074 = vlaneseq
        %v2075 = vshrl.u32 %v2074, 7
        %v2076 = vsub.s32 %v2036, %v2075
        %v2077 = vrot.slane %v1883, %v2076
        %v2078 = vsel %vm2041, %v2077, %v2073
        %v2079 = vlaneseq
        %v2080 = vshrl.u32 %v2079, 7
        %v2081 = vsub.s32 %v2031, %v2080
        %v2082 = vrot.slane %v1884, %v2081
        %v2083 = vlaneseq
        %v2084 = vshrl.u32 %v2083, 7
        %v2085 = vsub.s32 %v2036, %v2084
        %v2086 = vrot.slane %v1885, %v2085
        %v2087 = vsel %vm2041, %v2086, %v2082
        %v2088 = vlaneseq
        %v2089 = vshrl.u32 %v2088, 7
        %v2090 = vsub.s32 %v2031, %v2089
        %v2091 = vrot.slane %v1886, %v2090
        %v2092 = vlaneseq
        %v2093 = vshrl.u32 %v2092, 7
        %v2094 = vsub.s32 %v2036, %v2093
        %v2095 = vrot.slane %v1887, %v2094
        %v2096 = vsel %vm2041, %v2095, %v2091
        %v2097 = vlaneseq
        %v2098 = vshrl.u32 %v2097, 7
        %v2099 = vsub.s32 %v2031, %v2098
        %v2100 = vrot.slane %v1888, %v2099
        %v2101 = vlaneseq
        %v2102 = vshrl.u32 %v2101, 7
        %v2103 = vsub.s32 %v2036, %v2102
        %v2104 = vrot.slane %v1889, %v2103
        %v2105 = vsel %vm2041, %v2104, %v2100
        %v2106 = vlaneseq
        %v2107 = vshrl.u32 %v2106, 7
        %v2108 = vsub.s32 %v2031, %v2107
        %v2109 = vrot.slane %v1890, %v2108
        %v2110 = vlaneseq
        %v2111 = vshrl.u32 %v2110, 7
        %v2112 = vsub.s32 %v2036, %v2111
        %v2113 = vrot.slane %v1891, %v2112
        %v2114 = vsel %vm2041, %v2113, %v2109
        %v2115 = vlaneseq
        %v2116 = vshrl.u32 %v2115, 7
        %v2117 = vsub.s32 %v2031, %v2116
        %v2118 = vrot.slane %v1892, %v2117
        %v2119 = vlaneseq
        %v2120 = vshrl.u32 %v2119, 7
        %v2121 = vsub.s32 %v2036, %v2120
        %v2122 = vrot.slane %v1893, %v2121
        %v2123 = vsel %vm2041, %v2122, %v2118
        %v2124 = vlaneseq
        %v2125 = vshrl.u32 %v2124, 7
        %v2126 = vsub.s32 %v2031, %v2125
        %v2127 = vrot.slane %v1894, %v2126
        %v2128 = vlaneseq
        %v2129 = vshrl.u32 %v2128, 7
        %v2130 = vsub.s32 %v2036, %v2129
        %v2131 = vrot.slane %v1895, %v2130
        %v2132 = vsel %vm2041, %v2131, %v2127
        %v2133 = vlaneseq
        %v2134 = vshrl.u32 %v2133, 7
        %v2135 = vsub.s32 %v2031, %v2134
        %v2136 = vrot.slane %v1896, %v2135
        %v2137 = vlaneseq
        %v2138 = vshrl.u32 %v2137, 7
        %v2139 = vsub.s32 %v2036, %v2138
        %v2140 = vrot.slane %v1897, %v2139
        %v2141 = vsel %vm2041, %v2140, %v2136
        %v2142 = vlaneseq
        %v2143 = vshrl.u32 %v2142, 7
        %v2144 = vsub.s32 %v2031, %v2143
        %v2145 = vrot.slane %v1898, %v2144
        %v2146 = vlaneseq
        %v2147 = vshrl.u32 %v2146, 7
        %v2148 = vsub.s32 %v2036, %v2147
        %v2149 = vrot.slane %v1899, %v2148
        %v2150 = vsel %vm2041, %v2149, %v2145
        %v2151 = vlaneseq
        %v2152 = vshrl.u32 %v2151, 7
        %v2153 = vsub.s32 %v2031, %v2152
        %v2154 = vrot.slane %v1900, %v2153
        %v2155 = vlaneseq
        %v2156 = vshrl.u32 %v2155, 7
        %v2157 = vsub.s32 %v2036, %v2156
        %v2158 = vrot.slane %v1901, %v2157
        %v2159 = vsel %vm2041, %v2158, %v2154
        %v2160 = vlaneseq
        %v2161 = vshrl.u32 %v2160, 7
        %v2162 = vsub.s32 %v2031, %v2161
        %v2163 = vrot.slane %v1902, %v2162
        %v2164 = vlaneseq
        %v2165 = vshrl.u32 %v2164, 7
        %v2166 = vsub.s32 %v2036, %v2165
        %v2167 = vrot.slane %v1903, %v2166
        %v2168 = vsel %vm2041, %v2167, %v2163
        %v2169 = vlaneseq
        %v2170 = vshrl.u32 %v2169, 7
        %v2171 = vsub.s32 %v2031, %v2170
        %v2172 = vrot.slane %v1904, %v2171
        %v2173 = vlaneseq
        %v2174 = vshrl.u32 %v2173, 7
        %v2175 = vsub.s32 %v2036, %v2174
        %v2176 = vrot.slane %v1905, %v2175
        %v2177 = vsel %vm2041, %v2176, %v2172
        %vm2178 = vcmask 1041409
        %v2179 = vsel %vm2178, %v2051, %v2042
        %vm2180 = vcmask 1042434
        %v2181 = vsel %vm2180, %v2060, %v2179
        %vm2182 = vcmask 1043459
        %v2183 = vsel %vm2182, %v2069, %v2181
        %vm2184 = vcmask 1044484
        %v2185 = vsel %vm2184, %v2078, %v2183
        %vm2186 = vcmask 1045509
        %v2187 = vsel %vm2186, %v2087, %v2185
        %vm2188 = vcmask 1046534
        %v2189 = vsel %vm2188, %v2096, %v2187
        %vm2190 = vcmask 1047559
        %v2191 = vsel %vm2190, %v2105, %v2189
        %v2192 = vsel %vm2178, %v2123, %v2114
        %v2193 = vsel %vm2180, %v2132, %v2192
        %v2194 = vsel %vm2182, %v2141, %v2193
        %v2195 = vsel %vm2184, %v2150, %v2194
        %v2196 = vsel %vm2186, %v2159, %v2195
        %v2197 = vsel %vm2188, %v2168, %v2196
        %v2198 = vsel %vm2190, %v2177, %v2197
        %v2201 = vadd.f32 %v1996, %v2191
        %v2202 = vadd.f32 %v1997, %v2198
        %v2203 = vsel %vm488, %v2201, -inf
        %2204 = vmax.xlane.f32.xlu0 %v2203
        %v2205 = vpop.xlane.xlu0 %2204
        %v2206 = vsel %vm488, %v2202, -inf
        %2207 = vmax.xlane.f32.xlu0 %v2206
        %v2208 = vpop.xlane.xlu0 %2207
        %v2209 = vsub.f32 %v2201, %v2205
        %v2210 = vsub.f32 %v2202, %v2208
        %v2211 = vmul.f32 %v2209, 1.442695
        %v2212 = vpow.pop %v2211
        %v2213 = vmul.f32 %v2210, 1.442695
        %v2214 = vpow.pop %v2213
        %v2215 = vsel %vm488, %v2212, 0.0
        %2216 = vadd.xlane.f32.xlu0 %v2215
        %v2217 = vpop.xlane.xlu0 %2216
        %v2218 = vsel %vm488, %v2214, 0.0
        %2219 = vadd.xlane.f32.xlu0 %v2218
        %v2220 = vpop.xlane.xlu0 %2219
        %v2221 = vrcp.pop %v2217
        %v2222 = vmul.f32 %v2212, %v2221
        %v2223 = vrcp.pop %v2220
        %v2224 = vmul.f32 %v2214, %v2223
        %2225 = vrot.lane.b32.xlu0 %v1687, 64
        %v2226 = vpop.permute.xlu0 %2225
        %2227 = vrot.lane.b32.xlu0 %v1692, 64
        %v2228 = vpop.permute.xlu0 %2227
        %v2232 = vsel %vm488, %v2222, 0
        %v2235 = vsel %vm488, %v2224, 0
        %2237 = vmatprep.subr.mxu0 0.0
        %2238 = vmatpush1.msra.mxu0 %v2226
        %2239 = vmatprep.subr.mxu0 0.0
        %2240 = vmatpush1.msra.mxu0 %v2228
        %2241 = vmatprep.subr.mxu0 0.0
        %2242 = vmatpush1.msra.mxu0 0.0
        %2243 = vmatprep.subr.mxu0 0.0
        %2244 = vmatpush1.msra.mxu0 0.0
        %2245 = vmatprep.subr.mxu0 0.0
        %2246 = vmatpush1.msra.mxu0 0.0
        %2247 = vmatprep.subr.mxu0 0.0
        %2248 = vmatpush1.msra.mxu0 0.0
        %2249 = vmatprep.subr.mxu0 0.0
        %2250 = vmatpush1.msra.mxu0 0.0
        %2251 = vmatprep.subr.mxu0 0.0
        %2252 = vmatpush1.msra.mxu0 0.0
        %2253 = vmatprep.subr.mxu0 0.0
        %2254 = vmatpush1.msra.mxu0 0.0
        %2255 = vmatprep.subr.mxu0 0.0
        %2256 = vmatpush1.msra.mxu0 0.0
        %2257 = vmatprep.subr.mxu0 0.0
        %2258 = vmatpush1.msra.mxu0 0.0
        %2259 = vmatprep.subr.mxu0 0.0
        %2260 = vmatpush1.msra.mxu0 0.0
        %2261 = vmatprep.subr.mxu0 0.0
        %2262 = vmatpush1.msra.mxu0 0.0
        %2263 = vmatprep.subr.mxu0 0.0
        %2264 = vmatpush1.msra.mxu0 0.0
        %2265 = vmatprep.subr.mxu0 0.0
        %2266 = vmatpush1.msra.mxu0 0.0
        %2267 = vmatprep.subr.mxu0 0.0
        %2268 = vmatpush1.msra.mxu0 0.0
        %2269 = vmatprep.subr.mxu0 0.0
        %2270 = vmatpush1.msra.mxu0 0.0
        %2271 = vmatprep.subr.mxu0 0.0
        %2272 = vmatpush1.msra.mxu0 0.0
        %2273 = vmatprep.subr.mxu0 0.0
        %2274 = vmatpush1.msra.mxu0 0.0
        %2275 = vmatprep.subr.mxu0 0.0
        %2276 = vmatpush1.msra.mxu0 0.0
        %2277 = vmatprep.subr.mxu0 0.0
        %2278 = vmatpush1.msra.mxu0 0.0
        %2279 = vmatprep.subr.mxu0 0.0
        %2280 = vmatpush1.msra.mxu0 0.0
        %2281 = vmatprep.subr.mxu0 0.0
        %2282 = vmatpush1.msra.mxu0 0.0
        %2283 = vmatprep.subr.mxu0 0.0
        %2284 = vmatpush1.msra.mxu0 0.0
        %2285 = vmatprep.subr.mxu0 0.0
        %2286 = vmatpush1.msra.mxu0 0.0
        %2287 = vmatprep.subr.mxu0 0.0
        %2288 = vmatpush1.msra.mxu0 0.0
        %2289 = vmatprep.subr.mxu0 0.0
        %2290 = vmatpush1.msra.mxu0 0.0
        %2291 = vmatprep.subr.mxu0 0.0
        %2292 = vmatpush1.msra.mxu0 0.0
        %2293 = vmatprep.subr.mxu0 0.0
        %2294 = vmatpush1.msra.mxu0 0.0
        %2295 = vmatprep.subr.mxu0 0.0
        %2296 = vmatpush1.msra.mxu0 0.0
        %2297 = vmatprep.subr.mxu0 0.0
        %2298 = vmatpush1.msra.mxu0 0.0
        %2299 = vmatprep.subr.mxu0 0.0
        %2300 = vmatpush1.msra.mxu0 0.0
        %2301 = vmatprep.mubr.f32.mxu0 0.0
        %2302 = vmatmul.mubr.f32.gmra.mrb[0].mxu0 %v2232
        %v2303 = vpop.f32.mrb[0].mxu0
        %v2304 = vadd.f32 0.0, %v2303
        %v2305 = vpop.f32.mrb[0].mxu0
        %2306 = vmatprep.mubr.f32.mxu0 0.0
        %2307 = vmatmul.mubr.f32.gmra.mrb[0].mxu0 %v2235
        %v2308 = vpop.f32.mrb[0].mxu0
        %v2309 = vadd.f32 0.0, %v2308
        %v2310 = vpop.f32.mrb[0].mxu0
        %2311 = vdwg.mxu0
        %v2312 = vlaneseq
        %v2313 = vshrl.u32 %v2312, 7
        %v2314 = vsub.s32 1, %v2313
        %v2315 = vrot.slane %v1699, %v2314
        %v2316 = vmul.f32 %v946, %v2315
        %v2317 = vmul.f32 %v947, %v2315
        %v2318 = vmul.f32 %v948, %v2315
        %v2319 = vmul.f32 %v949, %v2315
        %v2320 = vmul.f32 %v950, %v2315
        %v2321 = vmul.f32 %v951, %v2315
        %v2322 = vmul.f32 %v952, %v2315
        %v2323 = vmul.f32 %v953, %v2315
        %v2324 = vmul.f32 %v954, %v2315
        %v2325 = vmul.f32 %v955, %v2315
        %v2326 = vmul.f32 %v956, %v2315
        %v2327 = vmul.f32 %v957, %v2315
        %v2328 = vmul.f32 %v958, %v2315
        %v2329 = vmul.f32 %v959, %v2315
        %v2330 = vmul.f32 %v960, %v2315
        %v2331 = vmul.f32 %v961, %v2315
        %v2332 = vmul.f32 %v962, %v2315
        %v2333 = vmul.f32 %v963, %v2315
        %v2334 = vmul.f32 %v964, %v2315
        %v2335 = vmul.f32 %v965, %v2315
        %v2336 = vmul.f32 %v966, %v2315
        %v2337 = vmul.f32 %v967, %v2315
        %v2338 = vmul.f32 %v968, %v2315
        %v2339 = vmul.f32 %v969, %v2315
        %v2340 = vmul.f32 %v970, %v2315
        %v2341 = vmul.f32 %v971, %v2315
        %v2342 = vmul.f32 %v972, %v2315
        %v2343 = vmul.f32 %v973, %v2315
        %v2344 = vmul.f32 %v974, %v2315
        %v2345 = vmul.f32 %v975, %v2315
        %v2346 = vmul.f32 %v976, %v2315
        %v2347 = vmul.f32 %v977, %v2315
        %v2348 = vsel %vm488, %v2316, 0.0
        %2349 = vadd.xlane.f32.xlu0 %v2348
        %v2350 = vpop.xlane.xlu0 %2349
        %v2351 = vsel %vm488, %v2317, 0.0
        %2352 = vadd.xlane.f32.xlu0 %v2351
        %v2353 = vpop.xlane.xlu0 %2352
        %v2354 = vsel %vm488, %v2318, 0.0
        %2355 = vadd.xlane.f32.xlu0 %v2354
        %v2356 = vpop.xlane.xlu0 %2355
        %v2357 = vsel %vm488, %v2319, 0.0
        %2358 = vadd.xlane.f32.xlu0 %v2357
        %v2359 = vpop.xlane.xlu0 %2358
        %v2360 = vsel %vm488, %v2320, 0.0
        %2361 = vadd.xlane.f32.xlu0 %v2360
        %v2362 = vpop.xlane.xlu0 %2361
        %v2363 = vsel %vm488, %v2321, 0.0
        %2364 = vadd.xlane.f32.xlu0 %v2363
        %v2365 = vpop.xlane.xlu0 %2364
        %v2366 = vsel %vm488, %v2322, 0.0
        %2367 = vadd.xlane.f32.xlu0 %v2366
        %v2368 = vpop.xlane.xlu0 %2367
        %v2369 = vsel %vm488, %v2323, 0.0
        %2370 = vadd.xlane.f32.xlu0 %v2369
        %v2371 = vpop.xlane.xlu0 %2370
        %v2372 = vsel %vm488, %v2324, 0.0
        %2373 = vadd.xlane.f32.xlu0 %v2372
        %v2374 = vpop.xlane.xlu0 %2373
        %v2375 = vsel %vm488, %v2325, 0.0
        %2376 = vadd.xlane.f32.xlu0 %v2375
        %v2377 = vpop.xlane.xlu0 %2376
        %v2378 = vsel %vm488, %v2326, 0.0
        %2379 = vadd.xlane.f32.xlu0 %v2378
        %v2380 = vpop.xlane.xlu0 %2379
        %v2381 = vsel %vm488, %v2327, 0.0
        %2382 = vadd.xlane.f32.xlu0 %v2381
        %v2383 = vpop.xlane.xlu0 %2382
        %v2384 = vsel %vm488, %v2328, 0.0
        %2385 = vadd.xlane.f32.xlu0 %v2384
        %v2386 = vpop.xlane.xlu0 %2385
        %v2387 = vsel %vm488, %v2329, 0.0
        %2388 = vadd.xlane.f32.xlu0 %v2387
        %v2389 = vpop.xlane.xlu0 %2388
        %v2390 = vsel %vm488, %v2330, 0.0
        %2391 = vadd.xlane.f32.xlu0 %v2390
        %v2392 = vpop.xlane.xlu0 %2391
        %v2393 = vsel %vm488, %v2331, 0.0
        %2394 = vadd.xlane.f32.xlu0 %v2393
        %v2395 = vpop.xlane.xlu0 %2394
        %v2396 = vsel %vm488, %v2332, 0.0
        %2397 = vadd.xlane.f32.xlu0 %v2396
        %v2398 = vpop.xlane.xlu0 %2397
        %v2399 = vsel %vm488, %v2333, 0.0
        %2400 = vadd.xlane.f32.xlu0 %v2399
        %v2401 = vpop.xlane.xlu0 %2400
        %v2402 = vsel %vm488, %v2334, 0.0
        %2403 = vadd.xlane.f32.xlu0 %v2402
        %v2404 = vpop.xlane.xlu0 %2403
        %v2405 = vsel %vm488, %v2335, 0.0
        %2406 = vadd.xlane.f32.xlu0 %v2405
        %v2407 = vpop.xlane.xlu0 %2406
        %v2408 = vsel %vm488, %v2336, 0.0
        %2409 = vadd.xlane.f32.xlu0 %v2408
        %v2410 = vpop.xlane.xlu0 %2409
        %v2411 = vsel %vm488, %v2337, 0.0
        %2412 = vadd.xlane.f32.xlu0 %v2411
        %v2413 = vpop.xlane.xlu0 %2412
        %v2414 = vsel %vm488, %v2338, 0.0
        %2415 = vadd.xlane.f32.xlu0 %v2414
        %v2416 = vpop.xlane.xlu0 %2415
        %v2417 = vsel %vm488, %v2339, 0.0
        %2418 = vadd.xlane.f32.xlu0 %v2417
        %v2419 = vpop.xlane.xlu0 %2418
        %v2420 = vsel %vm488, %v2340, 0.0
        %2421 = vadd.xlane.f32.xlu0 %v2420
        %v2422 = vpop.xlane.xlu0 %2421
        %v2423 = vsel %vm488, %v2341, 0.0
        %2424 = vadd.xlane.f32.xlu0 %v2423
        %v2425 = vpop.xlane.xlu0 %2424
        %v2426 = vsel %vm488, %v2342, 0.0
        %2427 = vadd.xlane.f32.xlu0 %v2426
        %v2428 = vpop.xlane.xlu0 %2427
        %v2429 = vsel %vm488, %v2343, 0.0
        %2430 = vadd.xlane.f32.xlu0 %v2429
        %v2431 = vpop.xlane.xlu0 %2430
        %v2432 = vsel %vm488, %v2344, 0.0
        %2433 = vadd.xlane.f32.xlu0 %v2432
        %v2434 = vpop.xlane.xlu0 %2433
        %v2435 = vsel %vm488, %v2345, 0.0
        %2436 = vadd.xlane.f32.xlu0 %v2435
        %v2437 = vpop.xlane.xlu0 %2436
        %v2438 = vsel %vm488, %v2346, 0.0
        %2439 = vadd.xlane.f32.xlu0 %v2438
        %v2440 = vpop.xlane.xlu0 %2439
        %v2441 = vsel %vm488, %v2347, 0.0
        %2442 = vadd.xlane.f32.xlu0 %v2441
        %v2443 = vpop.xlane.xlu0 %2442
        %2444 = vset.pattern.permute.xlu0 1
        %2445 = vperm.xlu0 %2444, %v1837
        %v2446 = vpop.permute.xlu0 %2445
        %v2448 = vmul.f32 %v1391, %v2446
        %v2449 = vmul.f32 %v1398, %v2446
        %v2450 = vmul.f32 %v1405, %v2446
        %v2451 = vmul.f32 %v1412, %v2446
        %v2452 = vmul.f32 %v1419, %v2446
        %v2453 = vmul.f32 %v1426, %v2446
        %v2454 = vmul.f32 %v1433, %v2446
        %v2455 = vmul.f32 %v1440, %v2446
        %v2456 = vmul.f32 %v1447, %v2446
        %v2457 = vmul.f32 %v1454, %v2446
        %v2458 = vmul.f32 %v1461, %v2446
        %v2459 = vmul.f32 %v1468, %v2446
        %v2460 = vmul.f32 %v1475, %v2446
        %v2461 = vmul.f32 %v1482, %v2446
        %v2462 = vmul.f32 %v1489, %v2446
        %v2463 = vmul.f32 %v1496, %v2446
        %v2464 = vmul.f32 %v1503, %v2446
        %v2465 = vmul.f32 %v1510, %v2446
        %v2466 = vmul.f32 %v1517, %v2446
        %v2467 = vmul.f32 %v1524, %v2446
        %v2468 = vmul.f32 %v1531, %v2446
        %v2469 = vmul.f32 %v1538, %v2446
        %v2470 = vmul.f32 %v1545, %v2446
        %v2471 = vmul.f32 %v1552, %v2446
        %v2472 = vmul.f32 %v1559, %v2446
        %v2473 = vmul.f32 %v1566, %v2446
        %v2474 = vmul.f32 %v1573, %v2446
        %v2475 = vmul.f32 %v1580, %v2446
        %v2476 = vmul.f32 %v1587, %v2446
        %v2477 = vmul.f32 %v1594, %v2446
        %v2478 = vmul.f32 %v1601, %v2446
        %v2479 = vmul.f32 %v1608, %v2446
        %v2480 = vadd.f32 %v2350, %v2448
        %v2481 = vadd.f32 %v2353, %v2449
        %v2482 = vadd.f32 %v2356, %v2450
        %v2483 = vadd.f32 %v2359, %v2451
        %v2484 = vadd.f32 %v2362, %v2452
        %v2485 = vadd.f32 %v2365, %v2453
        %v2486 = vadd.f32 %v2368, %v2454
        %v2487 = vadd.f32 %v2371, %v2455
        %v2488 = vadd.f32 %v2374, %v2456
        %v2489 = vadd.f32 %v2377, %v2457
        %v2490 = vadd.f32 %v2380, %v2458
        %v2491 = vadd.f32 %v2383, %v2459
        %v2492 = vadd.f32 %v2386, %v2460
        %v2493 = vadd.f32 %v2389, %v2461
        %v2494 = vadd.f32 %v2392, %v2462
        %v2495 = vadd.f32 %v2395, %v2463
        %v2496 = vadd.f32 %v2398, %v2464
        %v2497 = vadd.f32 %v2401, %v2465
        %v2498 = vadd.f32 %v2404, %v2466
        %v2499 = vadd.f32 %v2407, %v2467
        %v2500 = vadd.f32 %v2410, %v2468
        %v2501 = vadd.f32 %v2413, %v2469
        %v2502 = vadd.f32 %v2416, %v2470
        %v2503 = vadd.f32 %v2419, %v2471
        %v2504 = vadd.f32 %v2422, %v2472
        %v2505 = vadd.f32 %v2425, %v2473
        %v2506 = vadd.f32 %v2428, %v2474
        %v2507 = vadd.f32 %v2431, %v2475
        %v2508 = vadd.f32 %v2434, %v2476
        %v2509 = vadd.f32 %v2437, %v2477
        %v2510 = vadd.f32 %v2440, %v2478
        %v2511 = vadd.f32 %v2443, %v2479
        %2512 = vrot.lane.b32.xlu0 %v1687, 120
        %v2513 = vpop.permute.xlu0 %2512
        %2514 = vrot.lane.b32.xlu0 %v1692, 120
        %v2515 = vpop.permute.xlu0 %2514
        %2516 = vrot.lane.b32.xlu0 %v1687, 88
        %v2517 = vpop.permute.xlu0 %2516
        %2518 = vrot.lane.b32.xlu0 %v1692, 88
        %v2519 = vpop.permute.xlu0 %2518
        %v2520 = vsel %vm1912, %v2513, 0
        %v2522 = vsel %vm1912, %v2515, 0
        %v2524 = vsel %vm1912, %v2517, 0
        %v2526 = vsel %vm1912, %v2519, 0
        %2528 = vmatprep.subr.mxu0 0.0
        %2529 = vmatpush1.xpose.msra.mxu0 %v2524
        %2530 = vmatprep.subr.mxu0 0.0
        %2531 = vmatpush1.xpose.msra.mxu0 %v2526
        %2532 = vmatprep.subr.mxu0 0.0
        %2533 = vmatpush1.xpose.msra.mxu0 0.0
        %2534 = vmatprep.subr.mxu0 0.0
        %2535 = vmatpush1.xpose.msra.mxu0 0.0
        %2536 = vmatprep.subr.mxu0 0.0
        %2537 = vmatpush1.xpose.msra.mxu0 0.0
        %2538 = vmatprep.subr.mxu0 0.0
        %2539 = vmatpush1.xpose.msra.mxu0 0.0
        %2540 = vmatprep.subr.mxu0 0.0
        %2541 = vmatpush1.xpose.msra.mxu0 0.0
        %2542 = vmatprep.subr.mxu0 0.0
        %2543 = vmatpush1.xpose.msra.mxu0 0.0
        %2544 = vmatprep.subr.mxu0 0.0
        %2545 = vmatpush1.xpose.msra.mxu0 0.0
        %2546 = vmatprep.subr.mxu0 0.0
        %2547 = vmatpush1.xpose.msra.mxu0 0.0
        %2548 = vmatprep.subr.mxu0 0.0
        %2549 = vmatpush1.xpose.msra.mxu0 0.0
        %2550 = vmatprep.subr.mxu0 0.0
        %2551 = vmatpush1.xpose.msra.mxu0 0.0
        %2552 = vmatprep.subr.mxu0 0.0
        %2553 = vmatpush1.xpose.msra.mxu0 0.0
        %2554 = vmatprep.subr.mxu0 0.0
        %2555 = vmatpush1.xpose.msra.mxu0 0.0
        %2556 = vmatprep.subr.mxu0 0.0
        %2557 = vmatpush1.xpose.msra.mxu0 0.0
        %2558 = vmatprep.subr.mxu0 0.0
        %2559 = vmatpush1.xpose.msra.mxu0 0.0
        %2560 = vmatprep.subr.mxu0 0.0
        %2561 = vmatpush1.xpose.msra.mxu0 0.0
        %2562 = vmatprep.subr.mxu0 0.0
        %2563 = vmatpush1.xpose.msra.mxu0 0.0
        %2564 = vmatprep.subr.mxu0 0.0
        %2565 = vmatpush1.xpose.msra.mxu0 0.0
        %2566 = vmatprep.subr.mxu0 0.0
        %2567 = vmatpush1.xpose.msra.mxu0 0.0
        %2568 = vmatprep.subr.mxu0 0.0
        %2569 = vmatpush1.xpose.msra.mxu0 0.0
        %2570 = vmatprep.subr.mxu0 0.0
        %2571 = vmatpush1.xpose.msra.mxu0 0.0
        %2572 = vmatprep.subr.mxu0 0.0
        %2573 = vmatpush1.xpose.msra.mxu0 0.0
        %2574 = vmatprep.subr.mxu0 0.0
        %2575 = vmatpush1.xpose.msra.mxu0 0.0
        %2576 = vmatprep.subr.mxu0 0.0
        %2577 = vmatpush1.xpose.msra.mxu0 0.0
        %2578 = vmatprep.subr.mxu0 0.0
        %2579 = vmatpush1.xpose.msra.mxu0 0.0
        %2580 = vmatprep.subr.mxu0 0.0
        %2581 = vmatpush1.xpose.msra.mxu0 0.0
        %2582 = vmatprep.subr.mxu0 0.0
        %2583 = vmatpush1.xpose.msra.mxu0 0.0
        %2584 = vmatprep.subr.mxu0 0.0
        %2585 = vmatpush1.xpose.msra.mxu0 0.0
        %2586 = vmatprep.subr.mxu0 0.0
        %2587 = vmatpush1.xpose.msra.mxu0 0.0
        %2588 = vmatprep.subr.mxu0 0.0
        %2589 = vmatpush1.xpose.msra.mxu0 0.0
        %2590 = vmatprep.subr.mxu0 0.0
        %2591 = vmatpush1.xpose.msra.mxu0 0.0
        %2592 = vmatprep.mubr.f32.mxu0 0.0
        %2593 = vmatmul.mubr.f32.gmra.mrb[0].mxu0 %v2520
        %v2594 = vpop.f32.mrb[0].mxu0
        %v2595 = vadd.f32 0.0, %v2594
        %v2596 = vpop.f32.mrb[0].mxu0
        %2597 = vmatprep.mubr.f32.mxu0 0.0
        %2598 = vmatmul.mubr.f32.gmra.mrb[0].mxu0 %v2522
        %v2599 = vpop.f32.mrb[0].mxu0
        %v2600 = vadd.f32 0.0, %v2599
        %v2601 = vpop.f32.mrb[0].mxu0
        %2602 = vdwg.mxu0
        %v2603 = vmul.f32 %v2595, 0.35355338
        %v2604 = vmul.f32 %v2600, 0.35355338
        %v2637 = vlaneseq
        %v2638 = vshrl.u32 %v2637, 7
        %v2639 = vsub.s32 %v2031, %v2638
        %v2640 = vrot.slane %v2480, %v2639
        %v2641 = vlaneseq
        %v2642 = vshrl.u32 %v2641, 7
        %v2643 = vsub.s32 %v2036, %v2642
        %v2644 = vrot.slane %v2481, %v2643
        %v2645 = vsel %vm2041, %v2644, %v2640
        %v2646 = vlaneseq
        %v2647 = vshrl.u32 %v2646, 7
        %v2648 = vsub.s32 %v2031, %v2647
        %v2649 = vrot.slane %v2482, %v2648
        %v2650 = vlaneseq
        %v2651 = vshrl.u32 %v2650, 7
        %v2652 = vsub.s32 %v2036, %v2651
        %v2653 = vrot.slane %v2483, %v2652
        %v2654 = vsel %vm2041, %v2653, %v2649
        %v2655 = vlaneseq
        %v2656 = vshrl.u32 %v2655, 7
        %v2657 = vsub.s32 %v2031, %v2656
        %v2658 = vrot.slane %v2484, %v2657
        %v2659 = vlaneseq
        %v2660 = vshrl.u32 %v2659, 7
        %v2661 = vsub.s32 %v2036, %v2660
        %v2662 = vrot.slane %v2485, %v2661
        %v2663 = vsel %vm2041, %v2662, %v2658
        %v2664 = vlaneseq
        %v2665 = vshrl.u32 %v2664, 7
        %v2666 = vsub.s32 %v2031, %v2665
        %v2667 = vrot.slane %v2486, %v2666
        %v2668 = vlaneseq
        %v2669 = vshrl.u32 %v2668, 7
        %v2670 = vsub.s32 %v2036, %v2669
        %v2671 = vrot.slane %v2487, %v2670
        %v2672 = vsel %vm2041, %v2671, %v2667
        %v2673 = vlaneseq
        %v2674 = vshrl.u32 %v2673, 7
        %v2675 = vsub.s32 %v2031, %v2674
        %v2676 = vrot.slane %v2488, %v2675
        %v2677 = vlaneseq
        %v2678 = vshrl.u32 %v2677, 7
        %v2679 = vsub.s32 %v2036, %v2678
        %v2680 = vrot.slane %v2489, %v2679
        %v2681 = vsel %vm2041, %v2680, %v2676
        %v2682 = vlaneseq
        %v2683 = vshrl.u32 %v2682, 7
        %v2684 = vsub.s32 %v2031, %v2683
        %v2685 = vrot.slane %v2490, %v2684
        %v2686 = vlaneseq
        %v2687 = vshrl.u32 %v2686, 7
        %v2688 = vsub.s32 %v2036, %v2687
        %v2689 = vrot.slane %v2491, %v2688
        %v2690 = vsel %vm2041, %v2689, %v2685
        %v2691 = vlaneseq
        %v2692 = vshrl.u32 %v2691, 7
        %v2693 = vsub.s32 %v2031, %v2692
        %v2694 = vrot.slane %v2492, %v2693
        %v2695 = vlaneseq
        %v2696 = vshrl.u32 %v2695, 7
        %v2697 = vsub.s32 %v2036, %v2696
        %v2698 = vrot.slane %v2493, %v2697
        %v2699 = vsel %vm2041, %v2698, %v2694
        %v2700 = vlaneseq
        %v2701 = vshrl.u32 %v2700, 7
        %v2702 = vsub.s32 %v2031, %v2701
        %v2703 = vrot.slane %v2494, %v2702
        %v2704 = vlaneseq
        %v2705 = vshrl.u32 %v2704, 7
        %v2706 = vsub.s32 %v2036, %v2705
        %v2707 = vrot.slane %v2495, %v2706
        %v2708 = vsel %vm2041, %v2707, %v2703
        %v2709 = vlaneseq
        %v2710 = vshrl.u32 %v2709, 7
        %v2711 = vsub.s32 %v2031, %v2710
        %v2712 = vrot.slane %v2496, %v2711
        %v2713 = vlaneseq
        %v2714 = vshrl.u32 %v2713, 7
        %v2715 = vsub.s32 %v2036, %v2714
        %v2716 = vrot.slane %v2497, %v2715
        %v2717 = vsel %vm2041, %v2716, %v2712
        %v2718 = vlaneseq
        %v2719 = vshrl.u32 %v2718, 7
        %v2720 = vsub.s32 %v2031, %v2719
        %v2721 = vrot.slane %v2498, %v2720
        %v2722 = vlaneseq
        %v2723 = vshrl.u32 %v2722, 7
        %v2724 = vsub.s32 %v2036, %v2723
        %v2725 = vrot.slane %v2499, %v2724
        %v2726 = vsel %vm2041, %v2725, %v2721
        %v2727 = vlaneseq
        %v2728 = vshrl.u32 %v2727, 7
        %v2729 = vsub.s32 %v2031, %v2728
        %v2730 = vrot.slane %v2500, %v2729
        %v2731 = vlaneseq
        %v2732 = vshrl.u32 %v2731, 7
        %v2733 = vsub.s32 %v2036, %v2732
        %v2734 = vrot.slane %v2501, %v2733
        %v2735 = vsel %vm2041, %v2734, %v2730
        %v2736 = vlaneseq
        %v2737 = vshrl.u32 %v2736, 7
        %v2738 = vsub.s32 %v2031, %v2737
        %v2739 = vrot.slane %v2502, %v2738
        %v2740 = vlaneseq
        %v2741 = vshrl.u32 %v2740, 7
        %v2742 = vsub.s32 %v2036, %v2741
        %v2743 = vrot.slane %v2503, %v2742
        %v2744 = vsel %vm2041, %v2743, %v2739
        %v2745 = vlaneseq
        %v2746 = vshrl.u32 %v2745, 7
        %v2747 = vsub.s32 %v2031, %v2746
        %v2748 = vrot.slane %v2504, %v2747
        %v2749 = vlaneseq
        %v2750 = vshrl.u32 %v2749, 7
        %v2751 = vsub.s32 %v2036, %v2750
        %v2752 = vrot.slane %v2505, %v2751
        %v2753 = vsel %vm2041, %v2752, %v2748
        %v2754 = vlaneseq
        %v2755 = vshrl.u32 %v2754, 7
        %v2756 = vsub.s32 %v2031, %v2755
        %v2757 = vrot.slane %v2506, %v2756
        %v2758 = vlaneseq
        %v2759 = vshrl.u32 %v2758, 7
        %v2760 = vsub.s32 %v2036, %v2759
        %v2761 = vrot.slane %v2507, %v2760
        %v2762 = vsel %vm2041, %v2761, %v2757
        %v2763 = vlaneseq
        %v2764 = vshrl.u32 %v2763, 7
        %v2765 = vsub.s32 %v2031, %v2764
        %v2766 = vrot.slane %v2508, %v2765
        %v2767 = vlaneseq
        %v2768 = vshrl.u32 %v2767, 7
        %v2769 = vsub.s32 %v2036, %v2768
        %v2770 = vrot.slane %v2509, %v2769
        %v2771 = vsel %vm2041, %v2770, %v2766
        %v2772 = vlaneseq
        %v2773 = vshrl.u32 %v2772, 7
        %v2774 = vsub.s32 %v2031, %v2773
        %v2775 = vrot.slane %v2510, %v2774
        %v2776 = vlaneseq
        %v2777 = vshrl.u32 %v2776, 7
        %v2778 = vsub.s32 %v2036, %v2777
        %v2779 = vrot.slane %v2511, %v2778
        %v2780 = vsel %vm2041, %v2779, %v2775
        %v2781 = vsel %vm2178, %v2654, %v2645
        %v2782 = vsel %vm2180, %v2663, %v2781
        %v2783 = vsel %vm2182, %v2672, %v2782
        %v2784 = vsel %vm2184, %v2681, %v2783
        %v2785 = vsel %vm2186, %v2690, %v2784
        %v2786 = vsel %vm2188, %v2699, %v2785
        %v2787 = vsel %vm2190, %v2708, %v2786
        %v2788 = vsel %vm2178, %v2726, %v2717
        %v2789 = vsel %vm2180, %v2735, %v2788
        %v2790 = vsel %vm2182, %v2744, %v2789
        %v2791 = vsel %vm2184, %v2753, %v2790
        %v2792 = vsel %vm2186, %v2762, %v2791
        %v2793 = vsel %vm2188, %v2771, %v2792
        %v2794 = vsel %vm2190, %v2780, %v2793
        %v2797 = vadd.f32 %v2603, %v2787
        %v2798 = vadd.f32 %v2604, %v2794
        %v2799 = vsel %vm488, %v2797, -inf
        %2800 = vmax.xlane.f32.xlu0 %v2799
        %v2801 = vpop.xlane.xlu0 %2800
        %v2802 = vsel %vm488, %v2798, -inf
        %2803 = vmax.xlane.f32.xlu0 %v2802
        %v2804 = vpop.xlane.xlu0 %2803
        %v2805 = vsub.f32 %v2797, %v2801
        %v2806 = vsub.f32 %v2798, %v2804
        %v2807 = vmul.f32 %v2805, 1.442695
        %v2808 = vpow.pop %v2807
        %v2809 = vmul.f32 %v2806, 1.442695
        %v2810 = vpow.pop %v2809
        %v2811 = vsel %vm488, %v2808, 0.0
        %2812 = vadd.xlane.f32.xlu0 %v2811
        %v2813 = vpop.xlane.xlu0 %2812
        %v2814 = vsel %vm488, %v2810, 0.0
        %2815 = vadd.xlane.f32.xlu0 %v2814
        %v2816 = vpop.xlane.xlu0 %2815
        %v2817 = vrcp.pop %v2813
        %v2818 = vmul.f32 %v2808, %v2817
        %v2819 = vrcp.pop %v2816
        %v2820 = vmul.f32 %v2810, %v2819
        %2821 = vrot.lane.b32.xlu0 %v1687, 56
        %v2822 = vpop.permute.xlu0 %2821
        %2823 = vrot.lane.b32.xlu0 %v1692, 56
        %v2824 = vpop.permute.xlu0 %2823
        %v2828 = vsel %vm488, %v2818, 0
        %v2831 = vsel %vm488, %v2820, 0
        %2833 = vmatprep.subr.mxu0 0.0
        %2834 = vmatpush1.msra.mxu0 %v2822
        %2835 = vmatprep.subr.mxu0 0.0
        %2836 = vmatpush1.msra.mxu0 %v2824
        %2837 = vmatprep.subr.mxu0 0.0
        %2838 = vmatpush1.msra.mxu0 0.0
        %2839 = vmatprep.subr.mxu0 0.0
        %2840 = vmatpush1.msra.mxu0 0.0
        %2841 = vmatprep.subr.mxu0 0.0
        %2842 = vmatpush1.msra.mxu0 0.0
        %2843 = vmatprep.subr.mxu0 0.0
        %2844 = vmatpush1.msra.mxu0 0.0
        %2845 = vmatprep.subr.mxu0 0.0
        %2846 = vmatpush1.msra.mxu0 0.0
        %2847 = vmatprep.subr.mxu0 0.0
        %2848 = vmatpush1.msra.mxu0 0.0
        %2849 = vmatprep.subr.mxu0 0.0
        %2850 = vmatpush1.msra.mxu0 0.0
        %2851 = vmatprep.subr.mxu0 0.0
        %2852 = vmatpush1.msra.mxu0 0.0
        %2853 = vmatprep.subr.mxu0 0.0
        %2854 = vmatpush1.msra.mxu0 0.0
        %2855 = vmatprep.subr.mxu0 0.0
        %2856 = vmatpush1.msra.mxu0 0.0
        %2857 = vmatprep.subr.mxu0 0.0
        %2858 = vmatpush1.msra.mxu0 0.0
        %2859 = vmatprep.subr.mxu0 0.0
        %2860 = vmatpush1.msra.mxu0 0.0
        %2861 = vmatprep.subr.mxu0 0.0
        %2862 = vmatpush1.msra.mxu0 0.0
        %2863 = vmatprep.subr.mxu0 0.0
        %2864 = vmatpush1.msra.mxu0 0.0
        %2865 = vmatprep.subr.mxu0 0.0
        %2866 = vmatpush1.msra.mxu0 0.0
        %2867 = vmatprep.subr.mxu0 0.0
        %2868 = vmatpush1.msra.mxu0 0.0
        %2869 = vmatprep.subr.mxu0 0.0
        %2870 = vmatpush1.msra.mxu0 0.0
        %2871 = vmatprep.subr.mxu0 0.0
        %2872 = vmatpush1.msra.mxu0 0.0
        %2873 = vmatprep.subr.mxu0 0.0
        %2874 = vmatpush1.msra.mxu0 0.0
        %2875 = vmatprep.subr.mxu0 0.0
        %2876 = vmatpush1.msra.mxu0 0.0
        %2877 = vmatprep.subr.mxu0 0.0
        %2878 = vmatpush1.msra.mxu0 0.0
        %2879 = vmatprep.subr.mxu0 0.0
        %2880 = vmatpush1.msra.mxu0 0.0
        %2881 = vmatprep.subr.mxu0 0.0
        %2882 = vmatpush1.msra.mxu0 0.0
        %2883 = vmatprep.subr.mxu0 0.0
        %2884 = vmatpush1.msra.mxu0 0.0
        %2885 = vmatprep.subr.mxu0 0.0
        %2886 = vmatpush1.msra.mxu0 0.0
        %2887 = vmatprep.subr.mxu0 0.0
        %2888 = vmatpush1.msra.mxu0 0.0
        %2889 = vmatprep.subr.mxu0 0.0
        %2890 = vmatpush1.msra.mxu0 0.0
        %2891 = vmatprep.subr.mxu0 0.0
        %2892 = vmatpush1.msra.mxu0 0.0
        %2893 = vmatprep.subr.mxu0 0.0
        %2894 = vmatpush1.msra.mxu0 0.0
        %2895 = vmatprep.subr.mxu0 0.0
        %2896 = vmatpush1.msra.mxu0 0.0
        %2897 = vmatprep.mubr.f32.mxu0 0.0
        %2898 = vmatmul.mubr.f32.gmra.mrb[0].mxu0 %v2828
        %v2899 = vpop.f32.mrb[0].mxu0
        %v2900 = vadd.f32 0.0, %v2899
        %v2901 = vpop.f32.mrb[0].mxu0
        %2902 = vmatprep.mubr.f32.mxu0 0.0
        %2903 = vmatmul.mubr.f32.gmra.mrb[0].mxu0 %v2831
        %v2904 = vpop.f32.mrb[0].mxu0
        %v2905 = vadd.f32 0.0, %v2904
        %v2906 = vpop.f32.mrb[0].mxu0
        %2907 = vdwg.mxu0
        %v2909 = vsel %vm1912, %v2900, 0
        %v2912 = vsel %vm1912, %v2905, 0
        %2914 = vmatprep.subr.mxu0 0.0
        %2915 = vmatpush1.msra.mxu0 %v1696
        %2916 = vmatprep.subr.mxu0 0.0
        %2917 = vmatpush1.msra.mxu0 0.0
        %2918 = vmatprep.subr.mxu0 0.0
        %2919 = vmatpush1.msra.mxu0 0.0
        %2920 = vmatprep.subr.mxu0 0.0
        %2921 = vmatpush1.msra.mxu0 0.0
        %2922 = vmatprep.subr.mxu0 0.0
        %2923 = vmatpush1.msra.mxu0 0.0
        %2924 = vmatprep.subr.mxu0 0.0
        %2925 = vmatpush1.msra.mxu0 0.0
        %2926 = vmatprep.subr.mxu0 0.0
        %2927 = vmatpush1.msra.mxu0 0.0
        %2928 = vmatprep.subr.mxu0 0.0
        %2929 = vmatpush1.msra.mxu0 0.0
        %2930 = vmatprep.subr.mxu0 0.0
        %2931 = vmatpush1.msra.mxu0 0.0
        %2932 = vmatprep.subr.mxu0 0.0
        %2933 = vmatpush1.msra.mxu0 0.0
        %2934 = vmatprep.subr.mxu0 0.0
        %2935 = vmatpush1.msra.mxu0 0.0
        %2936 = vmatprep.subr.mxu0 0.0
        %2937 = vmatpush1.msra.mxu0 0.0
        %2938 = vmatprep.subr.mxu0 0.0
        %2939 = vmatpush1.msra.mxu0 0.0
        %2940 = vmatprep.subr.mxu0 0.0
        %2941 = vmatpush1.msra.mxu0 0.0
        %2942 = vmatprep.subr.mxu0 0.0
        %2943 = vmatpush1.msra.mxu0 0.0
        %2944 = vmatprep.subr.mxu0 0.0
        %2945 = vmatpush1.msra.mxu0 0.0
        %2946 = vmatprep.subr.mxu0 0.0
        %2947 = vmatpush1.msra.mxu0 0.0
        %2948 = vmatprep.subr.mxu0 0.0
        %2949 = vmatpush1.msra.mxu0 0.0
        %2950 = vmatprep.subr.mxu0 0.0
        %2951 = vmatpush1.msra.mxu0 0.0
        %2952 = vmatprep.subr.mxu0 0.0
        %2953 = vmatpush1.msra.mxu0 0.0
        %2954 = vmatprep.subr.mxu0 0.0
        %2955 = vmatpush1.msra.mxu0 0.0
        %2956 = vmatprep.subr.mxu0 0.0
        %2957 = vmatpush1.msra.mxu0 0.0
        %2958 = vmatprep.subr.mxu0 0.0
        %2959 = vmatpush1.msra.mxu0 0.0
        %2960 = vmatprep.subr.mxu0 0.0
        %2961 = vmatpush1.msra.mxu0 0.0
        %2962 = vmatprep.subr.mxu0 0.0
        %2963 = vmatpush1.msra.mxu0 0.0
        %2964 = vmatprep.subr.mxu0 0.0
        %2965 = vmatpush1.msra.mxu0 0.0
        %2966 = vmatprep.subr.mxu0 0.0
        %2967 = vmatpush1.msra.mxu0 0.0
        %2968 = vmatprep.subr.mxu0 0.0
        %2969 = vmatpush1.msra.mxu0 0.0
        %2970 = vmatprep.subr.mxu0 0.0
        %2971 = vmatpush1.msra.mxu0 0.0
        %2972 = vmatprep.subr.mxu0 0.0
        %2973 = vmatpush1.msra.mxu0 0.0
        %2974 = vmatprep.subr.mxu0 0.0
        %2975 = vmatpush1.msra.mxu0 0.0
        %2976 = vmatprep.subr.mxu0 0.0
        %2977 = vmatpush1.msra.mxu0 0.0
        %2978 = vmatprep.mubr.f32.mxu0 0.0
        %2979 = vmatmul.mubr.f32.gmra.mrb[0].mxu0 %v2909
        %v2980 = vpop.f32.mrb[0].mxu0
        %v2981 = vadd.f32 0.0, %v2980
        %v2982 = vpop.f32.mrb[0].mxu0
        %2983 = vmatprep.mubr.f32.mxu0 0.0
        %2984 = vmatmul.mubr.f32.gmra.mrb[0].mxu0 %v2912
        %v2985 = vpop.f32.mrb[0].mxu0
        %v2986 = vadd.f32 0.0, %v2985
        %v2987 = vpop.f32.mrb[0].mxu0
        %2988 = vdwg.mxu0
        %v2990 = vsel %vm1912, %v2304, 0
        %v2993 = vsel %vm1912, %v2309, 0
        %2995 = vmatprep.subr.mxu0 0.0
        %2996 = vmatpush1.msra.mxu0 %v1695
        %2997 = vmatprep.subr.mxu0 0.0
        %2998 = vmatpush1.msra.mxu0 0.0
        %2999 = vmatprep.subr.mxu0 0.0
        %3000 = vmatpush1.msra.mxu0 0.0
        %3001 = vmatprep.subr.mxu0 0.0
        %3002 = vmatpush1.msra.mxu0 0.0
        %3003 = vmatprep.subr.mxu0 0.0
        %3004 = vmatpush1.msra.mxu0 0.0
        %3005 = vmatprep.subr.mxu0 0.0
        %3006 = vmatpush1.msra.mxu0 0.0
        %3007 = vmatprep.subr.mxu0 0.0
        %3008 = vmatpush1.msra.mxu0 0.0
        %3009 = vmatprep.subr.mxu0 0.0
        %3010 = vmatpush1.msra.mxu0 0.0
        %3011 = vmatprep.subr.mxu0 0.0
        %3012 = vmatpush1.msra.mxu0 0.0
        %3013 = vmatprep.subr.mxu0 0.0
        %3014 = vmatpush1.msra.mxu0 0.0
        %3015 = vmatprep.subr.mxu0 0.0
        %3016 = vmatpush1.msra.mxu0 0.0
        %3017 = vmatprep.subr.mxu0 0.0
        %3018 = vmatpush1.msra.mxu0 0.0
        %3019 = vmatprep.subr.mxu0 0.0
        %3020 = vmatpush1.msra.mxu0 0.0
        %3021 = vmatprep.subr.mxu0 0.0
        %3022 = vmatpush1.msra.mxu0 0.0
        %3023 = vmatprep.subr.mxu0 0.0
        %3024 = vmatpush1.msra.mxu0 0.0
        %3025 = vmatprep.subr.mxu0 0.0
        %3026 = vmatpush1.msra.mxu0 0.0
        %3027 = vmatprep.subr.mxu0 0.0
        %3028 = vmatpush1.msra.mxu0 0.0
        %3029 = vmatprep.subr.mxu0 0.0
        %3030 = vmatpush1.msra.mxu0 0.0
        %3031 = vmatprep.subr.mxu0 0.0
        %3032 = vmatpush1.msra.mxu0 0.0
        %3033 = vmatprep.subr.mxu0 0.0
        %3034 = vmatpush1.msra.mxu0 0.0
        %3035 = vmatprep.subr.mxu0 0.0
        %3036 = vmatpush1.msra.mxu0 0.0
        %3037 = vmatprep.subr.mxu0 0.0
        %3038 = vmatpush1.msra.mxu0 0.0
        %3039 = vmatprep.subr.mxu0 0.0
        %3040 = vmatpush1.msra.mxu0 0.0
        %3041 = vmatprep.subr.mxu0 0.0
        %3042 = vmatpush1.msra.mxu0 0.0
        %3043 = vmatprep.subr.mxu0 0.0
        %3044 = vmatpush1.msra.mxu0 0.0
        %3045 = vmatprep.subr.mxu0 0.0
        %3046 = vmatpush1.msra.mxu0 0.0
        %3047 = vmatprep.subr.mxu0 0.0
        %3048 = vmatpush1.msra.mxu0 0.0
        %3049 = vmatprep.subr.mxu0 0.0
        %3050 = vmatpush1.msra.mxu0 0.0
        %3051 = vmatprep.subr.mxu0 0.0
        %3052 = vmatpush1.msra.mxu0 0.0
        %3053 = vmatprep.subr.mxu0 0.0
        %3054 = vmatpush1.msra.mxu0 0.0
        %3055 = vmatprep.subr.mxu0 0.0
        %3056 = vmatpush1.msra.mxu0 0.0
        %3057 = vmatprep.subr.mxu0 0.0
        %3058 = vmatpush1.msra.mxu0 0.0
        %3059 = vmatprep.mubr.f32.mxu0 0.0
        %3060 = vmatmul.mubr.f32.gmra.mrb[0].mxu0 %v2990
        %v3061 = vpop.f32.mrb[0].mxu0
        %v3062 = vadd.f32 %v2981, %v3061
        %v3063 = vpop.f32.mrb[0].mxu0
        %3064 = vmatprep.mubr.f32.mxu0 0.0
        %3065 = vmatmul.mubr.f32.gmra.mrb[0].mxu0 %v2993
        %v3066 = vpop.f32.mrb[0].mxu0
        %v3067 = vadd.f32 %v2986, %v3066
        %v3068 = vpop.f32.mrb[0].mxu0
        %3069 = vdwg.mxu0
        %v3070 = vlaneseq
        %v3071 = vshrl.u32 %v3070, 7
        %v3072 = vsub.s32 2, %v3071
        %v3073 = vrot.slane %v1699, %v3072
        %v3074 = vmul.f32 %v946, %v3073
        %v3075 = vmul.f32 %v947, %v3073
        %v3076 = vmul.f32 %v948, %v3073
        %v3077 = vmul.f32 %v949, %v3073
        %v3078 = vmul.f32 %v950, %v3073
        %v3079 = vmul.f32 %v951, %v3073
        %v3080 = vmul.f32 %v952, %v3073
        %v3081 = vmul.f32 %v953, %v3073
        %v3082 = vmul.f32 %v954, %v3073
        %v3083 = vmul.f32 %v955, %v3073
        %v3084 = vmul.f32 %v956, %v3073
        %v3085 = vmul.f32 %v957, %v3073
        %v3086 = vmul.f32 %v958, %v3073
        %v3087 = vmul.f32 %v959, %v3073
        %v3088 = vmul.f32 %v960, %v3073
        %v3089 = vmul.f32 %v961, %v3073
        %v3090 = vmul.f32 %v962, %v3073
        %v3091 = vmul.f32 %v963, %v3073
        %v3092 = vmul.f32 %v964, %v3073
        %v3093 = vmul.f32 %v965, %v3073
        %v3094 = vmul.f32 %v966, %v3073
        %v3095 = vmul.f32 %v967, %v3073
        %v3096 = vmul.f32 %v968, %v3073
        %v3097 = vmul.f32 %v969, %v3073
        %v3098 = vmul.f32 %v970, %v3073
        %v3099 = vmul.f32 %v971, %v3073
        %v3100 = vmul.f32 %v972, %v3073
        %v3101 = vmul.f32 %v973, %v3073
        %v3102 = vmul.f32 %v974, %v3073
        %v3103 = vmul.f32 %v975, %v3073
        %v3104 = vmul.f32 %v976, %v3073
        %v3105 = vmul.f32 %v977, %v3073
        %v3106 = vsel %vm488, %v3074, 0.0
        %3107 = vadd.xlane.f32.xlu0 %v3106
        %v3108 = vpop.xlane.xlu0 %3107
        %v3109 = vsel %vm488, %v3075, 0.0
        %3110 = vadd.xlane.f32.xlu0 %v3109
        %v3111 = vpop.xlane.xlu0 %3110
        %v3112 = vsel %vm488, %v3076, 0.0
        %3113 = vadd.xlane.f32.xlu0 %v3112
        %v3114 = vpop.xlane.xlu0 %3113
        %v3115 = vsel %vm488, %v3077, 0.0
        %3116 = vadd.xlane.f32.xlu0 %v3115
        %v3117 = vpop.xlane.xlu0 %3116
        %v3118 = vsel %vm488, %v3078, 0.0
        %3119 = vadd.xlane.f32.xlu0 %v3118
        %v3120 = vpop.xlane.xlu0 %3119
        %v3121 = vsel %vm488, %v3079, 0.0
        %3122 = vadd.xlane.f32.xlu0 %v3121
        %v3123 = vpop.xlane.xlu0 %3122
        %v3124 = vsel %vm488, %v3080, 0.0
        %3125 = vadd.xlane.f32.xlu0 %v3124
        %v3126 = vpop.xlane.xlu0 %3125
        %v3127 = vsel %vm488, %v3081, 0.0
        %3128 = vadd.xlane.f32.xlu0 %v3127
        %v3129 = vpop.xlane.xlu0 %3128
        %v3130 = vsel %vm488, %v3082, 0.0
        %3131 = vadd.xlane.f32.xlu0 %v3130
        %v3132 = vpop.xlane.xlu0 %3131
        %v3133 = vsel %vm488, %v3083, 0.0
        %3134 = vadd.xlane.f32.xlu0 %v3133
        %v3135 = vpop.xlane.xlu0 %3134
        %v3136 = vsel %vm488, %v3084, 0.0
        %3137 = vadd.xlane.f32.xlu0 %v3136
        %v3138 = vpop.xlane.xlu0 %3137
        %v3139 = vsel %vm488, %v3085, 0.0
        %3140 = vadd.xlane.f32.xlu0 %v3139
        %v3141 = vpop.xlane.xlu0 %3140
        %v3142 = vsel %vm488, %v3086, 0.0
        %3143 = vadd.xlane.f32.xlu0 %v3142
        %v3144 = vpop.xlane.xlu0 %3143
        %v3145 = vsel %vm488, %v3087, 0.0
        %3146 = vadd.xlane.f32.xlu0 %v3145
        %v3147 = vpop.xlane.xlu0 %3146
        %v3148 = vsel %vm488, %v3088, 0.0
        %3149 = vadd.xlane.f32.xlu0 %v3148
        %v3150 = vpop.xlane.xlu0 %3149
        %v3151 = vsel %vm488, %v3089, 0.0
        %3152 = vadd.xlane.f32.xlu0 %v3151
        %v3153 = vpop.xlane.xlu0 %3152
        %v3154 = vsel %vm488, %v3090, 0.0
        %3155 = vadd.xlane.f32.xlu0 %v3154
        %v3156 = vpop.xlane.xlu0 %3155
        %v3157 = vsel %vm488, %v3091, 0.0
        %3158 = vadd.xlane.f32.xlu0 %v3157
        %v3159 = vpop.xlane.xlu0 %3158
        %v3160 = vsel %vm488, %v3092, 0.0
        %3161 = vadd.xlane.f32.xlu0 %v3160
        %v3162 = vpop.xlane.xlu0 %3161
        %v3163 = vsel %vm488, %v3093, 0.0
        %3164 = vadd.xlane.f32.xlu0 %v3163
        %v3165 = vpop.xlane.xlu0 %3164
        %v3166 = vsel %vm488, %v3094, 0.0
        %3167 = vadd.xlane.f32.xlu0 %v3166
        %v3168 = vpop.xlane.xlu0 %3167
        %v3169 = vsel %vm488, %v3095, 0.0
        %3170 = vadd.xlane.f32.xlu0 %v3169
        %v3171 = vpop.xlane.xlu0 %3170
        %v3172 = vsel %vm488, %v3096, 0.0
        %3173 = vadd.xlane.f32.xlu0 %v3172
        %v3174 = vpop.xlane.xlu0 %3173
        %v3175 = vsel %vm488, %v3097, 0.0
        %3176 = vadd.xlane.f32.xlu0 %v3175
        %v3177 = vpop.xlane.xlu0 %3176
        %v3178 = vsel %vm488, %v3098, 0.0
        %3179 = vadd.xlane.f32.xlu0 %v3178
        %v3180 = vpop.xlane.xlu0 %3179
        %v3181 = vsel %vm488, %v3099, 0.0
        %3182 = vadd.xlane.f32.xlu0 %v3181
        %v3183 = vpop.xlane.xlu0 %3182
        %v3184 = vsel %vm488, %v3100, 0.0
        %3185 = vadd.xlane.f32.xlu0 %v3184
        %v3186 = vpop.xlane.xlu0 %3185
        %v3187 = vsel %vm488, %v3101, 0.0
        %3188 = vadd.xlane.f32.xlu0 %v3187
        %v3189 = vpop.xlane.xlu0 %3188
        %v3190 = vsel %vm488, %v3102, 0.0
        %3191 = vadd.xlane.f32.xlu0 %v3190
        %v3192 = vpop.xlane.xlu0 %3191
        %v3193 = vsel %vm488, %v3103, 0.0
        %3194 = vadd.xlane.f32.xlu0 %v3193
        %v3195 = vpop.xlane.xlu0 %3194
        %v3196 = vsel %vm488, %v3104, 0.0
        %3197 = vadd.xlane.f32.xlu0 %v3196
        %v3198 = vpop.xlane.xlu0 %3197
        %v3199 = vsel %vm488, %v3105, 0.0
        %3200 = vadd.xlane.f32.xlu0 %v3199
        %v3201 = vpop.xlane.xlu0 %3200
        %3202 = vset.pattern.permute.xlu0 2
        %3203 = vperm.xlu0 %3202, %v1837
        %v3204 = vpop.permute.xlu0 %3203
        %v3206 = vmul.f32 %v1391, %v3204
        %v3207 = vmul.f32 %v1398, %v3204
        %v3208 = vmul.f32 %v1405, %v3204
        %v3209 = vmul.f32 %v1412, %v3204
        %v3210 = vmul.f32 %v1419, %v3204
        %v3211 = vmul.f32 %v1426, %v3204
        %v3212 = vmul.f32 %v1433, %v3204
        %v3213 = vmul.f32 %v1440, %v3204
        %v3214 = vmul.f32 %v1447, %v3204
        %v3215 = vmul.f32 %v1454, %v3204
        %v3216 = vmul.f32 %v1461, %v3204
        %v3217 = vmul.f32 %v1468, %v3204
        %v3218 = vmul.f32 %v1475, %v3204
        %v3219 = vmul.f32 %v1482, %v3204
        %v3220 = vmul.f32 %v1489, %v3204
        %v3221 = vmul.f32 %v1496, %v3204
        %v3222 = vmul.f32 %v1503, %v3204
        %v3223 = vmul.f32 %v1510, %v3204
        %v3224 = vmul.f32 %v1517, %v3204
        %v3225 = vmul.f32 %v1524, %v3204
        %v3226 = vmul.f32 %v1531, %v3204
        %v3227 = vmul.f32 %v1538, %v3204
        %v3228 = vmul.f32 %v1545, %v3204
        %v3229 = vmul.f32 %v1552, %v3204
        %v3230 = vmul.f32 %v1559, %v3204
        %v3231 = vmul.f32 %v1566, %v3204
        %v3232 = vmul.f32 %v1573, %v3204
        %v3233 = vmul.f32 %v1580, %v3204
        %v3234 = vmul.f32 %v1587, %v3204
        %v3235 = vmul.f32 %v1594, %v3204
        %v3236 = vmul.f32 %v1601, %v3204
        %v3237 = vmul.f32 %v1608, %v3204
        %v3238 = vadd.f32 %v3108, %v3206
        %v3239 = vadd.f32 %v3111, %v3207
        %v3240 = vadd.f32 %v3114, %v3208
        %v3241 = vadd.f32 %v3117, %v3209
        %v3242 = vadd.f32 %v3120, %v3210
        %v3243 = vadd.f32 %v3123, %v3211
        %v3244 = vadd.f32 %v3126, %v3212
        %v3245 = vadd.f32 %v3129, %v3213
        %v3246 = vadd.f32 %v3132, %v3214
        %v3247 = vadd.f32 %v3135, %v3215
        %v3248 = vadd.f32 %v3138, %v3216
        %v3249 = vadd.f32 %v3141, %v3217
        %v3250 = vadd.f32 %v3144, %v3218
        %v3251 = vadd.f32 %v3147, %v3219
        %v3252 = vadd.f32 %v3150, %v3220
        %v3253 = vadd.f32 %v3153, %v3221
        %v3254 = vadd.f32 %v3156, %v3222
        %v3255 = vadd.f32 %v3159, %v3223
        %v3256 = vadd.f32 %v3162, %v3224
        %v3257 = vadd.f32 %v3165, %v3225
        %v3258 = vadd.f32 %v3168, %v3226
        %v3259 = vadd.f32 %v3171, %v3227
        %v3260 = vadd.f32 %v3174, %v3228
        %v3261 = vadd.f32 %v3177, %v3229
        %v3262 = vadd.f32 %v3180, %v3230
        %v3263 = vadd.f32 %v3183, %v3231
        %v3264 = vadd.f32 %v3186, %v3232
        %v3265 = vadd.f32 %v3189, %v3233
        %v3266 = vadd.f32 %v3192, %v3234
        %v3267 = vadd.f32 %v3195, %v3235
        %v3268 = vadd.f32 %v3198, %v3236
        %v3269 = vadd.f32 %v3201, %v3237
        %3270 = vrot.lane.b32.xlu0 %v1687, 112
        %v3271 = vpop.permute.xlu0 %3270
        %3272 = vrot.lane.b32.xlu0 %v1692, 112
        %v3273 = vpop.permute.xlu0 %3272
        %3274 = vrot.lane.b32.xlu0 %v1687, 80
        %v3275 = vpop.permute.xlu0 %3274
        %3276 = vrot.lane.b32.xlu0 %v1692, 80
        %v3277 = vpop.permute.xlu0 %3276
        %v3278 = vsel %vm1912, %v3271, 0
        %v3280 = vsel %vm1912, %v3273, 0
        %v3282 = vsel %vm1912, %v3275, 0
        %v3284 = vsel %vm1912, %v3277, 0
        %3286 = vmatprep.subr.mxu0 0.0
        %3287 = vmatpush1.xpose.msra.mxu0 %v3282
        %3288 = vmatprep.subr.mxu0 0.0
        %3289 = vmatpush1.xpose.msra.mxu0 %v3284
        %3290 = vmatprep.subr.mxu0 0.0
        %3291 = vmatpush1.xpose.msra.mxu0 0.0
        %3292 = vmatprep.subr.mxu0 0.0
        %3293 = vmatpush1.xpose.msra.mxu0 0.0
        %3294 = vmatprep.subr.mxu0 0.0
        %3295 = vmatpush1.xpose.msra.mxu0 0.0
        %3296 = vmatprep.subr.mxu0 0.0
        %3297 = vmatpush1.xpose.msra.mxu0 0.0
        %3298 = vmatprep.subr.mxu0 0.0
        %3299 = vmatpush1.xpose.msra.mxu0 0.0
        %3300 = vmatprep.subr.mxu0 0.0
        %3301 = vmatpush1.xpose.msra.mxu0 0.0
        %3302 = vmatprep.subr.mxu0 0.0
        %3303 = vmatpush1.xpose.msra.mxu0 0.0
        %3304 = vmatprep.subr.mxu0 0.0
        %3305 = vmatpush1.xpose.msra.mxu0 0.0
        %3306 = vmatprep.subr.mxu0 0.0
        %3307 = vmatpush1.xpose.msra.mxu0 0.0
        %3308 = vmatprep.subr.mxu0 0.0
        %3309 = vmatpush1.xpose.msra.mxu0 0.0
        %3310 = vmatprep.subr.mxu0 0.0
        %3311 = vmatpush1.xpose.msra.mxu0 0.0
        %3312 = vmatprep.subr.mxu0 0.0
        %3313 = vmatpush1.xpose.msra.mxu0 0.0
        %3314 = vmatprep.subr.mxu0 0.0
        %3315 = vmatpush1.xpose.msra.mxu0 0.0
        %3316 = vmatprep.subr.mxu0 0.0
        %3317 = vmatpush1.xpose.msra.mxu0 0.0
        %3318 = vmatprep.subr.mxu0 0.0
        %3319 = vmatpush1.xpose.msra.mxu0 0.0
        %3320 = vmatprep.subr.mxu0 0.0
        %3321 = vmatpush1.xpose.msra.mxu0 0.0
        %3322 = vmatprep.subr.mxu0 0.0
        %3323 = vmatpush1.xpose.msra.mxu0 0.0
        %3324 = vmatprep.subr.mxu0 0.0
        %3325 = vmatpush1.xpose.msra.mxu0 0.0
        %3326 = vmatprep.subr.mxu0 0.0
        %3327 = vmatpush1.xpose.msra.mxu0 0.0
        %3328 = vmatprep.subr.mxu0 0.0
        %3329 = vmatpush1.xpose.msra.mxu0 0.0
        %3330 = vmatprep.subr.mxu0 0.0
        %3331 = vmatpush1.xpose.msra.mxu0 0.0
        %3332 = vmatprep.subr.mxu0 0.0
        %3333 = vmatpush1.xpose.msra.mxu0 0.0
        %3334 = vmatprep.subr.mxu0 0.0
        %3335 = vmatpush1.xpose.msra.mxu0 0.0
        %3336 = vmatprep.subr.mxu0 0.0
        %3337 = vmatpush1.xpose.msra.mxu0 0.0
        %3338 = vmatprep.subr.mxu0 0.0
        %3339 = vmatpush1.xpose.msra.mxu0 0.0
        %3340 = vmatprep.subr.mxu0 0.0
        %3341 = vmatpush1.xpose.msra.mxu0 0.0
        %3342 = vmatprep.subr.mxu0 0.0
        %3343 = vmatpush1.xpose.msra.mxu0 0.0
        %3344 = vmatprep.subr.mxu0 0.0
        %3345 = vmatpush1.xpose.msra.mxu0 0.0
        %3346 = vmatprep.subr.mxu0 0.0
        %3347 = vmatpush1.xpose.msra.mxu0 0.0
        %3348 = vmatprep.subr.mxu0 0.0
        %3349 = vmatpush1.xpose.msra.mxu0 0.0
        %3350 = vmatprep.mubr.f32.mxu0 0.0
        %3351 = vmatmul.mubr.f32.gmra.mrb[0].mxu0 %v3278
        %v3352 = vpop.f32.mrb[0].mxu0
        %v3353 = vadd.f32 0.0, %v3352
        %v3354 = vpop.f32.mrb[0].mxu0
        %3355 = vmatprep.mubr.f32.mxu0 0.0
        %3356 = vmatmul.mubr.f32.gmra.mrb[0].mxu0 %v3280
        %v3357 = vpop.f32.mrb[0].mxu0
        %v3358 = vadd.f32 0.0, %v3357
        %v3359 = vpop.f32.mrb[0].mxu0
        %3360 = vdwg.mxu0
        %v3361 = vmul.f32 %v3353, 0.35355338
        %v3362 = vmul.f32 %v3358, 0.35355338
        %v3395 = vlaneseq
        %v3396 = vshrl.u32 %v3395, 7
        %v3397 = vsub.s32 %v2031, %v3396
        %v3398 = vrot.slane %v3238, %v3397
        %v3399 = vlaneseq
        %v3400 = vshrl.u32 %v3399, 7
        %v3401 = vsub.s32 %v2036, %v3400
        %v3402 = vrot.slane %v3239, %v3401
        %v3403 = vsel %vm2041, %v3402, %v3398
        %v3404 = vlaneseq
        %v3405 = vshrl.u32 %v3404, 7
        %v3406 = vsub.s32 %v2031, %v3405
        %v3407 = vrot.slane %v3240, %v3406
        %v3408 = vlaneseq
        %v3409 = vshrl.u32 %v3408, 7
        %v3410 = vsub.s32 %v2036, %v3409
        %v3411 = vrot.slane %v3241, %v3410
        %v3412 = vsel %vm2041, %v3411, %v3407
        %v3413 = vlaneseq
        %v3414 = vshrl.u32 %v3413, 7
        %v3415 = vsub.s32 %v2031, %v3414
        %v3416 = vrot.slane %v3242, %v3415
        %v3417 = vlaneseq
        %v3418 = vshrl.u32 %v3417, 7
        %v3419 = vsub.s32 %v2036, %v3418
        %v3420 = vrot.slane %v3243, %v3419
        %v3421 = vsel %vm2041, %v3420, %v3416
        %v3422 = vlaneseq
        %v3423 = vshrl.u32 %v3422, 7
        %v3424 = vsub.s32 %v2031, %v3423
        %v3425 = vrot.slane %v3244, %v3424
        %v3426 = vlaneseq
        %v3427 = vshrl.u32 %v3426, 7
        %v3428 = vsub.s32 %v2036, %v3427
        %v3429 = vrot.slane %v3245, %v3428
        %v3430 = vsel %vm2041, %v3429, %v3425
        %v3431 = vlaneseq
        %v3432 = vshrl.u32 %v3431, 7
        %v3433 = vsub.s32 %v2031, %v3432
        %v3434 = vrot.slane %v3246, %v3433
        %v3435 = vlaneseq
        %v3436 = vshrl.u32 %v3435, 7
        %v3437 = vsub.s32 %v2036, %v3436
        %v3438 = vrot.slane %v3247, %v3437
        %v3439 = vsel %vm2041, %v3438, %v3434
        %v3440 = vlaneseq
        %v3441 = vshrl.u32 %v3440, 7
        %v3442 = vsub.s32 %v2031, %v3441
        %v3443 = vrot.slane %v3248, %v3442
        %v3444 = vlaneseq
        %v3445 = vshrl.u32 %v3444, 7
        %v3446 = vsub.s32 %v2036, %v3445
        %v3447 = vrot.slane %v3249, %v3446
        %v3448 = vsel %vm2041, %v3447, %v3443
        %v3449 = vlaneseq
        %v3450 = vshrl.u32 %v3449, 7
        %v3451 = vsub.s32 %v2031, %v3450
        %v3452 = vrot.slane %v3250, %v3451
        %v3453 = vlaneseq
        %v3454 = vshrl.u32 %v3453, 7
        %v3455 = vsub.s32 %v2036, %v3454
        %v3456 = vrot.slane %v3251, %v3455
        %v3457 = vsel %vm2041, %v3456, %v3452
        %v3458 = vlaneseq
        %v3459 = vshrl.u32 %v3458, 7
        %v3460 = vsub.s32 %v2031, %v3459
        %v3461 = vrot.slane %v3252, %v3460
        %v3462 = vlaneseq
        %v3463 = vshrl.u32 %v3462, 7
        %v3464 = vsub.s32 %v2036, %v3463
        %v3465 = vrot.slane %v3253, %v3464
        %v3466 = vsel %vm2041, %v3465, %v3461
        %v3467 = vlaneseq
        %v3468 = vshrl.u32 %v3467, 7
        %v3469 = vsub.s32 %v2031, %v3468
        %v3470 = vrot.slane %v3254, %v3469
        %v3471 = vlaneseq
        %v3472 = vshrl.u32 %v3471, 7
        %v3473 = vsub.s32 %v2036, %v3472
        %v3474 = vrot.slane %v3255, %v3473
        %v3475 = vsel %vm2041, %v3474, %v3470
        %v3476 = vlaneseq
        %v3477 = vshrl.u32 %v3476, 7
        %v3478 = vsub.s32 %v2031, %v3477
        %v3479 = vrot.slane %v3256, %v3478
        %v3480 = vlaneseq
        %v3481 = vshrl.u32 %v3480, 7
        %v3482 = vsub.s32 %v2036, %v3481
        %v3483 = vrot.slane %v3257, %v3482
        %v3484 = vsel %vm2041, %v3483, %v3479
        %v3485 = vlaneseq
        %v3486 = vshrl.u32 %v3485, 7
        %v3487 = vsub.s32 %v2031, %v3486
        %v3488 = vrot.slane %v3258, %v3487
        %v3489 = vlaneseq
        %v3490 = vshrl.u32 %v3489, 7
        %v3491 = vsub.s32 %v2036, %v3490
        %v3492 = vrot.slane %v3259, %v3491
        %v3493 = vsel %vm2041, %v3492, %v3488
        %v3494 = vlaneseq
        %v3495 = vshrl.u32 %v3494, 7
        %v3496 = vsub.s32 %v2031, %v3495
        %v3497 = vrot.slane %v3260, %v3496
        %v3498 = vlaneseq
        %v3499 = vshrl.u32 %v3498, 7
        %v3500 = vsub.s32 %v2036, %v3499
        %v3501 = vrot.slane %v3261, %v3500
        %v3502 = vsel %vm2041, %v3501, %v3497
        %v3503 = vlaneseq
        %v3504 = vshrl.u32 %v3503, 7
        %v3505 = vsub.s32 %v2031, %v3504
        %v3506 = vrot.slane %v3262, %v3505
        %v3507 = vlaneseq
        %v3508 = vshrl.u32 %v3507, 7
        %v3509 = vsub.s32 %v2036, %v3508
        %v3510 = vrot.slane %v3263, %v3509
        %v3511 = vsel %vm2041, %v3510, %v3506
        %v3512 = vlaneseq
        %v3513 = vshrl.u32 %v3512, 7
        %v3514 = vsub.s32 %v2031, %v3513
        %v3515 = vrot.slane %v3264, %v3514
        %v3516 = vlaneseq
        %v3517 = vshrl.u32 %v3516, 7
        %v3518 = vsub.s32 %v2036, %v3517
        %v3519 = vrot.slane %v3265, %v3518
        %v3520 = vsel %vm2041, %v3519, %v3515
        %v3521 = vlaneseq
        %v3522 = vshrl.u32 %v3521, 7
        %v3523 = vsub.s32 %v2031, %v3522
        %v3524 = vrot.slane %v3266, %v3523
        %v3525 = vlaneseq
        %v3526 = vshrl.u32 %v3525, 7
        %v3527 = vsub.s32 %v2036, %v3526
        %v3528 = vrot.slane %v3267, %v3527
        %v3529 = vsel %vm2041, %v3528, %v3524
        %v3530 = vlaneseq
        %v3531 = vshrl.u32 %v3530, 7
        %v3532 = vsub.s32 %v2031, %v3531
        %v3533 = vrot.slane %v3268, %v3532
        %v3534 = vlaneseq
        %v3535 = vshrl.u32 %v3534, 7
        %v3536 = vsub.s32 %v2036, %v3535
        %v3537 = vrot.slane %v3269, %v3536
        %v3538 = vsel %vm2041, %v3537, %v3533
        %v3539 = vsel %vm2178, %v3412, %v3403
        %v3540 = vsel %vm2180, %v3421, %v3539
        %v3541 = vsel %vm2182, %v3430, %v3540
        %v3542 = vsel %vm2184, %v3439, %v3541
        %v3543 = vsel %vm2186, %v3448, %v3542
        %v3544 = vsel %vm2188, %v3457, %v3543
        %v3545 = vsel %vm2190, %v3466, %v3544
        %v3546 = vsel %vm2178, %v3484, %v3475
        %v3547 = vsel %vm2180, %v3493, %v3546
        %v3548 = vsel %vm2182, %v3502, %v3547
        %v3549 = vsel %vm2184, %v3511, %v3548
        %v3550 = vsel %vm2186, %v3520, %v3549
        %v3551 = vsel %vm2188, %v3529, %v3550
        %v3552 = vsel %vm2190, %v3538, %v3551
        %v3555 = vadd.f32 %v3361, %v3545
        %v3556 = vadd.f32 %v3362, %v3552
        %v3557 = vsel %vm488, %v3555, -inf
        %3558 = vmax.xlane.f32.xlu0 %v3557
        %v3559 = vpop.xlane.xlu0 %3558
        %v3560 = vsel %vm488, %v3556, -inf
        %3561 = vmax.xlane.f32.xlu0 %v3560
        %v3562 = vpop.xlane.xlu0 %3561
        %v3563 = vsub.f32 %v3555, %v3559
        %v3564 = vsub.f32 %v3556, %v3562
        %v3565 = vmul.f32 %v3563, 1.442695
        %v3566 = vpow.pop %v3565
        %v3567 = vmul.f32 %v3564, 1.442695
        %v3568 = vpow.pop %v3567
        %v3569 = vsel %vm488, %v3566, 0.0
        %3570 = vadd.xlane.f32.xlu0 %v3569
        %v3571 = vpop.xlane.xlu0 %3570
        %v3572 = vsel %vm488, %v3568, 0.0
        %3573 = vadd.xlane.f32.xlu0 %v3572
        %v3574 = vpop.xlane.xlu0 %3573
        %v3575 = vrcp.pop %v3571
        %v3576 = vmul.f32 %v3566, %v3575
        %v3577 = vrcp.pop %v3574
        %v3578 = vmul.f32 %v3568, %v3577
        %3579 = vrot.lane.b32.xlu0 %v1687, 48
        %v3580 = vpop.permute.xlu0 %3579
        %3581 = vrot.lane.b32.xlu0 %v1692, 48
        %v3582 = vpop.permute.xlu0 %3581
        %v3586 = vsel %vm488, %v3576, 0
        %v3589 = vsel %vm488, %v3578, 0
        %3591 = vmatprep.subr.mxu0 0.0
        %3592 = vmatpush1.msra.mxu0 %v3580
        %3593 = vmatprep.subr.mxu0 0.0
        %3594 = vmatpush1.msra.mxu0 %v3582
        %3595 = vmatprep.subr.mxu0 0.0
        %3596 = vmatpush1.msra.mxu0 0.0
        %3597 = vmatprep.subr.mxu0 0.0
        %3598 = vmatpush1.msra.mxu0 0.0
        %3599 = vmatprep.subr.mxu0 0.0
        %3600 = vmatpush1.msra.mxu0 0.0
        %3601 = vmatprep.subr.mxu0 0.0
        %3602 = vmatpush1.msra.mxu0 0.0
        %3603 = vmatprep.subr.mxu0 0.0
        %3604 = vmatpush1.msra.mxu0 0.0
        %3605 = vmatprep.subr.mxu0 0.0
        %3606 = vmatpush1.msra.mxu0 0.0
        %3607 = vmatprep.subr.mxu0 0.0
        %3608 = vmatpush1.msra.mxu0 0.0
        %3609 = vmatprep.subr.mxu0 0.0
        %3610 = vmatpush1.msra.mxu0 0.0
        %3611 = vmatprep.subr.mxu0 0.0
        %3612 = vmatpush1.msra.mxu0 0.0
        %3613 = vmatprep.subr.mxu0 0.0
        %3614 = vmatpush1.msra.mxu0 0.0
        %3615 = vmatprep.subr.mxu0 0.0
        %3616 = vmatpush1.msra.mxu0 0.0
        %3617 = vmatprep.subr.mxu0 0.0
        %3618 = vmatpush1.msra.mxu0 0.0
        %3619 = vmatprep.subr.mxu0 0.0
        %3620 = vmatpush1.msra.mxu0 0.0
        %3621 = vmatprep.subr.mxu0 0.0
        %3622 = vmatpush1.msra.mxu0 0.0
        %3623 = vmatprep.subr.mxu0 0.0
        %3624 = vmatpush1.msra.mxu0 0.0
        %3625 = vmatprep.subr.mxu0 0.0
        %3626 = vmatpush1.msra.mxu0 0.0
        %3627 = vmatprep.subr.mxu0 0.0
        %3628 = vmatpush1.msra.mxu0 0.0
        %3629 = vmatprep.subr.mxu0 0.0
        %3630 = vmatpush1.msra.mxu0 0.0
        %3631 = vmatprep.subr.mxu0 0.0
        %3632 = vmatpush1.msra.mxu0 0.0
        %3633 = vmatprep.subr.mxu0 0.0
        %3634 = vmatpush1.msra.mxu0 0.0
        %3635 = vmatprep.subr.mxu0 0.0
        %3636 = vmatpush1.msra.mxu0 0.0
        %3637 = vmatprep.subr.mxu0 0.0
        %3638 = vmatpush1.msra.mxu0 0.0
        %3639 = vmatprep.subr.mxu0 0.0
        %3640 = vmatpush1.msra.mxu0 0.0
        %3641 = vmatprep.subr.mxu0 0.0
        %3642 = vmatpush1.msra.mxu0 0.0
        %3643 = vmatprep.subr.mxu0 0.0
        %3644 = vmatpush1.msra.mxu0 0.0
        %3645 = vmatprep.subr.mxu0 0.0
        %3646 = vmatpush1.msra.mxu0 0.0
        %3647 = vmatprep.subr.mxu0 0.0
        %3648 = vmatpush1.msra.mxu0 0.0
        %3649 = vmatprep.subr.mxu0 0.0
        %3650 = vmatpush1.msra.mxu0 0.0
        %3651 = vmatprep.subr.mxu0 0.0
        %3652 = vmatpush1.msra.mxu0 0.0
        %3653 = vmatprep.subr.mxu0 0.0
        %3654 = vmatpush1.msra.mxu0 0.0
        %3655 = vmatprep.mubr.f32.mxu0 0.0
        %3656 = vmatmul.mubr.f32.gmra.mrb[0].mxu0 %v3586
        %v3657 = vpop.f32.mrb[0].mxu0
        %v3658 = vadd.f32 0.0, %v3657
        %v3659 = vpop.f32.mrb[0].mxu0
        %3660 = vmatprep.mubr.f32.mxu0 0.0
        %3661 = vmatmul.mubr.f32.gmra.mrb[0].mxu0 %v3589
        %v3662 = vpop.f32.mrb[0].mxu0
        %v3663 = vadd.f32 0.0, %v3662
        %v3664 = vpop.f32.mrb[0].mxu0
        %3665 = vdwg.mxu0
        %v3667 = vsel %vm1912, %v3658, 0
        %v3670 = vsel %vm1912, %v3663, 0
        %3672 = vmatprep.subr.mxu0 0.0
        %3673 = vmatpush1.msra.mxu0 %v1697
        %3674 = vmatprep.subr.mxu0 0.0
        %3675 = vmatpush1.msra.mxu0 0.0
        %3676 = vmatprep.subr.mxu0 0.0
        %3677 = vmatpush1.msra.mxu0 0.0
        %3678 = vmatprep.subr.mxu0 0.0
        %3679 = vmatpush1.msra.mxu0 0.0
        %3680 = vmatprep.subr.mxu0 0.0
        %3681 = vmatpush1.msra.mxu0 0.0
        %3682 = vmatprep.subr.mxu0 0.0
        %3683 = vmatpush1.msra.mxu0 0.0
        %3684 = vmatprep.subr.mxu0 0.0
        %3685 = vmatpush1.msra.mxu0 0.0
        %3686 = vmatprep.subr.mxu0 0.0
        %3687 = vmatpush1.msra.mxu0 0.0
        %3688 = vmatprep.subr.mxu0 0.0
        %3689 = vmatpush1.msra.mxu0 0.0
        %3690 = vmatprep.subr.mxu0 0.0
        %3691 = vmatpush1.msra.mxu0 0.0
        %3692 = vmatprep.subr.mxu0 0.0
        %3693 = vmatpush1.msra.mxu0 0.0
        %3694 = vmatprep.subr.mxu0 0.0
        %3695 = vmatpush1.msra.mxu0 0.0
        %3696 = vmatprep.subr.mxu0 0.0
        %3697 = vmatpush1.msra.mxu0 0.0
        %3698 = vmatprep.subr.mxu0 0.0
        %3699 = vmatpush1.msra.mxu0 0.0
        %3700 = vmatprep.subr.mxu0 0.0
        %3701 = vmatpush1.msra.mxu0 0.0
        %3702 = vmatprep.subr.mxu0 0.0
        %3703 = vmatpush1.msra.mxu0 0.0
        %3704 = vmatprep.subr.mxu0 0.0
        %3705 = vmatpush1.msra.mxu0 0.0
        %3706 = vmatprep.subr.mxu0 0.0
        %3707 = vmatpush1.msra.mxu0 0.0
        %3708 = vmatprep.subr.mxu0 0.0
        %3709 = vmatpush1.msra.mxu0 0.0
        %3710 = vmatprep.subr.mxu0 0.0
        %3711 = vmatpush1.msra.mxu0 0.0
        %3712 = vmatprep.subr.mxu0 0.0
        %3713 = vmatpush1.msra.mxu0 0.0
        %3714 = vmatprep.subr.mxu0 0.0
        %3715 = vmatpush1.msra.mxu0 0.0
        %3716 = vmatprep.subr.mxu0 0.0
        %3717 = vmatpush1.msra.mxu0 0.0
        %3718 = vmatprep.subr.mxu0 0.0
        %3719 = vmatpush1.msra.mxu0 0.0
        %3720 = vmatprep.subr.mxu0 0.0
        %3721 = vmatpush1.msra.mxu0 0.0
        %3722 = vmatprep.subr.mxu0 0.0
        %3723 = vmatpush1.msra.mxu0 0.0
        %3724 = vmatprep.subr.mxu0 0.0
        %3725 = vmatpush1.msra.mxu0 0.0
        %3726 = vmatprep.subr.mxu0 0.0
        %3727 = vmatpush1.msra.mxu0 0.0
        %3728 = vmatprep.subr.mxu0 0.0
        %3729 = vmatpush1.msra.mxu0 0.0
        %3730 = vmatprep.subr.mxu0 0.0
        %3731 = vmatpush1.msra.mxu0 0.0
        %3732 = vmatprep.subr.mxu0 0.0
        %3733 = vmatpush1.msra.mxu0 0.0
        %3734 = vmatprep.subr.mxu0 0.0
        %3735 = vmatpush1.msra.mxu0 0.0
        %3736 = vmatprep.mubr.f32.mxu0 0.0
        %3737 = vmatmul.mubr.f32.gmra.mrb[0].mxu0 %v3667
        %v3738 = vpop.f32.mrb[0].mxu0
        %v3739 = vadd.f32 0.0, %v3738
        %v3740 = vpop.f32.mrb[0].mxu0
        %3741 = vmatprep.mubr.f32.mxu0 0.0
        %3742 = vmatmul.mubr.f32.gmra.mrb[0].mxu0 %v3670
        %v3743 = vpop.f32.mrb[0].mxu0
        %v3744 = vadd.f32 0.0, %v3743
        %v3745 = vpop.f32.mrb[0].mxu0
        %3746 = vdwg.mxu0
        %v3747 = vadd.f32 %v3062, %v3739
        %v3748 = vadd.f32 %v3067, %v3744
        %v3749 = vlaneseq
        %v3750 = vshrl.u32 %v3749, 7
        %v3751 = vsub.s32 3, %v3750
        %v3752 = vrot.slane %v1699, %v3751
        %v3753 = vmul.f32 %v946, %v3752
        %v3754 = vmul.f32 %v947, %v3752
        %v3755 = vmul.f32 %v948, %v3752
        %v3756 = vmul.f32 %v949, %v3752
        %v3757 = vmul.f32 %v950, %v3752
        %v3758 = vmul.f32 %v951, %v3752
        %v3759 = vmul.f32 %v952, %v3752
        %v3760 = vmul.f32 %v953, %v3752
        %v3761 = vmul.f32 %v954, %v3752
        %v3762 = vmul.f32 %v955, %v3752
        %v3763 = vmul.f32 %v956, %v3752
        %v3764 = vmul.f32 %v957, %v3752
        %v3765 = vmul.f32 %v958, %v3752
        %v3766 = vmul.f32 %v959, %v3752
        %v3767 = vmul.f32 %v960, %v3752
        %v3768 = vmul.f32 %v961, %v3752
        %v3769 = vmul.f32 %v962, %v3752
        %v3770 = vmul.f32 %v963, %v3752
        %v3771 = vmul.f32 %v964, %v3752
        %v3772 = vmul.f32 %v965, %v3752
        %v3773 = vmul.f32 %v966, %v3752
        %v3774 = vmul.f32 %v967, %v3752
        %v3775 = vmul.f32 %v968, %v3752
        %v3776 = vmul.f32 %v969, %v3752
        %v3777 = vmul.f32 %v970, %v3752
        %v3778 = vmul.f32 %v971, %v3752
        %v3779 = vmul.f32 %v972, %v3752
        %v3780 = vmul.f32 %v973, %v3752
        %v3781 = vmul.f32 %v974, %v3752
        %v3782 = vmul.f32 %v975, %v3752
        %v3783 = vmul.f32 %v976, %v3752
        %v3784 = vmul.f32 %v977, %v3752
        %v3785 = vsel %vm488, %v3753, 0.0
        %3786 = vadd.xlane.f32.xlu0 %v3785
        %v3787 = vpop.xlane.xlu0 %3786
        %v3788 = vsel %vm488, %v3754, 0.0
        %3789 = vadd.xlane.f32.xlu0 %v3788
        %v3790 = vpop.xlane.xlu0 %3789
        %v3791 = vsel %vm488, %v3755, 0.0
        %3792 = vadd.xlane.f32.xlu0 %v3791
        %v3793 = vpop.xlane.xlu0 %3792
        %v3794 = vsel %vm488, %v3756, 0.0
        %3795 = vadd.xlane.f32.xlu0 %v3794
        %v3796 = vpop.xlane.xlu0 %3795
        %v3797 = vsel %vm488, %v3757, 0.0
        %3798 = vadd.xlane.f32.xlu0 %v3797
        %v3799 = vpop.xlane.xlu0 %3798
        %v3800 = vsel %vm488, %v3758, 0.0
        %3801 = vadd.xlane.f32.xlu0 %v3800
        %v3802 = vpop.xlane.xlu0 %3801
        %v3803 = vsel %vm488, %v3759, 0.0
        %3804 = vadd.xlane.f32.xlu0 %v3803
        %v3805 = vpop.xlane.xlu0 %3804
        %v3806 = vsel %vm488, %v3760, 0.0
        %3807 = vadd.xlane.f32.xlu0 %v3806
        %v3808 = vpop.xlane.xlu0 %3807
        %v3809 = vsel %vm488, %v3761, 0.0
        %3810 = vadd.xlane.f32.xlu0 %v3809
        %v3811 = vpop.xlane.xlu0 %3810
        %v3812 = vsel %vm488, %v3762, 0.0
        %3813 = vadd.xlane.f32.xlu0 %v3812
        %v3814 = vpop.xlane.xlu0 %3813
        %v3815 = vsel %vm488, %v3763, 0.0
        %3816 = vadd.xlane.f32.xlu0 %v3815
        %v3817 = vpop.xlane.xlu0 %3816
        %v3818 = vsel %vm488, %v3764, 0.0
        %3819 = vadd.xlane.f32.xlu0 %v3818
        %v3820 = vpop.xlane.xlu0 %3819
        %v3821 = vsel %vm488, %v3765, 0.0
        %3822 = vadd.xlane.f32.xlu0 %v3821
        %v3823 = vpop.xlane.xlu0 %3822
        %v3824 = vsel %vm488, %v3766, 0.0
        %3825 = vadd.xlane.f32.xlu0 %v3824
        %v3826 = vpop.xlane.xlu0 %3825
        %v3827 = vsel %vm488, %v3767, 0.0
        %3828 = vadd.xlane.f32.xlu0 %v3827
        %v3829 = vpop.xlane.xlu0 %3828
        %v3830 = vsel %vm488, %v3768, 0.0
        %3831 = vadd.xlane.f32.xlu0 %v3830
        %v3832 = vpop.xlane.xlu0 %3831
        %v3833 = vsel %vm488, %v3769, 0.0
        %3834 = vadd.xlane.f32.xlu0 %v3833
        %v3835 = vpop.xlane.xlu0 %3834
        %v3836 = vsel %vm488, %v3770, 0.0
        %3837 = vadd.xlane.f32.xlu0 %v3836
        %v3838 = vpop.xlane.xlu0 %3837
        %v3839 = vsel %vm488, %v3771, 0.0
        %3840 = vadd.xlane.f32.xlu0 %v3839
        %v3841 = vpop.xlane.xlu0 %3840
        %v3842 = vsel %vm488, %v3772, 0.0
        %3843 = vadd.xlane.f32.xlu0 %v3842
        %v3844 = vpop.xlane.xlu0 %3843
        %v3845 = vsel %vm488, %v3773, 0.0
        %3846 = vadd.xlane.f32.xlu0 %v3845
        %v3847 = vpop.xlane.xlu0 %3846
        %v3848 = vsel %vm488, %v3774, 0.0
        %3849 = vadd.xlane.f32.xlu0 %v3848
        %v3850 = vpop.xlane.xlu0 %3849
        %v3851 = vsel %vm488, %v3775, 0.0
        %3852 = vadd.xlane.f32.xlu0 %v3851
        %v3853 = vpop.xlane.xlu0 %3852
        %v3854 = vsel %vm488, %v3776, 0.0
        %3855 = vadd.xlane.f32.xlu0 %v3854
        %v3856 = vpop.xlane.xlu0 %3855
        %v3857 = vsel %vm488, %v3777, 0.0
        %3858 = vadd.xlane.f32.xlu0 %v3857
        %v3859 = vpop.xlane.xlu0 %3858
        %v3860 = vsel %vm488, %v3778, 0.0
        %3861 = vadd.xlane.f32.xlu0 %v3860
        %v3862 = vpop.xlane.xlu0 %3861
        %v3863 = vsel %vm488, %v3779, 0.0
        %3864 = vadd.xlane.f32.xlu0 %v3863
        %v3865 = vpop.xlane.xlu0 %3864
        %v3866 = vsel %vm488, %v3780, 0.0
        %3867 = vadd.xlane.f32.xlu0 %v3866
        %v3868 = vpop.xlane.xlu0 %3867
        %v3869 = vsel %vm488, %v3781, 0.0
        %3870 = vadd.xlane.f32.xlu0 %v3869
        %v3871 = vpop.xlane.xlu0 %3870
        %v3872 = vsel %vm488, %v3782, 0.0
        %3873 = vadd.xlane.f32.xlu0 %v3872
        %v3874 = vpop.xlane.xlu0 %3873
        %v3875 = vsel %vm488, %v3783, 0.0
        %3876 = vadd.xlane.f32.xlu0 %v3875
        %v3877 = vpop.xlane.xlu0 %3876
        %v3878 = vsel %vm488, %v3784, 0.0
        %3879 = vadd.xlane.f32.xlu0 %v3878
        %v3880 = vpop.xlane.xlu0 %3879
        %3881 = vset.pattern.permute.xlu0 3
        %3882 = vperm.xlu0 %3881, %v1837
        %v3883 = vpop.permute.xlu0 %3882
        %v3885 = vmul.f32 %v1391, %v3883
        %v3886 = vmul.f32 %v1398, %v3883
        %v3887 = vmul.f32 %v1405, %v3883
        %v3888 = vmul.f32 %v1412, %v3883
        %v3889 = vmul.f32 %v1419, %v3883
        %v3890 = vmul.f32 %v1426, %v3883
        %v3891 = vmul.f32 %v1433, %v3883
        %v3892 = vmul.f32 %v1440, %v3883
        %v3893 = vmul.f32 %v1447, %v3883
        %v3894 = vmul.f32 %v1454, %v3883
        %v3895 = vmul.f32 %v1461, %v3883
        %v3896 = vmul.f32 %v1468, %v3883
        %v3897 = vmul.f32 %v1475, %v3883
        %v3898 = vmul.f32 %v1482, %v3883
        %v3899 = vmul.f32 %v1489, %v3883
        %v3900 = vmul.f32 %v1496, %v3883
        %v3901 = vmul.f32 %v1503, %v3883
        %v3902 = vmul.f32 %v1510, %v3883
        %v3903 = vmul.f32 %v1517, %v3883
        %v3904 = vmul.f32 %v1524, %v3883
        %v3905 = vmul.f32 %v1531, %v3883
        %v3906 = vmul.f32 %v1538, %v3883
        %v3907 = vmul.f32 %v1545, %v3883
        %v3908 = vmul.f32 %v1552, %v3883
        %v3909 = vmul.f32 %v1559, %v3883
        %v3910 = vmul.f32 %v1566, %v3883
        %v3911 = vmul.f32 %v1573, %v3883
        %v3912 = vmul.f32 %v1580, %v3883
        %v3913 = vmul.f32 %v1587, %v3883
        %v3914 = vmul.f32 %v1594, %v3883
        %v3915 = vmul.f32 %v1601, %v3883
        %v3916 = vmul.f32 %v1608, %v3883
        %v3917 = vadd.f32 %v3787, %v3885
        %v3918 = vadd.f32 %v3790, %v3886
        %v3919 = vadd.f32 %v3793, %v3887
        %v3920 = vadd.f32 %v3796, %v3888
        %v3921 = vadd.f32 %v3799, %v3889
        %v3922 = vadd.f32 %v3802, %v3890
        %v3923 = vadd.f32 %v3805, %v3891
        %v3924 = vadd.f32 %v3808, %v3892
        %v3925 = vadd.f32 %v3811, %v3893
        %v3926 = vadd.f32 %v3814, %v3894
        %v3927 = vadd.f32 %v3817, %v3895
        %v3928 = vadd.f32 %v3820, %v3896
        %v3929 = vadd.f32 %v3823, %v3897
        %v3930 = vadd.f32 %v3826, %v3898
        %v3931 = vadd.f32 %v3829, %v3899
        %v3932 = vadd.f32 %v3832, %v3900
        %v3933 = vadd.f32 %v3835, %v3901
        %v3934 = vadd.f32 %v3838, %v3902
        %v3935 = vadd.f32 %v3841, %v3903
        %v3936 = vadd.f32 %v3844, %v3904
        %v3937 = vadd.f32 %v3847, %v3905
        %v3938 = vadd.f32 %v3850, %v3906
        %v3939 = vadd.f32 %v3853, %v3907
        %v3940 = vadd.f32 %v3856, %v3908
        %v3941 = vadd.f32 %v3859, %v3909
        %v3942 = vadd.f32 %v3862, %v3910
        %v3943 = vadd.f32 %v3865, %v3911
        %v3944 = vadd.f32 %v3868, %v3912
        %v3945 = vadd.f32 %v3871, %v3913
        %v3946 = vadd.f32 %v3874, %v3914
        %v3947 = vadd.f32 %v3877, %v3915
        %v3948 = vadd.f32 %v3880, %v3916
        %3949 = vrot.lane.b32.xlu0 %v1687, 104
        %v3950 = vpop.permute.xlu0 %3949
        %3951 = vrot.lane.b32.xlu0 %v1692, 104
        %v3952 = vpop.permute.xlu0 %3951
        %3953 = vrot.lane.b32.xlu0 %v1687, 72
        %v3954 = vpop.permute.xlu0 %3953
        %3955 = vrot.lane.b32.xlu0 %v1692, 72
        %v3956 = vpop.permute.xlu0 %3955
        %v3957 = vsel %vm1912, %v3950, 0
        %v3959 = vsel %vm1912, %v3952, 0
        %v3961 = vsel %vm1912, %v3954, 0
        %v3963 = vsel %vm1912, %v3956, 0
        %3965 = vmatprep.subr.mxu0 0.0
        %3966 = vmatpush1.xpose.msra.mxu0 %v3961
        %3967 = vmatprep.subr.mxu0 0.0
        %3968 = vmatpush1.xpose.msra.mxu0 %v3963
        %3969 = vmatprep.subr.mxu0 0.0
        %3970 = vmatpush1.xpose.msra.mxu0 0.0
        %3971 = vmatprep.subr.mxu0 0.0
        %3972 = vmatpush1.xpose.msra.mxu0 0.0
        %3973 = vmatprep.subr.mxu0 0.0
        %3974 = vmatpush1.xpose.msra.mxu0 0.0
        %3975 = vmatprep.subr.mxu0 0.0
        %3976 = vmatpush1.xpose.msra.mxu0 0.0
        %3977 = vmatprep.subr.mxu0 0.0
        %3978 = vmatpush1.xpose.msra.mxu0 0.0
        %3979 = vmatprep.subr.mxu0 0.0
        %3980 = vmatpush1.xpose.msra.mxu0 0.0
        %3981 = vmatprep.subr.mxu0 0.0
        %3982 = vmatpush1.xpose.msra.mxu0 0.0
        %3983 = vmatprep.subr.mxu0 0.0
        %3984 = vmatpush1.xpose.msra.mxu0 0.0
        %3985 = vmatprep.subr.mxu0 0.0
        %3986 = vmatpush1.xpose.msra.mxu0 0.0
        %3987 = vmatprep.subr.mxu0 0.0
        %3988 = vmatpush1.xpose.msra.mxu0 0.0
        %3989 = vmatprep.subr.mxu0 0.0
        %3990 = vmatpush1.xpose.msra.mxu0 0.0
        %3991 = vmatprep.subr.mxu0 0.0
        %3992 = vmatpush1.xpose.msra.mxu0 0.0
        %3993 = vmatprep.subr.mxu0 0.0
        %3994 = vmatpush1.xpose.msra.mxu0 0.0
        %3995 = vmatprep.subr.mxu0 0.0
        %3996 = vmatpush1.xpose.msra.mxu0 0.0
        %3997 = vmatprep.subr.mxu0 0.0
        %3998 = vmatpush1.xpose.msra.mxu0 0.0
        %3999 = vmatprep.subr.mxu0 0.0
        %4000 = vmatpush1.xpose.msra.mxu0 0.0
        %4001 = vmatprep.subr.mxu0 0.0
        %4002 = vmatpush1.xpose.msra.mxu0 0.0
        %4003 = vmatprep.subr.mxu0 0.0
        %4004 = vmatpush1.xpose.msra.mxu0 0.0
        %4005 = vmatprep.subr.mxu0 0.0
        %4006 = vmatpush1.xpose.msra.mxu0 0.0
        %4007 = vmatprep.subr.mxu0 0.0
        %4008 = vmatpush1.xpose.msra.mxu0 0.0
        %4009 = vmatprep.subr.mxu0 0.0
        %4010 = vmatpush1.xpose.msra.mxu0 0.0
        %4011 = vmatprep.subr.mxu0 0.0
        %4012 = vmatpush1.xpose.msra.mxu0 0.0
        %4013 = vmatprep.subr.mxu0 0.0
        %4014 = vmatpush1.xpose.msra.mxu0 0.0
        %4015 = vmatprep.subr.mxu0 0.0
        %4016 = vmatpush1.xpose.msra.mxu0 0.0
        %4017 = vmatprep.subr.mxu0 0.0
        %4018 = vmatpush1.xpose.msra.mxu0 0.0
        %4019 = vmatprep.subr.mxu0 0.0
        %4020 = vmatpush1.xpose.msra.mxu0 0.0
        %4021 = vmatprep.subr.mxu0 0.0
        %4022 = vmatpush1.xpose.msra.mxu0 0.0
        %4023 = vmatprep.subr.mxu0 0.0
        %4024 = vmatpush1.xpose.msra.mxu0 0.0
        %4025 = vmatprep.subr.mxu0 0.0
        %4026 = vmatpush1.xpose.msra.mxu0 0.0
        %4027 = vmatprep.subr.mxu0 0.0
        %4028 = vmatpush1.xpose.msra.mxu0 0.0
        %4029 = vmatprep.mubr.f32.mxu0 0.0
        %4030 = vmatmul.mubr.f32.gmra.mrb[0].mxu0 %v3957
        %v4031 = vpop.f32.mrb[0].mxu0
        %v4032 = vadd.f32 0.0, %v4031
        %v4033 = vpop.f32.mrb[0].mxu0
        %4034 = vmatprep.mubr.f32.mxu0 0.0
        %4035 = vmatmul.mubr.f32.gmra.mrb[0].mxu0 %v3959
        %v4036 = vpop.f32.mrb[0].mxu0
        %v4037 = vadd.f32 0.0, %v4036
        %v4038 = vpop.f32.mrb[0].mxu0
        %4039 = vdwg.mxu0
        %v4040 = vmul.f32 %v4032, 0.35355338
        %v4041 = vmul.f32 %v4037, 0.35355338
        %v4074 = vlaneseq
        %v4075 = vshrl.u32 %v4074, 7
        %v4076 = vsub.s32 %v2031, %v4075
        %v4077 = vrot.slane %v3917, %v4076
        %v4078 = vlaneseq
        %v4079 = vshrl.u32 %v4078, 7
        %v4080 = vsub.s32 %v2036, %v4079
        %v4081 = vrot.slane %v3918, %v4080
        %v4082 = vsel %vm2041, %v4081, %v4077
        %v4083 = vlaneseq
        %v4084 = vshrl.u32 %v4083, 7
        %v4085 = vsub.s32 %v2031, %v4084
        %v4086 = vrot.slane %v3919, %v4085
        %v4087 = vlaneseq
        %v4088 = vshrl.u32 %v4087, 7
        %v4089 = vsub.s32 %v2036, %v4088
        %v4090 = vrot.slane %v3920, %v4089
        %v4091 = vsel %vm2041, %v4090, %v4086
        %v4092 = vlaneseq
        %v4093 = vshrl.u32 %v4092, 7
        %v4094 = vsub.s32 %v2031, %v4093
        %v4095 = vrot.slane %v3921, %v4094
        %v4096 = vlaneseq
        %v4097 = vshrl.u32 %v4096, 7
        %v4098 = vsub.s32 %v2036, %v4097
        %v4099 = vrot.slane %v3922, %v4098
        %v4100 = vsel %vm2041, %v4099, %v4095
        %v4101 = vlaneseq
        %v4102 = vshrl.u32 %v4101, 7
        %v4103 = vsub.s32 %v2031, %v4102
        %v4104 = vrot.slane %v3923, %v4103
        %v4105 = vlaneseq
        %v4106 = vshrl.u32 %v4105, 7
        %v4107 = vsub.s32 %v2036, %v4106
        %v4108 = vrot.slane %v3924, %v4107
        %v4109 = vsel %vm2041, %v4108, %v4104
        %v4110 = vlaneseq
        %v4111 = vshrl.u32 %v4110, 7
        %v4112 = vsub.s32 %v2031, %v4111
        %v4113 = vrot.slane %v3925, %v4112
        %v4114 = vlaneseq
        %v4115 = vshrl.u32 %v4114, 7
        %v4116 = vsub.s32 %v2036, %v4115
        %v4117 = vrot.slane %v3926, %v4116
        %v4118 = vsel %vm2041, %v4117, %v4113
        %v4119 = vlaneseq
        %v4120 = vshrl.u32 %v4119, 7
        %v4121 = vsub.s32 %v2031, %v4120
        %v4122 = vrot.slane %v3927, %v4121
        %v4123 = vlaneseq
        %v4124 = vshrl.u32 %v4123, 7
        %v4125 = vsub.s32 %v2036, %v4124
        %v4126 = vrot.slane %v3928, %v4125
        %v4127 = vsel %vm2041, %v4126, %v4122
        %v4128 = vlaneseq
        %v4129 = vshrl.u32 %v4128, 7
        %v4130 = vsub.s32 %v2031, %v4129
        %v4131 = vrot.slane %v3929, %v4130
        %v4132 = vlaneseq
        %v4133 = vshrl.u32 %v4132, 7
        %v4134 = vsub.s32 %v2036, %v4133
        %v4135 = vrot.slane %v3930, %v4134
        %v4136 = vsel %vm2041, %v4135, %v4131
        %v4137 = vlaneseq
        %v4138 = vshrl.u32 %v4137, 7
        %v4139 = vsub.s32 %v2031, %v4138
        %v4140 = vrot.slane %v3931, %v4139
        %v4141 = vlaneseq
        %v4142 = vshrl.u32 %v4141, 7
        %v4143 = vsub.s32 %v2036, %v4142
        %v4144 = vrot.slane %v3932, %v4143
        %v4145 = vsel %vm2041, %v4144, %v4140
        %v4146 = vlaneseq
        %v4147 = vshrl.u32 %v4146, 7
        %v4148 = vsub.s32 %v2031, %v4147
        %v4149 = vrot.slane %v3933, %v4148
        %v4150 = vlaneseq
        %v4151 = vshrl.u32 %v4150, 7
        %v4152 = vsub.s32 %v2036, %v4151
        %v4153 = vrot.slane %v3934, %v4152
        %v4154 = vsel %vm2041, %v4153, %v4149
        %v4155 = vlaneseq
        %v4156 = vshrl.u32 %v4155, 7
        %v4157 = vsub.s32 %v2031, %v4156
        %v4158 = vrot.slane %v3935, %v4157
        %v4159 = vlaneseq
        %v4160 = vshrl.u32 %v4159, 7
        %v4161 = vsub.s32 %v2036, %v4160
        %v4162 = vrot.slane %v3936, %v4161
        %v4163 = vsel %vm2041, %v4162, %v4158
        %v4164 = vlaneseq
        %v4165 = vshrl.u32 %v4164, 7
        %v4166 = vsub.s32 %v2031, %v4165
        %v4167 = vrot.slane %v3937, %v4166
        %v4168 = vlaneseq
        %v4169 = vshrl.u32 %v4168, 7
        %v4170 = vsub.s32 %v2036, %v4169
        %v4171 = vrot.slane %v3938, %v4170
        %v4172 = vsel %vm2041, %v4171, %v4167
        %v4173 = vlaneseq
        %v4174 = vshrl.u32 %v4173, 7
        %v4175 = vsub.s32 %v2031, %v4174
        %v4176 = vrot.slane %v3939, %v4175
        %v4177 = vlaneseq
        %v4178 = vshrl.u32 %v4177, 7
        %v4179 = vsub.s32 %v2036, %v4178
        %v4180 = vrot.slane %v3940, %v4179
        %v4181 = vsel %vm2041, %v4180, %v4176
        %v4182 = vlaneseq
        %v4183 = vshrl.u32 %v4182, 7
        %v4184 = vsub.s32 %v2031, %v4183
        %v4185 = vrot.slane %v3941, %v4184
        %v4186 = vlaneseq
        %v4187 = vshrl.u32 %v4186, 7
        %v4188 = vsub.s32 %v2036, %v4187
        %v4189 = vrot.slane %v3942, %v4188
        %v4190 = vsel %vm2041, %v4189, %v4185
        %v4191 = vlaneseq
        %v4192 = vshrl.u32 %v4191, 7
        %v4193 = vsub.s32 %v2031, %v4192
        %v4194 = vrot.slane %v3943, %v4193
        %v4195 = vlaneseq
        %v4196 = vshrl.u32 %v4195, 7
        %v4197 = vsub.s32 %v2036, %v4196
        %v4198 = vrot.slane %v3944, %v4197
        %v4199 = vsel %vm2041, %v4198, %v4194
        %v4200 = vlaneseq
        %v4201 = vshrl.u32 %v4200, 7
        %v4202 = vsub.s32 %v2031, %v4201
        %v4203 = vrot.slane %v3945, %v4202
        %v4204 = vlaneseq
        %v4205 = vshrl.u32 %v4204, 7
        %v4206 = vsub.s32 %v2036, %v4205
        %v4207 = vrot.slane %v3946, %v4206
        %v4208 = vsel %vm2041, %v4207, %v4203
        %v4209 = vlaneseq
        %v4210 = vshrl.u32 %v4209, 7
        %v4211 = vsub.s32 %v2031, %v4210
        %v4212 = vrot.slane %v3947, %v4211
        %v4213 = vlaneseq
        %v4214 = vshrl.u32 %v4213, 7
        %v4215 = vsub.s32 %v2036, %v4214
        %v4216 = vrot.slane %v3948, %v4215
        %v4217 = vsel %vm2041, %v4216, %v4212
        %v4218 = vsel %vm2178, %v4091, %v4082
        %v4219 = vsel %vm2180, %v4100, %v4218
        %v4220 = vsel %vm2182, %v4109, %v4219
        %v4221 = vsel %vm2184, %v4118, %v4220
        %v4222 = vsel %vm2186, %v4127, %v4221
        %v4223 = vsel %vm2188, %v4136, %v4222
        %v4224 = vsel %vm2190, %v4145, %v4223
        %v4225 = vsel %vm2178, %v4163, %v4154
        %v4226 = vsel %vm2180, %v4172, %v4225
        %v4227 = vsel %vm2182, %v4181, %v4226
        %v4228 = vsel %vm2184, %v4190, %v4227
        %v4229 = vsel %vm2186, %v4199, %v4228
        %v4230 = vsel %vm2188, %v4208, %v4229
        %v4231 = vsel %vm2190, %v4217, %v4230
        %v4234 = vadd.f32 %v4040, %v4224
        %v4235 = vadd.f32 %v4041, %v4231
        %v4236 = vsel %vm488, %v4234, -inf
        %4237 = vmax.xlane.f32.xlu0 %v4236
        %v4238 = vpop.xlane.xlu0 %4237
        %v4239 = vsel %vm488, %v4235, -inf
        %4240 = vmax.xlane.f32.xlu0 %v4239
        %v4241 = vpop.xlane.xlu0 %4240
        %v4242 = vsub.f32 %v4234, %v4238
        %v4243 = vsub.f32 %v4235, %v4241
        %v4244 = vmul.f32 %v4242, 1.442695
        %v4245 = vpow.pop %v4244
        %v4246 = vmul.f32 %v4243, 1.442695
        %v4247 = vpow.pop %v4246
        %v4248 = vsel %vm488, %v4245, 0.0
        %4249 = vadd.xlane.f32.xlu0 %v4248
        %v4250 = vpop.xlane.xlu0 %4249
        %v4251 = vsel %vm488, %v4247, 0.0
        %4252 = vadd.xlane.f32.xlu0 %v4251
        %v4253 = vpop.xlane.xlu0 %4252
        %v4254 = vrcp.pop %v4250
        %v4255 = vmul.f32 %v4245, %v4254
        %v4256 = vrcp.pop %v4253
        %v4257 = vmul.f32 %v4247, %v4256
        %4258 = vrot.lane.b32.xlu0 %v1687, 40
        %v4259 = vpop.permute.xlu0 %4258
        %4260 = vrot.lane.b32.xlu0 %v1692, 40
        %v4261 = vpop.permute.xlu0 %4260
        %v4265 = vsel %vm488, %v4255, 0
        %v4268 = vsel %vm488, %v4257, 0
        %4270 = vmatprep.subr.mxu0 0.0
        %4271 = vmatpush1.msra.mxu0 %v4259
        %4272 = vmatprep.subr.mxu0 0.0
        %4273 = vmatpush1.msra.mxu0 %v4261
        %4274 = vmatprep.subr.mxu0 0.0
        %4275 = vmatpush1.msra.mxu0 0.0
        %4276 = vmatprep.subr.mxu0 0.0
        %4277 = vmatpush1.msra.mxu0 0.0
        %4278 = vmatprep.subr.mxu0 0.0
        %4279 = vmatpush1.msra.mxu0 0.0
        %4280 = vmatprep.subr.mxu0 0.0
        %4281 = vmatpush1.msra.mxu0 0.0
        %4282 = vmatprep.subr.mxu0 0.0
        %4283 = vmatpush1.msra.mxu0 0.0
        %4284 = vmatprep.subr.mxu0 0.0
        %4285 = vmatpush1.msra.mxu0 0.0
        %4286 = vmatprep.subr.mxu0 0.0
        %4287 = vmatpush1.msra.mxu0 0.0
        %4288 = vmatprep.subr.mxu0 0.0
        %4289 = vmatpush1.msra.mxu0 0.0
        %4290 = vmatprep.subr.mxu0 0.0
        %4291 = vmatpush1.msra.mxu0 0.0
        %4292 = vmatprep.subr.mxu0 0.0
        %4293 = vmatpush1.msra.mxu0 0.0
        %4294 = vmatprep.subr.mxu0 0.0
        %4295 = vmatpush1.msra.mxu0 0.0
        %4296 = vmatprep.subr.mxu0 0.0
        %4297 = vmatpush1.msra.mxu0 0.0
        %4298 = vmatprep.subr.mxu0 0.0
        %4299 = vmatpush1.msra.mxu0 0.0
        %4300 = vmatprep.subr.mxu0 0.0
        %4301 = vmatpush1.msra.mxu0 0.0
        %4302 = vmatprep.subr.mxu0 0.0
        %4303 = vmatpush1.msra.mxu0 0.0
        %4304 = vmatprep.subr.mxu0 0.0
        %4305 = vmatpush1.msra.mxu0 0.0
        %4306 = vmatprep.subr.mxu0 0.0
        %4307 = vmatpush1.msra.mxu0 0.0
        %4308 = vmatprep.subr.mxu0 0.0
        %4309 = vmatpush1.msra.mxu0 0.0
        %4310 = vmatprep.subr.mxu0 0.0
        %4311 = vmatpush1.msra.mxu0 0.0
        %4312 = vmatprep.subr.mxu0 0.0
        %4313 = vmatpush1.msra.mxu0 0.0
        %4314 = vmatprep.subr.mxu0 0.0
        %4315 = vmatpush1.msra.mxu0 0.0
        %4316 = vmatprep.subr.mxu0 0.0
        %4317 = vmatpush1.msra.mxu0 0.0
        %4318 = vmatprep.subr.mxu0 0.0
        %4319 = vmatpush1.msra.mxu0 0.0
        %4320 = vmatprep.subr.mxu0 0.0
        %4321 = vmatpush1.msra.mxu0 0.0
        %4322 = vmatprep.subr.mxu0 0.0
        %4323 = vmatpush1.msra.mxu0 0.0
        %4324 = vmatprep.subr.mxu0 0.0
        %4325 = vmatpush1.msra.mxu0 0.0
        %4326 = vmatprep.subr.mxu0 0.0
        %4327 = vmatpush1.msra.mxu0 0.0
        %4328 = vmatprep.subr.mxu0 0.0
        %4329 = vmatpush1.msra.mxu0 0.0
        %4330 = vmatprep.subr.mxu0 0.0
        %4331 = vmatpush1.msra.mxu0 0.0
        %4332 = vmatprep.subr.mxu0 0.0
        %4333 = vmatpush1.msra.mxu0 0.0
        %4334 = vmatprep.mubr.f32.mxu0 0.0
        %4335 = vmatmul.mubr.f32.gmra.mrb[0].mxu0 %v4265
        %v4336 = vpop.f32.mrb[0].mxu0
        %v4337 = vadd.f32 0.0, %v4336
        %v4338 = vpop.f32.mrb[0].mxu0
        %4339 = vmatprep.mubr.f32.mxu0 0.0
        %4340 = vmatmul.mubr.f32.gmra.mrb[0].mxu0 %v4268
        %v4341 = vpop.f32.mrb[0].mxu0
        %v4342 = vadd.f32 0.0, %v4341
        %v4343 = vpop.f32.mrb[0].mxu0
        %4344 = vdwg.mxu0
        %v4346 = vsel %vm1912, %v4337, 0
        %v4349 = vsel %vm1912, %v4342, 0
        %4351 = vmatprep.subr.mxu0 0.0
        %4352 = vmatpush1.msra.mxu0 %v1698
        %4353 = vmatprep.subr.mxu0 0.0
        %4354 = vmatpush1.msra.mxu0 0.0
        %4355 = vmatprep.subr.mxu0 0.0
        %4356 = vmatpush1.msra.mxu0 0.0
        %4357 = vmatprep.subr.mxu0 0.0
        %4358 = vmatpush1.msra.mxu0 0.0
        %4359 = vmatprep.subr.mxu0 0.0
        %4360 = vmatpush1.msra.mxu0 0.0
        %4361 = vmatprep.subr.mxu0 0.0
        %4362 = vmatpush1.msra.mxu0 0.0
        %4363 = vmatprep.subr.mxu0 0.0
        %4364 = vmatpush1.msra.mxu0 0.0
        %4365 = vmatprep.subr.mxu0 0.0
        %4366 = vmatpush1.msra.mxu0 0.0
        %4367 = vmatprep.subr.mxu0 0.0
        %4368 = vmatpush1.msra.mxu0 0.0
        %4369 = vmatprep.subr.mxu0 0.0
        %4370 = vmatpush1.msra.mxu0 0.0
        %4371 = vmatprep.subr.mxu0 0.0
        %4372 = vmatpush1.msra.mxu0 0.0
        %4373 = vmatprep.subr.mxu0 0.0
        %4374 = vmatpush1.msra.mxu0 0.0
        %4375 = vmatprep.subr.mxu0 0.0
        %4376 = vmatpush1.msra.mxu0 0.0
        %4377 = vmatprep.subr.mxu0 0.0
        %4378 = vmatpush1.msra.mxu0 0.0
        %4379 = vmatprep.subr.mxu0 0.0
        %4380 = vmatpush1.msra.mxu0 0.0
        %4381 = vmatprep.subr.mxu0 0.0
        %4382 = vmatpush1.msra.mxu0 0.0
        %4383 = vmatprep.subr.mxu0 0.0
        %4384 = vmatpush1.msra.mxu0 0.0
        %4385 = vmatprep.subr.mxu0 0.0
        %4386 = vmatpush1.msra.mxu0 0.0
        %4387 = vmatprep.subr.mxu0 0.0
        %4388 = vmatpush1.msra.mxu0 0.0
        %4389 = vmatprep.subr.mxu0 0.0
        %4390 = vmatpush1.msra.mxu0 0.0
        %4391 = vmatprep.subr.mxu0 0.0
        %4392 = vmatpush1.msra.mxu0 0.0
        %4393 = vmatprep.subr.mxu0 0.0
        %4394 = vmatpush1.msra.mxu0 0.0
        %4395 = vmatprep.subr.mxu0 0.0
        %4396 = vmatpush1.msra.mxu0 0.0
        %4397 = vmatprep.subr.mxu0 0.0
        %4398 = vmatpush1.msra.mxu0 0.0
        %4399 = vmatprep.subr.mxu0 0.0
        %4400 = vmatpush1.msra.mxu0 0.0
        %4401 = vmatprep.subr.mxu0 0.0
        %4402 = vmatpush1.msra.mxu0 0.0
        %4403 = vmatprep.subr.mxu0 0.0
        %4404 = vmatpush1.msra.mxu0 0.0
        %4405 = vmatprep.subr.mxu0 0.0
        %4406 = vmatpush1.msra.mxu0 0.0
        %4407 = vmatprep.subr.mxu0 0.0
        %4408 = vmatpush1.msra.mxu0 0.0
        %4409 = vmatprep.subr.mxu0 0.0
        %4410 = vmatpush1.msra.mxu0 0.0
        %4411 = vmatprep.subr.mxu0 0.0
        %4412 = vmatpush1.msra.mxu0 0.0
        %4413 = vmatprep.subr.mxu0 0.0
        %4414 = vmatpush1.msra.mxu0 0.0
        %4415 = vmatprep.mubr.f32.mxu0 0.0
        %4416 = vmatmul.mubr.f32.gmra.mrb[0].mxu0 %v4346
        %v4417 = vpop.f32.mrb[0].mxu0
        %v4418 = vadd.f32 0.0, %v4417
        %v4419 = vpop.f32.mrb[0].mxu0
        %4420 = vmatprep.mubr.f32.mxu0 0.0
        %4421 = vmatmul.mubr.f32.gmra.mrb[0].mxu0 %v4349
        %v4422 = vpop.f32.mrb[0].mxu0
        %v4423 = vadd.f32 0.0, %v4422
        %v4424 = vpop.f32.mrb[0].mxu0
        %4425 = vdwg.mxu0
        %v4426 = vadd.f32 %v3747, %v4418
        %v4427 = vadd.f32 %v3748, %v4423
        %v4428 = vld [vmem:[%s8] sm:$0x7f]
        %v4429 = vadd.f32 %v452, %v4426
        %v4430 = vadd.f32 %v453, %v4427
        %v4431 = vsel %vm1613, %v4429, 0.0
        %4432 = vadd.xlane.f32.xlu0 %v4431
        %v4433 = vpop.xlane.xlu0 %4432
        %v4434 = vsel %vm1613, %v4430, 0.0
        %4435 = vadd.xlane.f32.xlu0 %v4434
        %v4436 = vpop.xlane.xlu0 %4435
        %v4437 = vrcp.pop 32.0
        %v4438 = vmul.f32 %v4433, %v4437
        %v4439 = vmul.f32 %v4436, %v4437
        %v4440 = vsub.f32 %v4429, %v4438
        %v4441 = vsub.f32 %v4430, %v4439
        %v4442 = vmul.f32 %v4440, %v4440
        %v4443 = vmul.f32 %v4441, %v4441
        %v4444 = vsel %vm1613, %v4442, 0.0
        %4445 = vadd.xlane.f32.xlu0 %v4444
        %v4446 = vpop.xlane.xlu0 %4445
        %v4447 = vsel %vm1613, %v4443, 0.0
        %4448 = vadd.xlane.f32.xlu0 %v4447
        %v4449 = vpop.xlane.xlu0 %4448
        %v4450 = vmul.f32 %v4446, %v4437
        %v4451 = vmul.f32 %v4449, %v4437
        %v4452 = vadd.f32 %v4450, 1e-06
        %v4453 = vadd.f32 %v4451, 1e-06
        %v4454 = vrsqrt.pop %v4452
        %v4455 = vrsqrt.pop %v4453
        %v4456 = vmul.f32 %v4440, %v4454
        %v4457 = vmul.f32 %v4441, %v4455
        %v4458 = vlaneseq
        %v4459 = vshrl.u32 %v4458, 7
        %v4460 = vsub.s32 0, %v4459
        %v4461 = vrot.slane %v4428, %v4460
        %v4462 = vmul.f32 %v4456, %v4461
        %v4463 = vmul.f32 %v4457, %v4461
        %v4464 = vlaneseq
        %v4465 = vshrl.u32 %v4464, 7
        %v4466 = vsub.s32 1, %v4465
        %v4467 = vrot.slane %v4428, %v4466
        %v4468 = vadd.f32 %v4462, %v4467
        %v4469 = vadd.f32 %v4463, %v4467
        %v4470 = vadd.f32 %v452, %v4468
        %v4471 = vadd.f32 %v453, %v4469
        %v4472 = vsel %vm1613, %v4470, 0.0
        %4473 = vadd.xlane.f32.xlu0 %v4472
        %v4474 = vpop.xlane.xlu0 %4473
        %v4475 = vsel %vm1613, %v4471, 0.0
        %4476 = vadd.xlane.f32.xlu0 %v4475
        %v4477 = vpop.xlane.xlu0 %4476
        %v4478 = vmul.f32 %v4474, %v4437
        %v4479 = vmul.f32 %v4477, %v4437
        %v4480 = vsub.f32 %v4470, %v4478
        %v4481 = vsub.f32 %v4471, %v4479
        %v4482 = vmul.f32 %v4480, %v4480
        %v4483 = vmul.f32 %v4481, %v4481
        %v4484 = vsel %vm1613, %v4482, 0.0
        %4485 = vadd.xlane.f32.xlu0 %v4484
        %v4486 = vpop.xlane.xlu0 %4485
        %v4487 = vsel %vm1613, %v4483, 0.0
        %4488 = vadd.xlane.f32.xlu0 %v4487
        %v4489 = vpop.xlane.xlu0 %4488
        %v4490 = vmul.f32 %v4486, %v4437
        %v4491 = vmul.f32 %v4489, %v4437
        %v4492 = vadd.f32 %v4490, 1e-05
        %v4493 = vadd.f32 %v4491, 1e-05
        %v4494 = vrsqrt.pop %v4492
        %v4495 = vrsqrt.pop %v4493
        %v4496 = vmul.f32 %v4480, %v4494
        %v4497 = vmul.f32 %v4481, %v4495
        %v4498 = vlaneseq
        %v4499 = vshrl.u32 %v4498, 7
        %v4500 = vsub.s32 2, %v4499
        %v4501 = vrot.slane %v4428, %v4500
        %v4502 = vmul.f32 %v4496, %v4501
        %v4503 = vmul.f32 %v4497, %v4501
        %v4504 = vlaneseq
        %v4505 = vshrl.u32 %v4504, 7
        %v4506 = vsub.s32 3, %v4505
        %v4507 = vrot.slane %v4428, %v4506
        %v4508 = vadd.f32 %v4502, %v4507
        %v4509 = vadd.f32 %v4503, %v4507
        %v4510 = vld [vmem:[%s5] sm:$0xff]
        %v4511 = vld [vmem:[%s5 + $0x8] sm:$0xff]
        %v4512 = vld [vmem:[%s5 + $0x10] sm:$0xff]
        %v4513 = vld [vmem:[%s5 + $0x18] sm:$0xff]
        %v4514 = vld [vmem:[%s6] sm:$0x1]
        %v4516 = vlaneseq
        %v4517 = vshrl.u32 %v4516, 7
        %v4518 = vsub.s32 0, %v4517
        %v4519 = vrot.slane %v4514, %v4518
        %v4522 = vsel %vm1613, %v4508, 0
        %v4525 = vsel %vm1613, %v4509, 0
        %4527 = vmatprep.subr.mxu0 0.0
        %4528 = vmatpush1.msra.mxu0 %v4510
        %4529 = vmatprep.subr.mxu0 0.0
        %4530 = vmatpush1.msra.mxu0 %v4511
        %4531 = vmatprep.subr.mxu0 0.0
        %4532 = vmatpush1.msra.mxu0 %v4512
        %4533 = vmatprep.subr.mxu0 0.0
        %4534 = vmatpush1.msra.mxu0 %v4513
        %4535 = vmatprep.subr.mxu0 0.0
        %4536 = vmatpush1.msra.mxu0 0.0
        %4537 = vmatprep.subr.mxu0 0.0
        %4538 = vmatpush1.msra.mxu0 0.0
        %4539 = vmatprep.subr.mxu0 0.0
        %4540 = vmatpush1.msra.mxu0 0.0
        %4541 = vmatprep.subr.mxu0 0.0
        %4542 = vmatpush1.msra.mxu0 0.0
        %4543 = vmatprep.subr.mxu0 0.0
        %4544 = vmatpush1.msra.mxu0 0.0
        %4545 = vmatprep.subr.mxu0 0.0
        %4546 = vmatpush1.msra.mxu0 0.0
        %4547 = vmatprep.subr.mxu0 0.0
        %4548 = vmatpush1.msra.mxu0 0.0
        %4549 = vmatprep.subr.mxu0 0.0
        %4550 = vmatpush1.msra.mxu0 0.0
        %4551 = vmatprep.subr.mxu0 0.0
        %4552 = vmatpush1.msra.mxu0 0.0
        %4553 = vmatprep.subr.mxu0 0.0
        %4554 = vmatpush1.msra.mxu0 0.0
        %4555 = vmatprep.subr.mxu0 0.0
        %4556 = vmatpush1.msra.mxu0 0.0
        %4557 = vmatprep.subr.mxu0 0.0
        %4558 = vmatpush1.msra.mxu0 0.0
        %4559 = vmatprep.subr.mxu0 0.0
        %4560 = vmatpush1.msra.mxu0 0.0
        %4561 = vmatprep.subr.mxu0 0.0
        %4562 = vmatpush1.msra.mxu0 0.0
        %4563 = vmatprep.subr.mxu0 0.0
        %4564 = vmatpush1.msra.mxu0 0.0
        %4565 = vmatprep.subr.mxu0 0.0
        %4566 = vmatpush1.msra.mxu0 0.0
        %4567 = vmatprep.subr.mxu0 0.0
        %4568 = vmatpush1.msra.mxu0 0.0
        %4569 = vmatprep.subr.mxu0 0.0
        %4570 = vmatpush1.msra.mxu0 0.0
        %4571 = vmatprep.subr.mxu0 0.0
        %4572 = vmatpush1.msra.mxu0 0.0
        %4573 = vmatprep.subr.mxu0 0.0
        %4574 = vmatpush1.msra.mxu0 0.0
        %4575 = vmatprep.subr.mxu0 0.0
        %4576 = vmatpush1.msra.mxu0 0.0
        %4577 = vmatprep.subr.mxu0 0.0
        %4578 = vmatpush1.msra.mxu0 0.0
        %4579 = vmatprep.subr.mxu0 0.0
        %4580 = vmatpush1.msra.mxu0 0.0
        %4581 = vmatprep.subr.mxu0 0.0
        %4582 = vmatpush1.msra.mxu0 0.0
        %4583 = vmatprep.subr.mxu0 0.0
        %4584 = vmatpush1.msra.mxu0 0.0
        %4585 = vmatprep.subr.mxu0 0.0
        %4586 = vmatpush1.msra.mxu0 0.0
        %4587 = vmatprep.subr.mxu0 0.0
        %4588 = vmatpush1.msra.mxu0 0.0
        %4589 = vmatprep.subr.mxu0 0.0
        %4590 = vmatpush1.msra.mxu0 0.0
        %4591 = vmatprep.mubr.f32.mxu0 0.0
        %4592 = vmatmul.mubr.f32.gmra.mrb[0].mxu0 %v4522
        %v4593 = vpop.f32.mrb[0].mxu0
        %v4594 = vadd.f32 %v4519, %v4593
        %v4595 = vpop.f32.mrb[0].mxu0
        %4596 = vmatprep.mubr.f32.mxu0 0.0
        %4597 = vmatmul.mubr.f32.gmra.mrb[0].mxu0 %v4525
        %v4598 = vpop.f32.mrb[0].mxu0
        %v4599 = vadd.f32 %v4519, %v4598
        %v4600 = vpop.f32.mrb[0].mxu0
        %4601 = vdwg.mxu0
        %v4602 = vmul.f32 %v4594, 0.5
        %v4603 = vmul.f32 %v4599, 0.5
        %v4604 = vmul.f32 %v4594, 0.70710677
        %v4605 = vmul.f32 %v4599, 0.70710677
        %v4606 = verf.f32.pop %v4604
        %v4607 = verf.f32.pop %v4605
        %v4608 = vadd.f32 %v4606, 1.0
        %v4609 = vadd.f32 %v4607, 1.0
        %v4610 = vmul.f32 %v4602, %v4608
        %v4611 = vmul.f32 %v4603, %v4609
        %v4612 = vld [vmem:[%s7] sm:$0xff]
        %v4613 = vld [vmem:[%s7 + $0x8] sm:$0xff]
        %v4614 = vld [vmem:[%s7 + $0x10] sm:$0xff]
        %v4615 = vld [vmem:[%s7 + $0x18] sm:$0xff]
        %v4616 = vld [vmem:[%s7 + $0x20] sm:$0xff]
        %v4617 = vld [vmem:[%s7 + $0x28] sm:$0xff]
        %v4618 = vld [vmem:[%s7 + $0x30] sm:$0xff]
        %v4619 = vld [vmem:[%s7 + $0x38] sm:$0xff]
        %v4620 = vlaneseq
        %v4621 = vshrl.u32 %v4620, 7
        %v4622 = vsub.s32 6, %v4621
        %v4623 = vrot.slane %v4428, %v4622
        %vm4624 = vcmask 523264
        %v4626 = vsel %vm4624, %v4610, 0
        %v4629 = vsel %vm4624, %v4611, 0
        %4631 = vmatprep.subr.mxu0 0.0
        %4632 = vmatpush1.msra.mxu0 %v4612
        %4633 = vmatprep.subr.mxu0 0.0
        %4634 = vmatpush1.msra.mxu0 %v4613
        %4635 = vmatprep.subr.mxu0 0.0
        %4636 = vmatpush1.msra.mxu0 %v4614
        %4637 = vmatprep.subr.mxu0 0.0
        %4638 = vmatpush1.msra.mxu0 %v4615
        %4639 = vmatprep.subr.mxu0 0.0
        %4640 = vmatpush1.msra.mxu0 %v4616
        %4641 = vmatprep.subr.mxu0 0.0
        %4642 = vmatpush1.msra.mxu0 %v4617
        %4643 = vmatprep.subr.mxu0 0.0
        %4644 = vmatpush1.msra.mxu0 %v4618
        %4645 = vmatprep.subr.mxu0 0.0
        %4646 = vmatpush1.msra.mxu0 %v4619
        %4647 = vmatprep.subr.mxu0 0.0
        %4648 = vmatpush1.msra.mxu0 0.0
        %4649 = vmatprep.subr.mxu0 0.0
        %4650 = vmatpush1.msra.mxu0 0.0
        %4651 = vmatprep.subr.mxu0 0.0
        %4652 = vmatpush1.msra.mxu0 0.0
        %4653 = vmatprep.subr.mxu0 0.0
        %4654 = vmatpush1.msra.mxu0 0.0
        %4655 = vmatprep.subr.mxu0 0.0
        %4656 = vmatpush1.msra.mxu0 0.0
        %4657 = vmatprep.subr.mxu0 0.0
        %4658 = vmatpush1.msra.mxu0 0.0
        %4659 = vmatprep.subr.mxu0 0.0
        %4660 = vmatpush1.msra.mxu0 0.0
        %4661 = vmatprep.subr.mxu0 0.0
        %4662 = vmatpush1.msra.mxu0 0.0
        %4663 = vmatprep.subr.mxu0 0.0
        %4664 = vmatpush1.msra.mxu0 0.0
        %4665 = vmatprep.subr.mxu0 0.0
        %4666 = vmatpush1.msra.mxu0 0.0
        %4667 = vmatprep.subr.mxu0 0.0
        %4668 = vmatpush1.msra.mxu0 0.0
        %4669 = vmatprep.subr.mxu0 0.0
        %4670 = vmatpush1.msra.mxu0 0.0
        %4671 = vmatprep.subr.mxu0 0.0
        %4672 = vmatpush1.msra.mxu0 0.0
        %4673 = vmatprep.subr.mxu0 0.0
        %4674 = vmatpush1.msra.mxu0 0.0
        %4675 = vmatprep.subr.mxu0 0.0
        %4676 = vmatpush1.msra.mxu0 0.0
        %4677 = vmatprep.subr.mxu0 0.0
        %4678 = vmatpush1.msra.mxu0 0.0
        %4679 = vmatprep.subr.mxu0 0.0
        %4680 = vmatpush1.msra.mxu0 0.0
        %4681 = vmatprep.subr.mxu0 0.0
        %4682 = vmatpush1.msra.mxu0 0.0
        %4683 = vmatprep.subr.mxu0 0.0
        %4684 = vmatpush1.msra.mxu0 0.0
        %4685 = vmatprep.subr.mxu0 0.0
        %4686 = vmatpush1.msra.mxu0 0.0
        %4687 = vmatprep.subr.mxu0 0.0
        %4688 = vmatpush1.msra.mxu0 0.0
        %4689 = vmatprep.subr.mxu0 0.0
        %4690 = vmatpush1.msra.mxu0 0.0
        %4691 = vmatprep.subr.mxu0 0.0
        %4692 = vmatpush1.msra.mxu0 0.0
        %4693 = vmatprep.subr.mxu0 0.0
        %4694 = vmatpush1.msra.mxu0 0.0
        %4695 = vmatprep.mubr.f32.mxu0 0.0
        %4696 = vmatmul.mubr.f32.gmra.mrb[0].mxu0 %v4626
        %v4697 = vpop.f32.mrb[0].mxu0
        %v4698 = vadd.f32 %v4623, %v4697
        %v4699 = vpop.f32.mrb[0].mxu0
        %4700 = vmatprep.mubr.f32.mxu0 0.0
        %4701 = vmatmul.mubr.f32.gmra.mrb[0].mxu0 %v4629
        %v4702 = vpop.f32.mrb[0].mxu0
        %v4703 = vadd.f32 %v4623, %v4702
        %v4704 = vpop.f32.mrb[0].mxu0
        %4705 = vdwg.mxu0
        %v4706 = vadd.f32 %v4508, %v4698
        %v4707 = vadd.f32 %v4509, %v4703
        %v4708 = vsel %vm1613, %v4706, 0.0
        %4709 = vadd.xlane.f32.xlu0 %v4708
        %v4710 = vpop.xlane.xlu0 %4709
        %v4711 = vsel %vm1613, %v4707, 0.0
        %4712 = vadd.xlane.f32.xlu0 %v4711
        %v4713 = vpop.xlane.xlu0 %4712
        %v4714 = vmul.f32 %v4710, %v4437
        %v4715 = vmul.f32 %v4713, %v4437
        %v4716 = vsub.f32 %v4706, %v4714
        %v4717 = vsub.f32 %v4707, %v4715
        %v4718 = vmul.f32 %v4716, %v4716
        %v4719 = vmul.f32 %v4717, %v4717
        %v4720 = vsel %vm1613, %v4718, 0.0
        %4721 = vadd.xlane.f32.xlu0 %v4720
        %v4722 = vpop.xlane.xlu0 %4721
        %v4723 = vsel %vm1613, %v4719, 0.0
        %4724 = vadd.xlane.f32.xlu0 %v4723
        %v4725 = vpop.xlane.xlu0 %4724
        %v4726 = vmul.f32 %v4722, %v4437
        %v4727 = vmul.f32 %v4725, %v4437
        %v4728 = vadd.f32 %v4726, 1e-05
        %v4729 = vadd.f32 %v4727, 1e-05
        %v4730 = vrsqrt.pop %v4728
        %v4731 = vrsqrt.pop %v4729
        %v4732 = vmul.f32 %v4716, %v4730
        %v4733 = vmul.f32 %v4717, %v4731
        %v4734 = vlaneseq
        %v4735 = vshrl.u32 %v4734, 7
        %v4736 = vsub.s32 4, %v4735
        %v4737 = vrot.slane %v4428, %v4736
        %v4738 = vmul.f32 %v4732, %v4737
        %v4739 = vmul.f32 %v4733, %v4737
        %v4740 = vlaneseq
        %v4741 = vshrl.u32 %v4740, 7
        %v4742 = vsub.s32 5, %v4741
        %v4743 = vrot.slane %v4428, %v4742
        %v4744 = vadd.f32 %v4738, %v4743
        %v4745 = vadd.f32 %v4739, %v4743
        %4746 = vst.msk [vmem:[%s446] sm:$0xff] %vm1613, %v4744
        %4747 = vst.msk [vmem:[%s446 + $0x8] sm:$0xff] %vm1613, %v4745
        %s4748 = sand.u32 %s299, 1
        %s4749 = scalar_lea.sflag [#allocation4], %s4748
        %s4750 = sand.u32 %s299, 1
        %s4751 = smul.addr %s4750, 16
        %s4752 = scalar_lea.vmem [#allocation5], %s4751
        // Predicated region
        $region73: #{forward.1} parent=67 // pred_check
          %p4753 = pneg %p309
        $region74: #{forward.1} parent=67 // pred_check_branch
          %4755 = sbr.rel (%p4753) target = $region76
        $region75: #{forward.1} parent=67 // pred_region
          %s4757 = ssub.s32 256, 256
          %4758 = vsyncadd %s4749, %s4757
          %s4759 = smul.addr %s29, 2
          %s4760 = smul.addr %s4759, 128
          %s4761 = scalar_lea.hbm %s12, %s4760
          %s4762 = sshll.u32 %s4752, 4
          %s4763 = int_to_ptr.vmem [resolvable:$true] %s4762
          %4768 = dma.vmem_to_hbm [thread:$0]  %s4763, 256, %s4761, %s4749, 128, 128, 8
        $region76: #{forward.1} parent=67 // pred_fallthru
          _
      $region68: #{forward.1} parent=5 // pred_fallthru
        _
      %p4769 = scmp.le.s32.totalorder 2, %s24
      // Predicated region
      $region77: #{forward.1} parent=5 // pred_check
        %p4770 = pneg %p4769
      $region78: #{forward.1} parent=5 // pred_check_branch
        %4772 = sbr.rel (%p4770) target = $region80
      $region79: #{forward.1} parent=5 // pred_region
        %s4773 = ssub.s32 %s24, 2
        // Predicated region
        $region81: #{forward.1} parent=79 // pred_check
          %p4774 = pneg %p315
        $region82: #{forward.1} parent=79 // pred_check_branch
          %4776 = sbr.rel (%p4774) target = $region84
        $region83: #{forward.1} parent=79 // pred_region
          %s4777 = sand.u32 %s300, 1
          %s4778 = scalar_lea.sflag [#allocation4], %s4777
          %s4779 = sand.u32 %s300, 1
          %s4780 = smul.addr %s4779, 16
          %s4781 = scalar_lea.vmem [#allocation5], %s4780
          %4782 = dma.done %s4778, 256
        $region84: #{forward.1} parent=79 // pred_fallthru
          _
      $region80: #{forward.1} parent=5 // pred_fallthru
        _
    $region6: #{forward.1} parent=1 // loop_footer
      %s28 = sadd.s32 1, %s24
    $region7: #{forward.1} parent=1 // loop_footer_branch
      %23 = sbr.rel target = $region3
    $region8: #{forward.1} parent=1 // loop_exit
      _
    %4783 = vsyncpa [#allocation3], 1
    %s4784 = scalar_lea.sflag [#allocation3], 1
    %4785 = vsyncpa %s4784, 1
    %4786 = vsyncpa [#allocation4], 1
    %s4787 = scalar_lea.sflag [#allocation4], 1
    %4788 = vsyncpa %s4787, 1

</llo_original>
